<compile_context>
chip_gen: v6e
topology: v6e:2x2x1
jax: 0.10.0
libtpu: 0.0.40
codegen_flags: <defaults>
</compile_context>

<pallas_src>
import functools
import math

import jax
import jax.numpy as jnp
from jax import lax
from jax.experimental import pallas as pl
from jax.experimental.pallas import tpu as pltpu


# PyTorch LSTM gate order (i, f, g, o) -> kernel order (i, f, o, g).
_GATE_PERM = (0, 1, 3, 2)


# ----------------------------------------------------------------------------
# Small helpers (tiling / padding / budgets)
# ----------------------------------------------------------------------------
def _round_up(v, m):
    return ((v + m - 1) // m) * m


def _pad_to(a, target, axis):
    pad = target - a.shape[axis]
    if pad == 0:
        return a
    widths = [(0, 0)] * a.ndim
    widths[axis] = (0, pad)
    return jnp.pad(a, widths)


def _pick_row_tile(m):
    for cand in (512, 256, 128, 64, 32, 16, 8):
        if m % cand == 0:
            return cand
    return m  # full block (exempt from the (8,128) divisibility rule)


def _pick_col_tile(n):
    for cand in (512, 256, 128):
        if n % cand == 0:
            return cand
    return n


def _pick_batch_tile(bp):
    """bp is a multiple of 8.  Prefer >=2 tiles (v7x megacore) when batch allows."""
    if bp <= 8:
        return bp
    best = 8
    d = 8
    while d <= min(bp // 2, 256):
        if bp % d == 0:
            best = d
        d += 8
    return best


def _pick_time_block(t_len, tbb, in_p, hp, cap_steps=16, cap_bytes=4 << 20):
    """Largest divisor of T up to cap_steps whose per-block footprint fits cap_bytes."""
    best = 1
    for tb in range(1, min(t_len, cap_steps) + 1):
        if t_len % tb:
            continue
        blk_bytes = tb * tbb * (in_p + hp + 4 * hp) * 4  # x + seq + gate scratch (f32 bound)
        if blk_bytes <= cap_bytes:
            best = tb
    return best


def _vmem_capacity_bytes():
    try:
        return int(pltpu.get_tpu_info().vmem_capacity_bytes)
    except Exception:
        return 64 << 20  # conservative: assume v7x (64 MiB physical per TC)


def _vmem_budget(tb, tbb, in_p, hp, cdt_size):
    """Explicit VMEM budget for the recurrent kernel (and reused for the FC matmul)."""
    x_blk = 2 * tb * tbb * in_p * cdt_size          # double-buffered input block
    seq_blk = 2 * tb * tbb * hp * cdt_size          # double-buffered seq output block
    weights = (in_p + hp) * 4 * hp * cdt_size       # wih_t + whh_t (VMEM resident)
    gates = tb * tbb * 4 * hp * 4                   # fused-gate f32 scratch
    carry = 4 * tbb * hp * 4                        # h, c, hlast (+ slack)
    est = x_blk + seq_blk + weights + gates + carry
    ceiling = (_vmem_capacity_bytes() * 3) // 4     # leave headroom under physical VMEM
    return int(min(max(2 * est + (4 << 20), 16 << 20), ceiling))


# ----------------------------------------------------------------------------
# Pallas kernels
# ----------------------------------------------------------------------------
def matmul_bias_kernel(x_ref, w_ref, b_ref, o_ref):
    """o = x @ w + b  (row/col-tiled over the grid, f32 accumulation on the MXU)."""
    o_ref[...] = (
        jnp.dot(x_ref[...], w_ref[...], preferred_element_type=jnp.float32)
        + b_ref[...]
    ).astype(o_ref.dtype)


def lstm_layer_kernel(x_ref, wih_ref, b_ref, whh_ref, *refs, emit_seq):
    """One LSTM layer.  Grid: (batch tiles "parallel", time blocks "arbitrary").

    x_ref   : (tb, tbb, in_p)   input block, compute_dtype
    wih_ref : (in_p, 4Hp)       transposed input weights (VMEM resident)
    b_ref   : (1, 4Hp) f32      b_ih + b_hh (gate-reordered, padded)
    whh_ref : (Hp, 4Hp)         transposed hidden weights (VMEM resident)
    seq_ref : (tb, tbb, Hp)     hidden-sequence output block (only if emit_seq)
    hlast   : (tbb, Hp) f32     final hidden state (block index constant along time)
    gx_scr  : (tb*tbb, 4Hp) f32 fused input-projection scratch
    h_scr   : (tbb, Hp) f32     carried hidden state
    c_scr   : (tbb, Hp) f32     carried cell state
    """
    if emit_seq:
        seq_ref, hlast_ref, gx_scr, h_scr, c_scr = refs
    else:
        hlast_ref, gx_scr, h_scr, c_scr = refs
        seq_ref = None

    tb, tbb, in_dim = x_ref.shape
    hp = whh_ref.shape[0]
    t_idx = pl.program_id(1)

    @pl.when(t_idx == 0)
    def _():
        h_scr[...] = jnp.zeros_like(h_scr)
        c_scr[...] = jnp.zeros_like(c_scr)

    # Fused input projection for this whole time block: one lane-dense MXU matmul.
    # (tb*tbb rows -> much better MXU utilization than per-step tbb-row matmuls,
    #  and no gates_x HBM round-trip.)
    x_blk = x_ref[...].reshape(tb * tbb, in_dim)
    gx_scr[...] = (
        jnp.dot(x_blk, wih_ref[...], preferred_element_type=jnp.float32)
        + b_ref[...]
    )

    whh = whh_ref[...]  # (Hp, 4Hp), stays resident across all grid steps

    def step(tt, carry):
        h, c = carry
        row = pl.multiple_of(tt * tbb, 8)
        gates = gx_scr[pl.ds(row, tbb), :] + jnp.dot(
            h.astype(whh.dtype), whh, preferred_element_type=jnp.float32
        )                                       # (tbb, 4Hp) f32
        sig = jax.nn.sigmoid(gates[:, : 3 * hp])    # one wide slab: (i, f, o)
        i_g = sig[:, 0 * hp:1 * hp]
        f_g = sig[:, 1 * hp:2 * hp]
        o_g = sig[:, 2 * hp:3 * hp]
        g_g = jnp.tanh(gates[:, 3 * hp:4 * hp])
        c_new = f_g * c + i_g * g_g
        h_new = o_g * jnp.tanh(c_new)
        if emit_seq:
            seq_ref[tt] = h_new.astype(seq_ref.dtype)
        return h_new, c_new

    h, c = lax.fori_loop(0, tb, step, (h_scr[...], c_scr[...]), unroll=True)
    h_scr[...] = h
    c_scr[...] = c

    @pl.when(t_idx == pl.num_programs(1) - 1)
    def _():
        hlast_ref[...] = h.astype(hlast_ref.dtype)


# ----------------------------------------------------------------------------
# Pallas wrappers
# ----------------------------------------------------------------------------
def matmul_bias_pallas(x, w, b, out_dtype, *, vmem_limit):
    """out = x @ w + b.   x:(M,K)  w:(K,N)  b:(1,N)  ->  (M,N) in out_dtype."""
    M, K = x.shape
    N = w.shape[1]
    tm = _pick_row_tile(M)
    tn = _pick_col_tile(N)
    return pl.pallas_call(
        matmul_bias_kernel,
        out_shape=jax.ShapeDtypeStruct((M, N), out_dtype),
        grid_spec=pltpu.PrefetchScalarGridSpec(
            num_scalar_prefetch=0,
            grid=(M // tm, N // tn),
            in_specs=[
                pl.BlockSpec((tm, K), lambda i, j: (i, 0)),
                pl.BlockSpec((K, tn), lambda i, j: (0, j)),
                pl.BlockSpec((1, tn), lambda i, j: (0, j)),
            ],
            out_specs=pl.BlockSpec((tm, tn), lambda i, j: (i, j)),
        ),
        compiler_params=pltpu.CompilerParams(
            dimension_semantics=("parallel", "parallel"),
            vmem_limit_bytes=vmem_limit),
    )(x, w, b)


def lstm_layer_pallas(x_seq, wih_t, whh_t, bias, *, seq_dtype, tb, tbb, emit_seq,
                      vmem_limit):
    """Run one fused (input-projection + recurrence) LSTM layer.

    x_seq: (T, Bp, in_p) compute_dtype.
    Returns (hidden sequence or None, final hidden state (Bp, Hp) f32).
    """
    T, Bp, in_p = x_seq.shape
    Hp = whh_t.shape[0]
    G4 = 4 * Hp
    assert T % tb == 0 and Bp % tbb == 0

    kernel = functools.partial(lstm_layer_kernel, emit_seq=emit_seq)

    out_shapes, out_specs = [], []
    if emit_seq:
        out_shapes.append(jax.ShapeDtypeStruct((T, Bp, Hp), seq_dtype))
        out_specs.append(pl.BlockSpec((tb, tbb, Hp), lambda b, t: (t, b, 0)))
    out_shapes.append(jax.ShapeDtypeStruct((Bp, Hp), jnp.float32))
    out_specs.append(pl.BlockSpec((tbb, Hp), lambda b, t: (b, 0)))

    outs = pl.pallas_call(
        kernel,
        out_shape=tuple(out_shapes),
        grid_spec=pltpu.PrefetchScalarGridSpec(
            num_scalar_prefetch=0,
            grid=(Bp // tbb, T // tb),
            in_specs=[
                pl.BlockSpec((tb, tbb, in_p), lambda b, t: (t, b, 0)),
                pl.BlockSpec((in_p, G4), lambda b, t: (0, 0)),
                pl.BlockSpec((1, G4), lambda b, t: (0, 0)),
                pl.BlockSpec((Hp, G4), lambda b, t: (0, 0)),
            ],
            out_specs=tuple(out_specs),
            scratch_shapes=[
                pltpu.VMEM((tb * tbb, G4), jnp.float32),   # fused gate block
                pltpu.VMEM((tbb, Hp), jnp.float32),        # h carry
                pltpu.VMEM((tbb, Hp), jnp.float32),        # c carry
            ],
        ),
        compiler_params=pltpu.CompilerParams(
            # Batch tiles are independent ("parallel": v7x megacore sharding);
            # the time axis carries the recurrence ("arbitrary", runs in order).
            dimension_semantics=("parallel", "arbitrary"),
            vmem_limit_bytes=vmem_limit),
    )(x_seq, wih_t, bias, whh_t)

    if emit_seq:
        seq, h_last = outs
        return seq, h_last
    h_last = outs[0] if isinstance(outs, (tuple, list)) else outs
    return None, h_last


def _pad_lstm_weights(w_ih, w_hh, b_ih, b_hh, H, Hp, in_p, dtype):
    """Gate-reordered (i,f,o,g), gate-blockwise zero padding of the 4H axis,
    contraction-dim padding, and transpose so the kernel computes x @ W^T as x @ Wt."""
    perm = jnp.array(_GATE_PERM)

    def pad_gates(w, cols_p):
        w4 = w.reshape(4, H, w.shape[1])[perm]
        w4 = jnp.pad(w4, ((0, 0), (0, Hp - H), (0, cols_p - w.shape[1])))
        return w4.reshape(4 * Hp, cols_p)

    wih_t = jnp.transpose(pad_gates(w_ih, in_p)).astype(dtype)   # (in_p, 4Hp)
    whh_t = jnp.transpose(pad_gates(w_hh, Hp)).astype(dtype)     # (Hp, 4Hp)
    b = (b_ih + b_hh).reshape(4, H)[perm]
    b = jnp.pad(b, ((0, 0), (0, Hp - H))).reshape(1, 4 * Hp).astype(jnp.float32)
    return wih_t, whh_t, b


@functools.partial(jax.jit, static_argnames=("compute_dtype",))
def olstm_forward(x, params, compute_dtype=jnp.float32):
    """Mirror of OLSTM.forward.  x: (B, T, input_size), batch_first.

    Returns (num_layers * B, num_classes), same ordering as h_out.view(-1, H) @ fc.
    """
    B, T, I = x.shape
    H = params["lstm"][0][1].shape[1]        # w_hh: (4H, H)
    L = len(params["lstm"])
    C = params["fc_w"].shape[0]

    Bp = _round_up(B, 8)                     # sublane-aligned batch
    Hp = _round_up(H, 128)                   # lane-aligned hidden (exact zero padding)
    Ip = _round_up(I, 128)
    Cp = _round_up(C, 128)                   # lane-dense FC output, sliced afterwards

    tbb = _pick_batch_tile(Bp)
    tb = _pick_time_block(T, tbb, max(Ip, Hp), Hp)
    cdt_size = jnp.dtype(compute_dtype).itemsize
    vmem_limit = _vmem_budget(tb, tbb, max(Ip, Hp), Hp, cdt_size)

    # Time-major, zero-padded input: (T, Bp, Ip)
    x_tbi = jnp.transpose(x, (1, 0, 2))
    x_tbi = _pad_to(_pad_to(x_tbi, Bp, 1), Ip, 2)

    seq = x_tbi.astype(compute_dtype)
    in_p = Ip
    h_lasts = []
    for li, (w_ih, w_hh, b_ih, b_hh) in enumerate(params["lstm"]):
        wih_t, whh_t, bias = _pad_lstm_weights(
            w_ih, w_hh, b_ih, b_hh, H, Hp, in_p, compute_dtype)
        emit_seq = li < L - 1                # last layer: no full-sequence writeback
        seq, h_last = lstm_layer_pallas(
            seq, wih_t, whh_t, bias, seq_dtype=compute_dtype,
            tb=tb, tbb=tbb, emit_seq=emit_seq, vmem_limit=vmem_limit)
        h_lasts.append(h_last)               # (Bp, Hp) f32
        in_p = Hp

    # Final FC on stacked last hidden states (PyTorch h_out.view(-1, H) layer-major).
    h_out_p = jnp.concatenate(h_lasts, axis=0).astype(compute_dtype)         # (L*Bp, Hp)
    fc_w_t = jnp.transpose(
        _pad_to(_pad_to(params["fc_w"], Cp, 0), Hp, 1)).astype(compute_dtype)  # (Hp, Cp)
    fc_b = _pad_to(params["fc_b"], Cp, 0).reshape(1, Cp).astype(jnp.float32)
    out_p = matmul_bias_pallas(h_out_p, fc_w_t, fc_b, jnp.float32,
                               vmem_limit=vmem_limit)                        # (L*Bp, Cp)
    out = jnp.concatenate(
        [out_p[l * Bp:l * Bp + B, :C] for l in range(L)], axis=0)            # (L*B, C)
    return out


# ----------------------------------------------------------------------------
# Pure-JAX reference (for correctness check only) — PyTorch gate order (i, f, g, o)
# ----------------------------------------------------------------------------
def olstm_reference(x, params):
    B, T, _ = x.shape
    H = params["lstm"][0][1].shape[1]
    inp = x
    h_finals = []
    for (w_ih, w_hh, b_ih, b_hh) in params["lstm"]:
        h = jnp.zeros((B, H), jnp.float32)
        c = jnp.zeros((B, H), jnp.float32)
        outs = []
        for t in range(T):
            g = inp[:, t, :] @ w_ih.T + h @ w_hh.T + b_ih + b_hh
            i_g = jax.nn.sigmoid(g[:, 0 * H:1 * H])
            f_g = jax.nn.sigmoid(g[:, 1 * H:2 * H])
            g_g = jnp.tanh(g[:, 2 * H:3 * H])
            o_g = jax.nn.sigmoid(g[:, 3 * H:4 * H])
            c = f_g * c + i_g * g_g
            h = o_g * jnp.tanh(c)
            outs.append(h)
        inp = jnp.stack(outs, axis=1)
        h_finals.append(h)
    h_out = jnp.concatenate(h_finals, axis=0)
    return h_out @ params["fc_w"].T + params["fc_b"]


# ----------------------------------------------------------------------------
# Deterministic parameter init (PyTorch-style uniform(-1/sqrt(H), 1/sqrt(H)))
# ----------------------------------------------------------------------------
def init_params(key, num_classes, input_size, hidden_size, num_layers):
    k = 1.0 / math.sqrt(hidden_size)
    layers = []
    for l in range(num_layers):
        in_dim = input_size if l == 0 else hidden_size
        key, k1, k2, k3, k4 = jax.random.split(key, 5)
        layers.append((
            jax.random.uniform(k1, (4 * hidden_size, in_dim), jnp.float32, -k, k),
            jax.random.uniform(k2, (4 * hidden_size, hidden_size), jnp.float32, -k, k),
            jax.random.uniform(k3, (4 * hidden_size,), jnp.float32, -k, k),
            jax.random.uniform(k4, (4 * hidden_size,), jnp.float32, -k, k),
        ))
    key, k5, k6 = jax.random.split(key, 3)
    fc_w = jax.random.uniform(k5, (num_classes, hidden_size), jnp.float32, -k, k)
    fc_b = jax.random.uniform(k6, (num_classes,), jnp.float32, -k, k)
    return {"lstm": layers, "fc_w": fc_w, "fc_b": fc_b}


# ----------------------------------------------------------------------------
if __name__ == "__main__":
    num_classes = 5
    input_size = 8
    hidden_size = 32
    num_layers = 2
    batch = 2
    seq_len = 8

    key = jax.random.PRNGKey(0)
    key, pkey, xkey = jax.random.split(key, 3)
    params = init_params(pkey, num_classes, input_size, hidden_size, num_layers)
    x = jax.random.normal(xkey, (batch, seq_len, input_size), jnp.float32)

    ref = olstm_reference(x, params)

    # f32 path: should match the pure-JAX reference closely (padding is exact).
    out_f32 = jax.block_until_ready(olstm_forward(x, params, compute_dtype=jnp.float32))
    assert out_f32.shape == (num_layers * batch, num_classes), out_f32.shape
    assert jnp.allclose(out_f32, ref, atol=1e-4, rtol=1e-4), (out_f32, ref)

    # bf16 weights / activations (f32 gate math, carries and accumulation): loose tol.
    out_bf16 = jax.block_until_ready(olstm_forward(x, params, compute_dtype=jnp.bfloat16))
    assert jnp.allclose(out_bf16, ref, atol=5e-2, rtol=5e-2), (out_bf16, ref)

    print("KERNEL_OK")
</pallas_src>

<mosaic_0001>
module attributes {stable_mosaic.version = 11 : i64} {
  func.func @lstm_layer_kernel(%arg0: i32, %arg1: i32, %arg2: memref<8x8x128xf32, #tpu.memory_space<vmem>>, %arg3: memref<128x512xf32, #tpu.memory_space<vmem>>, %arg4: memref<1x512xf32, #tpu.memory_space<vmem>>, %arg5: memref<128x512xf32, #tpu.memory_space<vmem>>, %arg6: memref<8x8x128xf32, #tpu.memory_space<vmem>>, %arg7: memref<8x128xf32, #tpu.memory_space<vmem>>, %arg8: memref<64x512xf32, #tpu.memory_space<vmem>>, %arg9: memref<8x128xf32, #tpu.memory_space<vmem>>, %arg10: memref<8x128xf32, #tpu.memory_space<vmem>>) attributes {dimension_semantics = [#tpu.dimension_semantics<parallel>, #tpu.dimension_semantics<arbitrary>], iteration_bounds = array<i64: 1, 1>, scalar_prefetch = 0 : i64, scratch_operands = 3 : i64, tpu.core_type = #tpu.core_type<tc>, window_params = [{transform_indices = @transform_0, window_bounds = array<i64: 8, 8, 128>}, {pipeline_mode = #tpu.pipeline_mode<synchronous>, transform_indices = @transform_1, window_bounds = array<i64: 128, 512>}, {pipeline_mode = #tpu.pipeline_mode<synchronous>, transform_indices = @transform_2, window_bounds = array<i64: 1, 512>}, {pipeline_mode = #tpu.pipeline_mode<synchronous>, transform_indices = @transform_3, window_bounds = array<i64: 128, 512>}, {transform_indices = @transform_4, window_bounds = array<i64: 8, 8, 128>}, {transform_indices = @transform_5, window_bounds = array<i64: 8, 128>}]} {
    %c0_i32 = arith.constant 0 : i32
    %0 = arith.cmpi eq, %arg1, %c0_i32 : i32
    %1 = arith.extui %0 : i1 to i32
    %c0_i32_0 = arith.constant 0 : i32
    %2 = arith.cmpi ne, %1, %c0_i32_0 : i32
    scf.if %2 {
      %cst_70 = arith.constant 0.000000e+00 : f32
      %227 = vector.broadcast %cst_70 : f32 to vector<8x128xf32>
      %c0_71 = arith.constant 0 : index
      %c0_72 = arith.constant 0 : index
      %228 = vector.load %arg9[%c0_71, %c0_72] : memref<8x128xf32, #tpu.memory_space<vmem>>, vector<8x128xf32>
      tpu.vector_store %arg9[%c0_71, %c0_72], %227 {strides = array<i32>} : memref<8x128xf32, #tpu.memory_space<vmem>>, vector<8x128xf32>,
      %cst_73 = arith.constant 0.000000e+00 : f32
      %229 = vector.broadcast %cst_73 : f32 to vector<8x128xf32>
      %c0_74 = arith.constant 0 : index
      %c0_75 = arith.constant 0 : index
      %230 = vector.load %arg10[%c0_74, %c0_75] : memref<8x128xf32, #tpu.memory_space<vmem>>, vector<8x128xf32>
      tpu.vector_store %arg10[%c0_74, %c0_75], %229 {strides = array<i32>} : memref<8x128xf32, #tpu.memory_space<vmem>>, vector<8x128xf32>,
    } else {
    }
    %c0 = arith.constant 0 : index
    %c0_1 = arith.constant 0 : index
    %c0_2 = arith.constant 0 : index
    %3 = vector.load %arg2[%c0, %c0_1, %c0_2] : memref<8x8x128xf32, #tpu.memory_space<vmem>>, vector<8x8x128xf32>
    %4 = vector.shape_cast %3 : vector<8x8x128xf32> to vector<64x128xf32>
    %c0_3 = arith.constant 0 : index
    %c0_4 = arith.constant 0 : index
    %5 = vector.load %arg3[%c0_3, %c0_4] : memref<128x512xf32, #tpu.memory_space<vmem>>, vector<128x512xf32>
    %cst = arith.constant dense<0.000000e+00> : vector<64x512xf32>
    %6 = tpu.matmul %4, %5, %cst {dimension_numbers = #tpu.dot_dimension_numbers<[1], [0], [0], [1], [0, 0, 1, 1], [], []>} : vector<64x128xf32>, vector<128x512xf32>, vector<64x512xf32> -> vector<64x512xf32>
    %c0_5 = arith.constant 0 : index
    %c0_6 = arith.constant 0 : index
    %7 = vector.load %arg4[%c0_5, %c0_6] : memref<1x512xf32, #tpu.memory_space<vmem>>, vector<1x512xf32>
    %8 = vector.broadcast %7 : vector<1x512xf32> to vector<64x512xf32>
    %9 = arith.addf %6, %8 : vector<64x512xf32>
    %c0_7 = arith.constant 0 : index
    %c0_8 = arith.constant 0 : index
    %10 = vector.load %arg8[%c0_7, %c0_8] : memref<64x512xf32, #tpu.memory_space<vmem>>, vector<64x512xf32>
    tpu.vector_store %arg8[%c0_7, %c0_8], %9 {strides = array<i32>} : memref<64x512xf32, #tpu.memory_space<vmem>>, vector<64x512xf32>,
    %c0_9 = arith.constant 0 : index
    %c0_10 = arith.constant 0 : index
    %11 = vector.load %arg5[%c0_9, %c0_10] : memref<128x512xf32, #tpu.memory_space<vmem>>, vector<128x512xf32>
    %c0_11 = arith.constant 0 : index
    %c0_12 = arith.constant 0 : index
    %12 = vector.load %arg9[%c0_11, %c0_12] : memref<8x128xf32, #tpu.memory_space<vmem>>, vector<8x128xf32>
    %c0_13 = arith.constant 0 : index
    %c0_14 = arith.constant 0 : index
    %13 = vector.load %arg10[%c0_13, %c0_14] : memref<8x128xf32, #tpu.memory_space<vmem>>, vector<8x128xf32>
    %c0_i32_15 = arith.constant 0 : i32
    %c8_i32 = arith.constant 8 : i32
    %14 = arith.muli %c0_i32_15, %c8_i32 : i32
    %15 = tpu.assume_multiple %14, 8 : i32
    %16 = arith.index_cast %15 : i32 to index
    %c0_16 = arith.constant 0 : index
    %17 = vector.load %arg8[%16, %c0_16] : memref<64x512xf32, #tpu.memory_space<vmem>>, vector<8x512xf32>
    %cst_17 = arith.constant dense<0.000000e+00> : vector<8x512xf32>
    %18 = tpu.matmul %12, %11, %cst_17 {dimension_numbers = #tpu.dot_dimension_numbers<[1], [0], [0], [1], [0, 0, 1, 1], [], []>} : vector<8x128xf32>, vector<128x512xf32>, vector<8x512xf32> -> vector<8x512xf32>
    %19 = arith.addf %17, %18 : vector<8x512xf32>
    %20 = vector.extract_strided_slice %19 {offsets = [0, 0], sizes = [8, 384], strides = [1, 1]} : vector<8x512xf32> to vector<8x384xf32>
    %21 = arith.negf %20 : vector<8x384xf32>
    %22 = math.exp %21 : vector<8x384xf32>
    %cst_18 = arith.constant 1.000000e+00 : f32
    %23 = vector.broadcast %cst_18 : f32 to vector<8x384xf32>
    %24 = arith.addf %23, %22 : vector<8x384xf32>
    %25 = arith.divf %23, %24 : vector<8x384xf32>
    %26 = vector.extract_strided_slice %25 {offsets = [0, 0], sizes = [8, 128], strides = [1, 1]} : vector<8x384xf32> to vector<8x128xf32>
    %27 = vector.extract_strided_slice %25 {offsets = [0, 128], sizes = [8, 128], strides = [1, 1]} : vector<8x384xf32> to vector<8x128xf32>
    %28 = vector.extract_strided_slice %25 {offsets = [0, 256], sizes = [8, 128], strides = [1, 1]} : vector<8x384xf32> to vector<8x128xf32>
    %29 = vector.extract_strided_slice %19 {offsets = [0, 384], sizes = [8, 128], strides = [1, 1]} : vector<8x512xf32> to vector<8x128xf32>
    %30 = math.tanh %29 : vector<8x128xf32>
    %31 = arith.mulf %27, %13 : vector<8x128xf32>
    %32 = arith.mulf %26, %30 : vector<8x128xf32>
    %33 = arith.addf %31, %32 : vector<8x128xf32>
    %34 = math.tanh %33 : vector<8x128xf32>
    %35 = arith.mulf %28, %34 : vector<8x128xf32>
    %36 = arith.index_cast %c0_i32_15 : i32 to index
    %c0_19 = arith.constant 0 : index
    %c0_20 = arith.constant 0 : index
    %37 = vector.load %arg6[%36, %c0_19, %c0_20] : memref<8x8x128xf32, #tpu.memory_space<vmem>>, vector<1x8x128xf32>
    %38 = vector.shape_cast %37 : vector<1x8x128xf32> to vector<8x128xf32>
    %39 = vector.shape_cast %35 : vector<8x128xf32> to vector<1x8x128xf32>
    tpu.vector_store %arg6[%36, %c0_19, %c0_20], %39 {strides = array<i32>} : memref<8x8x128xf32, #tpu.memory_space<vmem>>, vector<1x8x128xf32>,
    %c1_i32 = arith.constant 1 : i32
    %c8_i32_21 = arith.constant 8 : i32
    %40 = arith.muli %c1_i32, %c8_i32_21 : i32
    %41 = tpu.assume_multiple %40, 8 : i32
    %42 = arith.index_cast %41 : i32 to index
    %c0_22 = arith.constant 0 : index
    %43 = vector.load %arg8[%42, %c0_22] : memref<64x512xf32, #tpu.memory_space<vmem>>, vector<8x512xf32>
    %cst_23 = arith.constant dense<0.000000e+00> : vector<8x512xf32>
    %44 = tpu.matmul %35, %11, %cst_23 {dimension_numbers = #tpu.dot_dimension_numbers<[1], [0], [0], [1], [0, 0, 1, 1], [], []>} : vector<8x128xf32>, vector<128x512xf32>, vector<8x512xf32> -> vector<8x512xf32>
    %45 = arith.addf %43, %44 : vector<8x512xf32>
    %46 = vector.extract_strided_slice %45 {offsets = [0, 0], sizes = [8, 384], strides = [1, 1]} : vector<8x512xf32> to vector<8x384xf32>
    %47 = arith.negf %46 : vector<8x384xf32>
    %48 = math.exp %47 : vector<8x384xf32>
    %cst_24 = arith.constant 1.000000e+00 : f32
    %49 = vector.broadcast %cst_24 : f32 to vector<8x384xf32>
    %50 = arith.addf %49, %48 : vector<8x384xf32>
    %51 = arith.divf %49, %50 : vector<8x384xf32>
    %52 = vector.extract_strided_slice %51 {offsets = [0, 0], sizes = [8, 128], strides = [1, 1]} : vector<8x384xf32> to vector<8x128xf32>
    %53 = vector.extract_strided_slice %51 {offsets = [0, 128], sizes = [8, 128], strides = [1, 1]} : vector<8x384xf32> to vector<8x128xf32>
    %54 = vector.extract_strided_slice %51 {offsets = [0, 256], sizes = [8, 128], strides = [1, 1]} : vector<8x384xf32> to vector<8x128xf32>
    %55 = vector.extract_strided_slice %45 {offsets = [0, 384], sizes = [8, 128], strides = [1, 1]} : vector<8x512xf32> to vector<8x128xf32>
    %56 = math.tanh %55 : vector<8x128xf32>
    %57 = arith.mulf %53, %33 : vector<8x128xf32>
    %58 = arith.mulf %52, %56 : vector<8x128xf32>
    %59 = arith.addf %57, %58 : vector<8x128xf32>
    %60 = math.tanh %59 : vector<8x128xf32>
    %61 = arith.mulf %54, %60 : vector<8x128xf32>
    %62 = arith.index_cast %c1_i32 : i32 to index
    %c0_25 = arith.constant 0 : index
    %c0_26 = arith.constant 0 : index
    %63 = vector.load %arg6[%62, %c0_25, %c0_26] : memref<8x8x128xf32, #tpu.memory_space<vmem>>, vector<1x8x128xf32>
    %64 = vector.shape_cast %63 : vector<1x8x128xf32> to vector<8x128xf32>
    %65 = vector.shape_cast %61 : vector<8x128xf32> to vector<1x8x128xf32>
    tpu.vector_store %arg6[%62, %c0_25, %c0_26], %65 {strides = array<i32>} : memref<8x8x128xf32, #tpu.memory_space<vmem>>, vector<1x8x128xf32>,
    %c2_i32 = arith.constant 2 : i32
    %c8_i32_27 = arith.constant 8 : i32
    %66 = arith.muli %c2_i32, %c8_i32_27 : i32
    %67 = tpu.assume_multiple %66, 8 : i32
    %68 = arith.index_cast %67 : i32 to index
    %c0_28 = arith.constant 0 : index
    %69 = vector.load %arg8[%68, %c0_28] : memref<64x512xf32, #tpu.memory_space<vmem>>, vector<8x512xf32>
    %cst_29 = arith.constant dense<0.000000e+00> : vector<8x512xf32>
    %70 = tpu.matmul %61, %11, %cst_29 {dimension_numbers = #tpu.dot_dimension_numbers<[1], [0], [0], [1], [0, 0, 1, 1], [], []>} : vector<8x128xf32>, vector<128x512xf32>, vector<8x512xf32> -> vector<8x512xf32>
    %71 = arith.addf %69, %70 : vector<8x512xf32>
    %72 = vector.extract_strided_slice %71 {offsets = [0, 0], sizes = [8, 384], strides = [1, 1]} : vector<8x512xf32> to vector<8x384xf32>
    %73 = arith.negf %72 : vector<8x384xf32>
    %74 = math.exp %73 : vector<8x384xf32>
    %cst_30 = arith.constant 1.000000e+00 : f32
    %75 = vector.broadcast %cst_30 : f32 to vector<8x384xf32>
    %76 = arith.addf %75, %74 : vector<8x384xf32>
    %77 = arith.divf %75, %76 : vector<8x384xf32>
    %78 = vector.extract_strided_slice %77 {offsets = [0, 0], sizes = [8, 128], strides = [1, 1]} : vector<8x384xf32> to vector<8x128xf32>
    %79 = vector.extract_strided_slice %77 {offsets = [0, 128], sizes = [8, 128], strides = [1, 1]} : vector<8x384xf32> to vector<8x128xf32>
    %80 = vector.extract_strided_slice %77 {offsets = [0, 256], sizes = [8, 128], strides = [1, 1]} : vector<8x384xf32> to vector<8x128xf32>
    %81 = vector.extract_strided_slice %71 {offsets = [0, 384], sizes = [8, 128], strides = [1, 1]} : vector<8x512xf32> to vector<8x128xf32>
    %82 = math.tanh %81 : vector<8x128xf32>
    %83 = arith.mulf %79, %59 : vector<8x128xf32>
    %84 = arith.mulf %78, %82 : vector<8x128xf32>
    %85 = arith.addf %83, %84 : vector<8x128xf32>
    %86 = math.tanh %85 : vector<8x128xf32>
    %87 = arith.mulf %80, %86 : vector<8x128xf32>
    %88 = arith.index_cast %c2_i32 : i32 to index
    %c0_31 = arith.constant 0 : index
    %c0_32 = arith.constant 0 : index
    %89 = vector.load %arg6[%88, %c0_31, %c0_32] : memref<8x8x128xf32, #tpu.memory_space<vmem>>, vector<1x8x128xf32>
    %90 = vector.shape_cast %89 : vector<1x8x128xf32> to vector<8x128xf32>
    %91 = vector.shape_cast %87 : vector<8x128xf32> to vector<1x8x128xf32>
    tpu.vector_store %arg6[%88, %c0_31, %c0_32], %91 {strides = array<i32>} : memref<8x8x128xf32, #tpu.memory_space<vmem>>, vector<1x8x128xf32>,
    %c3_i32 = arith.constant 3 : i32
    %c8_i32_33 = arith.constant 8 : i32
    %92 = arith.muli %c3_i32, %c8_i32_33 : i32
    %93 = tpu.assume_multiple %92, 8 : i32
    %94 = arith.index_cast %93 : i32 to index
    %c0_34 = arith.constant 0 : index
    %95 = vector.load %arg8[%94, %c0_34] : memref<64x512xf32, #tpu.memory_space<vmem>>, vector<8x512xf32>
    %cst_35 = arith.constant dense<0.000000e+00> : vector<8x512xf32>
    %96 = tpu.matmul %87, %11, %cst_35 {dimension_numbers = #tpu.dot_dimension_numbers<[1], [0], [0], [1], [0, 0, 1, 1], [], []>} : vector<8x128xf32>, vector<128x512xf32>, vector<8x512xf32> -> vector<8x512xf32>
    %97 = arith.addf %95, %96 : vector<8x512xf32>
    %98 = vector.extract_strided_slice %97 {offsets = [0, 0], sizes = [8, 384], strides = [1, 1]} : vector<8x512xf32> to vector<8x384xf32>
    %99 = arith.negf %98 : vector<8x384xf32>
    %100 = math.exp %99 : vector<8x384xf32>
    %cst_36 = arith.constant 1.000000e+00 : f32
    %101 = vector.broadcast %cst_36 : f32 to vector<8x384xf32>
    %102 = arith.addf %101, %100 : vector<8x384xf32>
    %103 = arith.divf %101, %102 : vector<8x384xf32>
    %104 = vector.extract_strided_slice %103 {offsets = [0, 0], sizes = [8, 128], strides = [1, 1]} : vector<8x384xf32> to vector<8x128xf32>
    %105 = vector.extract_strided_slice %103 {offsets = [0, 128], sizes = [8, 128], strides = [1, 1]} : vector<8x384xf32> to vector<8x128xf32>
    %106 = vector.extract_strided_slice %103 {offsets = [0, 256], sizes = [8, 128], strides = [1, 1]} : vector<8x384xf32> to vector<8x128xf32>
    %107 = vector.extract_strided_slice %97 {offsets = [0, 384], sizes = [8, 128], strides = [1, 1]} : vector<8x512xf32> to vector<8x128xf32>
    %108 = math.tanh %107 : vector<8x128xf32>
    %109 = arith.mulf %105, %85 : vector<8x128xf32>
    %110 = arith.mulf %104, %108 : vector<8x128xf32>
    %111 = arith.addf %109, %110 : vector<8x128xf32>
    %112 = math.tanh %111 : vector<8x128xf32>
    %113 = arith.mulf %106, %112 : vector<8x128xf32>
    %114 = arith.index_cast %c3_i32 : i32 to index
    %c0_37 = arith.constant 0 : index
    %c0_38 = arith.constant 0 : index
    %115 = vector.load %arg6[%114, %c0_37, %c0_38] : memref<8x8x128xf32, #tpu.memory_space<vmem>>, vector<1x8x128xf32>
    %116 = vector.shape_cast %115 : vector<1x8x128xf32> to vector<8x128xf32>
    %117 = vector.shape_cast %113 : vector<8x128xf32> to vector<1x8x128xf32>
    tpu.vector_store %arg6[%114, %c0_37, %c0_38], %117 {strides = array<i32>} : memref<8x8x128xf32, #tpu.memory_space<vmem>>, vector<1x8x128xf32>,
    %c4_i32 = arith.constant 4 : i32
    %c8_i32_39 = arith.constant 8 : i32
    %118 = arith.muli %c4_i32, %c8_i32_39 : i32
    %119 = tpu.assume_multiple %118, 8 : i32
    %120 = arith.index_cast %119 : i32 to index
    %c0_40 = arith.constant 0 : index
    %121 = vector.load %arg8[%120, %c0_40] : memref<64x512xf32, #tpu.memory_space<vmem>>, vector<8x512xf32>
    %cst_41 = arith.constant dense<0.000000e+00> : vector<8x512xf32>
    %122 = tpu.matmul %113, %11, %cst_41 {dimension_numbers = #tpu.dot_dimension_numbers<[1], [0], [0], [1], [0, 0, 1, 1], [], []>} : vector<8x128xf32>, vector<128x512xf32>, vector<8x512xf32> -> vector<8x512xf32>
    %123 = arith.addf %121, %122 : vector<8x512xf32>
    %124 = vector.extract_strided_slice %123 {offsets = [0, 0], sizes = [8, 384], strides = [1, 1]} : vector<8x512xf32> to vector<8x384xf32>
    %125 = arith.negf %124 : vector<8x384xf32>
    %126 = math.exp %125 : vector<8x384xf32>
    %cst_42 = arith.constant 1.000000e+00 : f32
    %127 = vector.broadcast %cst_42 : f32 to vector<8x384xf32>
    %128 = arith.addf %127, %126 : vector<8x384xf32>
    %129 = arith.divf %127, %128 : vector<8x384xf32>
    %130 = vector.extract_strided_slice %129 {offsets = [0, 0], sizes = [8, 128], strides = [1, 1]} : vector<8x384xf32> to vector<8x128xf32>
    %131 = vector.extract_strided_slice %129 {offsets = [0, 128], sizes = [8, 128], strides = [1, 1]} : vector<8x384xf32> to vector<8x128xf32>
    %132 = vector.extract_strided_slice %129 {offsets = [0, 256], sizes = [8, 128], strides = [1, 1]} : vector<8x384xf32> to vector<8x128xf32>
    %133 = vector.extract_strided_slice %123 {offsets = [0, 384], sizes = [8, 128], strides = [1, 1]} : vector<8x512xf32> to vector<8x128xf32>
    %134 = math.tanh %133 : vector<8x128xf32>
    %135 = arith.mulf %131, %111 : vector<8x128xf32>
    %136 = arith.mulf %130, %134 : vector<8x128xf32>
    %137 = arith.addf %135, %136 : vector<8x128xf32>
    %138 = math.tanh %137 : vector<8x128xf32>
    %139 = arith.mulf %132, %138 : vector<8x128xf32>
    %140 = arith.index_cast %c4_i32 : i32 to index
    %c0_43 = arith.constant 0 : index
    %c0_44 = arith.constant 0 : index
    %141 = vector.load %arg6[%140, %c0_43, %c0_44] : memref<8x8x128xf32, #tpu.memory_space<vmem>>, vector<1x8x128xf32>
    %142 = vector.shape_cast %141 : vector<1x8x128xf32> to vector<8x128xf32>
    %143 = vector.shape_cast %139 : vector<8x128xf32> to vector<1x8x128xf32>
    tpu.vector_store %arg6[%140, %c0_43, %c0_44], %143 {strides = array<i32>} : memref<8x8x128xf32, #tpu.memory_space<vmem>>, vector<1x8x128xf32>,
    %c5_i32 = arith.constant 5 : i32
    %c8_i32_45 = arith.constant 8 : i32
    %144 = arith.muli %c5_i32, %c8_i32_45 : i32
    %145 = tpu.assume_multiple %144, 8 : i32
    %146 = arith.index_cast %145 : i32 to index
    %c0_46 = arith.constant 0 : index
    %147 = vector.load %arg8[%146, %c0_46] : memref<64x512xf32, #tpu.memory_space<vmem>>, vector<8x512xf32>
    %cst_47 = arith.constant dense<0.000000e+00> : vector<8x512xf32>
    %148 = tpu.matmul %139, %11, %cst_47 {dimension_numbers = #tpu.dot_dimension_numbers<[1], [0], [0], [1], [0, 0, 1, 1], [], []>} : vector<8x128xf32>, vector<128x512xf32>, vector<8x512xf32> -> vector<8x512xf32>
    %149 = arith.addf %147, %148 : vector<8x512xf32>
    %150 = vector.extract_strided_slice %149 {offsets = [0, 0], sizes = [8, 384], strides = [1, 1]} : vector<8x512xf32> to vector<8x384xf32>
    %151 = arith.negf %150 : vector<8x384xf32>
    %152 = math.exp %151 : vector<8x384xf32>
    %cst_48 = arith.constant 1.000000e+00 : f32
    %153 = vector.broadcast %cst_48 : f32 to vector<8x384xf32>
    %154 = arith.addf %153, %152 : vector<8x384xf32>
    %155 = arith.divf %153, %154 : vector<8x384xf32>
    %156 = vector.extract_strided_slice %155 {offsets = [0, 0], sizes = [8, 128], strides = [1, 1]} : vector<8x384xf32> to vector<8x128xf32>
    %157 = vector.extract_strided_slice %155 {offsets = [0, 128], sizes = [8, 128], strides = [1, 1]} : vector<8x384xf32> to vector<8x128xf32>
    %158 = vector.extract_strided_slice %155 {offsets = [0, 256], sizes = [8, 128], strides = [1, 1]} : vector<8x384xf32> to vector<8x128xf32>
    %159 = vector.extract_strided_slice %149 {offsets = [0, 384], sizes = [8, 128], strides = [1, 1]} : vector<8x512xf32> to vector<8x128xf32>
    %160 = math.tanh %159 : vector<8x128xf32>
    %161 = arith.mulf %157, %137 : vector<8x128xf32>
    %162 = arith.mulf %156, %160 : vector<8x128xf32>
    %163 = arith.addf %161, %162 : vector<8x128xf32>
    %164 = math.tanh %163 : vector<8x128xf32>
    %165 = arith.mulf %158, %164 : vector<8x128xf32>
    %166 = arith.index_cast %c5_i32 : i32 to index
    %c0_49 = arith.constant 0 : index
    %c0_50 = arith.constant 0 : index
    %167 = vector.load %arg6[%166, %c0_49, %c0_50] : memref<8x8x128xf32, #tpu.memory_space<vmem>>, vector<1x8x128xf32>
    %168 = vector.shape_cast %167 : vector<1x8x128xf32> to vector<8x128xf32>
    %169 = vector.shape_cast %165 : vector<8x128xf32> to vector<1x8x128xf32>
    tpu.vector_store %arg6[%166, %c0_49, %c0_50], %169 {strides = array<i32>} : memref<8x8x128xf32, #tpu.memory_space<vmem>>, vector<1x8x128xf32>,
    %c6_i32 = arith.constant 6 : i32
    %c8_i32_51 = arith.constant 8 : i32
    %170 = arith.muli %c6_i32, %c8_i32_51 : i32
    %171 = tpu.assume_multiple %170, 8 : i32
    %172 = arith.index_cast %171 : i32 to index
    %c0_52 = arith.constant 0 : index
    %173 = vector.load %arg8[%172, %c0_52] : memref<64x512xf32, #tpu.memory_space<vmem>>, vector<8x512xf32>
    %cst_53 = arith.constant dense<0.000000e+00> : vector<8x512xf32>
    %174 = tpu.matmul %165, %11, %cst_53 {dimension_numbers = #tpu.dot_dimension_numbers<[1], [0], [0], [1], [0, 0, 1, 1], [], []>} : vector<8x128xf32>, vector<128x512xf32>, vector<8x512xf32> -> vector<8x512xf32>
    %175 = arith.addf %173, %174 : vector<8x512xf32>
    %176 = vector.extract_strided_slice %175 {offsets = [0, 0], sizes = [8, 384], strides = [1, 1]} : vector<8x512xf32> to vector<8x384xf32>
    %177 = arith.negf %176 : vector<8x384xf32>
    %178 = math.exp %177 : vector<8x384xf32>
    %cst_54 = arith.constant 1.000000e+00 : f32
    %179 = vector.broadcast %cst_54 : f32 to vector<8x384xf32>
    %180 = arith.addf %179, %178 : vector<8x384xf32>
    %181 = arith.divf %179, %180 : vector<8x384xf32>
    %182 = vector.extract_strided_slice %181 {offsets = [0, 0], sizes = [8, 128], strides = [1, 1]} : vector<8x384xf32> to vector<8x128xf32>
    %183 = vector.extract_strided_slice %181 {offsets = [0, 128], sizes = [8, 128], strides = [1, 1]} : vector<8x384xf32> to vector<8x128xf32>
    %184 = vector.extract_strided_slice %181 {offsets = [0, 256], sizes = [8, 128], strides = [1, 1]} : vector<8x384xf32> to vector<8x128xf32>
    %185 = vector.extract_strided_slice %175 {offsets = [0, 384], sizes = [8, 128], strides = [1, 1]} : vector<8x512xf32> to vector<8x128xf32>
    %186 = math.tanh %185 : vector<8x128xf32>
    %187 = arith.mulf %183, %163 : vector<8x128xf32>
    %188 = arith.mulf %182, %186 : vector<8x128xf32>
    %189 = arith.addf %187, %188 : vector<8x128xf32>
    %190 = math.tanh %189 : vector<8x128xf32>
    %191 = arith.mulf %184, %190 : vector<8x128xf32>
    %192 = arith.index_cast %c6_i32 : i32 to index
    %c0_55 = arith.constant 0 : index
    %c0_56 = arith.constant 0 : index
    %193 = vector.load %arg6[%192, %c0_55, %c0_56] : memref<8x8x128xf32, #tpu.memory_space<vmem>>, vector<1x8x128xf32>
    %194 = vector.shape_cast %193 : vector<1x8x128xf32> to vector<8x128xf32>
    %195 = vector.shape_cast %191 : vector<8x128xf32> to vector<1x8x128xf32>
    tpu.vector_store %arg6[%192, %c0_55, %c0_56], %195 {strides = array<i32>} : memref<8x8x128xf32, #tpu.memory_space<vmem>>, vector<1x8x128xf32>,
    %c7_i32 = arith.constant 7 : i32
    %c8_i32_57 = arith.constant 8 : i32
    %196 = arith.muli %c7_i32, %c8_i32_57 : i32
    %197 = tpu.assume_multiple %196, 8 : i32
    %198 = arith.index_cast %197 : i32 to index
    %c0_58 = arith.constant 0 : index
    %199 = vector.load %arg8[%198, %c0_58] : memref<64x512xf32, #tpu.memory_space<vmem>>, vector<8x512xf32>
    %cst_59 = arith.constant dense<0.000000e+00> : vector<8x512xf32>
    %200 = tpu.matmul %191, %11, %cst_59 {dimension_numbers = #tpu.dot_dimension_numbers<[1], [0], [0], [1], [0, 0, 1, 1], [], []>} : vector<8x128xf32>, vector<128x512xf32>, vector<8x512xf32> -> vector<8x512xf32>
    %201 = arith.addf %199, %200 : vector<8x512xf32>
    %202 = vector.extract_strided_slice %201 {offsets = [0, 0], sizes = [8, 384], strides = [1, 1]} : vector<8x512xf32> to vector<8x384xf32>
    %203 = arith.negf %202 : vector<8x384xf32>
    %204 = math.exp %203 : vector<8x384xf32>
    %cst_60 = arith.constant 1.000000e+00 : f32
    %205 = vector.broadcast %cst_60 : f32 to vector<8x384xf32>
    %206 = arith.addf %205, %204 : vector<8x384xf32>
    %207 = arith.divf %205, %206 : vector<8x384xf32>
    %208 = vector.extract_strided_slice %207 {offsets = [0, 0], sizes = [8, 128], strides = [1, 1]} : vector<8x384xf32> to vector<8x128xf32>
    %209 = vector.extract_strided_slice %207 {offsets = [0, 128], sizes = [8, 128], strides = [1, 1]} : vector<8x384xf32> to vector<8x128xf32>
    %210 = vector.extract_strided_slice %207 {offsets = [0, 256], sizes = [8, 128], strides = [1, 1]} : vector<8x384xf32> to vector<8x128xf32>
    %211 = vector.extract_strided_slice %201 {offsets = [0, 384], sizes = [8, 128], strides = [1, 1]} : vector<8x512xf32> to vector<8x128xf32>
    %212 = math.tanh %211 : vector<8x128xf32>
    %213 = arith.mulf %209, %189 : vector<8x128xf32>
    %214 = arith.mulf %208, %212 : vector<8x128xf32>
    %215 = arith.addf %213, %214 : vector<8x128xf32>
    %216 = math.tanh %215 : vector<8x128xf32>
    %217 = arith.mulf %210, %216 : vector<8x128xf32>
    %218 = arith.index_cast %c7_i32 : i32 to index
    %c0_61 = arith.constant 0 : index
    %c0_62 = arith.constant 0 : index
    %219 = vector.load %arg6[%218, %c0_61, %c0_62] : memref<8x8x128xf32, #tpu.memory_space<vmem>>, vector<1x8x128xf32>
    %220 = vector.shape_cast %219 : vector<1x8x128xf32> to vector<8x128xf32>
    %221 = vector.shape_cast %217 : vector<8x128xf32> to vector<1x8x128xf32>
    tpu.vector_store %arg6[%218, %c0_61, %c0_62], %221 {strides = array<i32>} : memref<8x8x128xf32, #tpu.memory_space<vmem>>, vector<1x8x128xf32>,
    %c8_i32_63 = arith.constant 8 : i32
    %c0_64 = arith.constant 0 : index
    %c0_65 = arith.constant 0 : index
    %222 = vector.load %arg9[%c0_64, %c0_65] : memref<8x128xf32, #tpu.memory_space<vmem>>, vector<8x128xf32>
    tpu.vector_store %arg9[%c0_64, %c0_65], %217 {strides = array<i32>} : memref<8x128xf32, #tpu.memory_space<vmem>>, vector<8x128xf32>,
    %c0_66 = arith.constant 0 : index
    %c0_67 = arith.constant 0 : index
    %223 = vector.load %arg10[%c0_66, %c0_67] : memref<8x128xf32, #tpu.memory_space<vmem>>, vector<8x128xf32>
    tpu.vector_store %arg10[%c0_66, %c0_67], %215 {strides = array<i32>} : memref<8x128xf32, #tpu.memory_space<vmem>>, vector<8x128xf32>,
    %c0_i32_68 = arith.constant 0 : i32
    %224 = arith.cmpi eq, %arg1, %c0_i32_68 : i32
    %225 = arith.extui %224 : i1 to i32
    %c0_i32_69 = arith.constant 0 : i32
    %226 = arith.cmpi ne, %225, %c0_i32_69 : i32
    scf.if %226 {
      %c0_70 = arith.constant 0 : index
      %c0_71 = arith.constant 0 : index
      %227 = vector.load %arg7[%c0_70, %c0_71] : memref<8x128xf32, #tpu.memory_space<vmem>>, vector<8x128xf32>
      tpu.vector_store %arg7[%c0_70, %c0_71], %217 {strides = array<i32>} : memref<8x128xf32, #tpu.memory_space<vmem>>, vector<8x128xf32>,
    } else {
    }
    return
  }
  func.func @transform_0(%arg0: i32, %arg1: i32) -> (i32, i32, i32) {
    %c0_i32 = arith.constant 0 : i32
    %c0_i32_0 = arith.constant 0 : i32
    return %arg1, %arg0, %c0_i32 : i32, i32, i32
  }
  func.func @transform_1(%arg0: i32, %arg1: i32) -> (i32, i32) {
    %c0_i32 = arith.constant 0 : i32
    %c0_i32_0 = arith.constant 0 : i32
    %c0_i32_1 = arith.constant 0 : i32
    return %c0_i32, %c0_i32_0 : i32, i32
  }
  func.func @transform_2(%arg0: i32, %arg1: i32) -> (i32, i32) {
    %c0_i32 = arith.constant 0 : i32
    %c0_i32_0 = arith.constant 0 : i32
    %c0_i32_1 = arith.constant 0 : i32
    return %c0_i32, %c0_i32_0 : i32, i32
  }
  func.func @transform_3(%arg0: i32, %arg1: i32) -> (i32, i32) {
    %c0_i32 = arith.constant 0 : i32
    %c0_i32_0 = arith.constant 0 : i32
    %c0_i32_1 = arith.constant 0 : i32
    return %c0_i32, %c0_i32_0 : i32, i32
  }
  func.func @transform_4(%arg0: i32, %arg1: i32) -> (i32, i32, i32) {
    %c0_i32 = arith.constant 0 : i32
    %c0_i32_0 = arith.constant 0 : i32
    return %arg1, %arg0, %c0_i32 : i32, i32, i32
  }
  func.func @transform_5(%arg0: i32, %arg1: i32) -> (i32, i32) {
    %c0_i32 = arith.constant 0 : i32
    %c0_i32_0 = arith.constant 0 : i32
    return %arg0, %c0_i32 : i32, i32
  }
}

module attributes {stable_mosaic.version = 11 : i64} {
  func.func @lstm_layer_kernel(%arg0: i32, %arg1: i32, %arg2: memref<8x8x128xf32, #tpu.memory_space<vmem>>, %arg3: memref<128x512xf32, #tpu.memory_space<vmem>>, %arg4: memref<1x512xf32, #tpu.memory_space<vmem>>, %arg5: memref<128x512xf32, #tpu.memory_space<vmem>>, %arg6: memref<8x128xf32, #tpu.memory_space<vmem>>, %arg7: memref<64x512xf32, #tpu.memory_space<vmem>>, %arg8: memref<8x128xf32, #tpu.memory_space<vmem>>, %arg9: memref<8x128xf32, #tpu.memory_space<vmem>>) attributes {dimension_semantics = [#tpu.dimension_semantics<parallel>, #tpu.dimension_semantics<arbitrary>], iteration_bounds = array<i64: 1, 1>, scalar_prefetch = 0 : i64, scratch_operands = 3 : i64, tpu.core_type = #tpu.core_type<tc>, window_params = [{transform_indices = @transform_0, window_bounds = array<i64: 8, 8, 128>}, {pipeline_mode = #tpu.pipeline_mode<synchronous>, transform_indices = @transform_1, window_bounds = array<i64: 128, 512>}, {pipeline_mode = #tpu.pipeline_mode<synchronous>, transform_indices = @transform_2, window_bounds = array<i64: 1, 512>}, {pipeline_mode = #tpu.pipeline_mode<synchronous>, transform_indices = @transform_3, window_bounds = array<i64: 128, 512>}, {transform_indices = @transform_4, window_bounds = array<i64: 8, 128>}]} {
    %c0_i32 = arith.constant 0 : i32
    %0 = arith.cmpi eq, %arg1, %c0_i32 : i32
    %1 = arith.extui %0 : i1 to i32
    %c0_i32_0 = arith.constant 0 : i32
    %2 = arith.cmpi ne, %1, %c0_i32_0 : i32
    scf.if %2 {
      %cst_54 = arith.constant 0.000000e+00 : f32
      %195 = vector.broadcast %cst_54 : f32 to vector<8x128xf32>
      %c0_55 = arith.constant 0 : index
      %c0_56 = arith.constant 0 : index
      %196 = vector.load %arg8[%c0_55, %c0_56] : memref<8x128xf32, #tpu.memory_space<vmem>>, vector<8x128xf32>
      tpu.vector_store %arg8[%c0_55, %c0_56], %195 {strides = array<i32>} : memref<8x128xf32, #tpu.memory_space<vmem>>, vector<8x128xf32>,
      %cst_57 = arith.constant 0.000000e+00 : f32
      %197 = vector.broadcast %cst_57 : f32 to vector<8x128xf32>
      %c0_58 = arith.constant 0 : index
      %c0_59 = arith.constant 0 : index
      %198 = vector.load %arg9[%c0_58, %c0_59] : memref<8x128xf32, #tpu.memory_space<vmem>>, vector<8x128xf32>
      tpu.vector_store %arg9[%c0_58, %c0_59], %197 {strides = array<i32>} : memref<8x128xf32, #tpu.memory_space<vmem>>, vector<8x128xf32>,
    } else {
    }
    %c0 = arith.constant 0 : index
    %c0_1 = arith.constant 0 : index
    %c0_2 = arith.constant 0 : index
    %3 = vector.load %arg2[%c0, %c0_1, %c0_2] : memref<8x8x128xf32, #tpu.memory_space<vmem>>, vector<8x8x128xf32>
    %4 = vector.shape_cast %3 : vector<8x8x128xf32> to vector<64x128xf32>
    %c0_3 = arith.constant 0 : index
    %c0_4 = arith.constant 0 : index
    %5 = vector.load %arg3[%c0_3, %c0_4] : memref<128x512xf32, #tpu.memory_space<vmem>>, vector<128x512xf32>
    %cst = arith.constant dense<0.000000e+00> : vector<64x512xf32>
    %6 = tpu.matmul %4, %5, %cst {dimension_numbers = #tpu.dot_dimension_numbers<[1], [0], [0], [1], [0, 0, 1, 1], [], []>} : vector<64x128xf32>, vector<128x512xf32>, vector<64x512xf32> -> vector<64x512xf32>
    %c0_5 = arith.constant 0 : index
    %c0_6 = arith.constant 0 : index
    %7 = vector.load %arg4[%c0_5, %c0_6] : memref<1x512xf32, #tpu.memory_space<vmem>>, vector<1x512xf32>
    %8 = vector.broadcast %7 : vector<1x512xf32> to vector<64x512xf32>
    %9 = arith.addf %6, %8 : vector<64x512xf32>
    %c0_7 = arith.constant 0 : index
    %c0_8 = arith.constant 0 : index
    %10 = vector.load %arg7[%c0_7, %c0_8] : memref<64x512xf32, #tpu.memory_space<vmem>>, vector<64x512xf32>
    tpu.vector_store %arg7[%c0_7, %c0_8], %9 {strides = array<i32>} : memref<64x512xf32, #tpu.memory_space<vmem>>, vector<64x512xf32>,
    %c0_9 = arith.constant 0 : index
    %c0_10 = arith.constant 0 : index
    %11 = vector.load %arg5[%c0_9, %c0_10] : memref<128x512xf32, #tpu.memory_space<vmem>>, vector<128x512xf32>
    %c0_11 = arith.constant 0 : index
    %c0_12 = arith.constant 0 : index
    %12 = vector.load %arg8[%c0_11, %c0_12] : memref<8x128xf32, #tpu.memory_space<vmem>>, vector<8x128xf32>
    %c0_13 = arith.constant 0 : index
    %c0_14 = arith.constant 0 : index
    %13 = vector.load %arg9[%c0_13, %c0_14] : memref<8x128xf32, #tpu.memory_space<vmem>>, vector<8x128xf32>
    %c0_i32_15 = arith.constant 0 : i32
    %c8_i32 = arith.constant 8 : i32
    %14 = arith.muli %c0_i32_15, %c8_i32 : i32
    %15 = tpu.assume_multiple %14, 8 : i32
    %16 = arith.index_cast %15 : i32 to index
    %c0_16 = arith.constant 0 : index
    %17 = vector.load %arg7[%16, %c0_16] : memref<64x512xf32, #tpu.memory_space<vmem>>, vector<8x512xf32>
    %cst_17 = arith.constant dense<0.000000e+00> : vector<8x512xf32>
    %18 = tpu.matmul %12, %11, %cst_17 {dimension_numbers = #tpu.dot_dimension_numbers<[1], [0], [0], [1], [0, 0, 1, 1], [], []>} : vector<8x128xf32>, vector<128x512xf32>, vector<8x512xf32> -> vector<8x512xf32>
    %19 = arith.addf %17, %18 : vector<8x512xf32>
    %20 = vector.extract_strided_slice %19 {offsets = [0, 0], sizes = [8, 384], strides = [1, 1]} : vector<8x512xf32> to vector<8x384xf32>
    %21 = arith.negf %20 : vector<8x384xf32>
    %22 = math.exp %21 : vector<8x384xf32>
    %cst_18 = arith.constant 1.000000e+00 : f32
    %23 = vector.broadcast %cst_18 : f32 to vector<8x384xf32>
    %24 = arith.addf %23, %22 : vector<8x384xf32>
    %25 = arith.divf %23, %24 : vector<8x384xf32>
    %26 = vector.extract_strided_slice %25 {offsets = [0, 0], sizes = [8, 128], strides = [1, 1]} : vector<8x384xf32> to vector<8x128xf32>
    %27 = vector.extract_strided_slice %25 {offsets = [0, 128], sizes = [8, 128], strides = [1, 1]} : vector<8x384xf32> to vector<8x128xf32>
    %28 = vector.extract_strided_slice %25 {offsets = [0, 256], sizes = [8, 128], strides = [1, 1]} : vector<8x384xf32> to vector<8x128xf32>
    %29 = vector.extract_strided_slice %19 {offsets = [0, 384], sizes = [8, 128], strides = [1, 1]} : vector<8x512xf32> to vector<8x128xf32>
    %30 = math.tanh %29 : vector<8x128xf32>
    %31 = arith.mulf %27, %13 : vector<8x128xf32>
    %32 = arith.mulf %26, %30 : vector<8x128xf32>
    %33 = arith.addf %31, %32 : vector<8x128xf32>
    %34 = math.tanh %33 : vector<8x128xf32>
    %35 = arith.mulf %28, %34 : vector<8x128xf32>
    %c1_i32 = arith.constant 1 : i32
    %c8_i32_19 = arith.constant 8 : i32
    %36 = arith.muli %c1_i32, %c8_i32_19 : i32
    %37 = tpu.assume_multiple %36, 8 : i32
    %38 = arith.index_cast %37 : i32 to index
    %c0_20 = arith.constant 0 : index
    %39 = vector.load %arg7[%38, %c0_20] : memref<64x512xf32, #tpu.memory_space<vmem>>, vector<8x512xf32>
    %cst_21 = arith.constant dense<0.000000e+00> : vector<8x512xf32>
    %40 = tpu.matmul %35, %11, %cst_21 {dimension_numbers = #tpu.dot_dimension_numbers<[1], [0], [0], [1], [0, 0, 1, 1], [], []>} : vector<8x128xf32>, vector<128x512xf32>, vector<8x512xf32> -> vector<8x512xf32>
    %41 = arith.addf %39, %40 : vector<8x512xf32>
    %42 = vector.extract_strided_slice %41 {offsets = [0, 0], sizes = [8, 384], strides = [1, 1]} : vector<8x512xf32> to vector<8x384xf32>
    %43 = arith.negf %42 : vector<8x384xf32>
    %44 = math.exp %43 : vector<8x384xf32>
    %cst_22 = arith.constant 1.000000e+00 : f32
    %45 = vector.broadcast %cst_22 : f32 to vector<8x384xf32>
    %46 = arith.addf %45, %44 : vector<8x384xf32>
    %47 = arith.divf %45, %46 : vector<8x384xf32>
    %48 = vector.extract_strided_slice %47 {offsets = [0, 0], sizes = [8, 128], strides = [1, 1]} : vector<8x384xf32> to vector<8x128xf32>
    %49 = vector.extract_strided_slice %47 {offsets = [0, 128], sizes = [8, 128], strides = [1, 1]} : vector<8x384xf32> to vector<8x128xf32>
    %50 = vector.extract_strided_slice %47 {offsets = [0, 256], sizes = [8, 128], strides = [1, 1]} : vector<8x384xf32> to vector<8x128xf32>
    %51 = vector.extract_strided_slice %41 {offsets = [0, 384], sizes = [8, 128], strides = [1, 1]} : vector<8x512xf32> to vector<8x128xf32>
    %52 = math.tanh %51 : vector<8x128xf32>
    %53 = arith.mulf %49, %33 : vector<8x128xf32>
    %54 = arith.mulf %48, %52 : vector<8x128xf32>
    %55 = arith.addf %53, %54 : vector<8x128xf32>
    %56 = math.tanh %55 : vector<8x128xf32>
    %57 = arith.mulf %50, %56 : vector<8x128xf32>
    %c2_i32 = arith.constant 2 : i32
    %c8_i32_23 = arith.constant 8 : i32
    %58 = arith.muli %c2_i32, %c8_i32_23 : i32
    %59 = tpu.assume_multiple %58, 8 : i32
    %60 = arith.index_cast %59 : i32 to index
    %c0_24 = arith.constant 0 : index
    %61 = vector.load %arg7[%60, %c0_24] : memref<64x512xf32, #tpu.memory_space<vmem>>, vector<8x512xf32>
    %cst_25 = arith.constant dense<0.000000e+00> : vector<8x512xf32>
    %62 = tpu.matmul %57, %11, %cst_25 {dimension_numbers = #tpu.dot_dimension_numbers<[1], [0], [0], [1], [0, 0, 1, 1], [], []>} : vector<8x128xf32>, vector<128x512xf32>, vector<8x512xf32> -> vector<8x512xf32>
    %63 = arith.addf %61, %62 : vector<8x512xf32>
    %64 = vector.extract_strided_slice %63 {offsets = [0, 0], sizes = [8, 384], strides = [1, 1]} : vector<8x512xf32> to vector<8x384xf32>
    %65 = arith.negf %64 : vector<8x384xf32>
    %66 = math.exp %65 : vector<8x384xf32>
    %cst_26 = arith.constant 1.000000e+00 : f32
    %67 = vector.broadcast %cst_26 : f32 to vector<8x384xf32>
    %68 = arith.addf %67, %66 : vector<8x384xf32>
    %69 = arith.divf %67, %68 : vector<8x384xf32>
    %70 = vector.extract_strided_slice %69 {offsets = [0, 0], sizes = [8, 128], strides = [1, 1]} : vector<8x384xf32> to vector<8x128xf32>
    %71 = vector.extract_strided_slice %69 {offsets = [0, 128], sizes = [8, 128], strides = [1, 1]} : vector<8x384xf32> to vector<8x128xf32>
    %72 = vector.extract_strided_slice %69 {offsets = [0, 256], sizes = [8, 128], strides = [1, 1]} : vector<8x384xf32> to vector<8x128xf32>
    %73 = vector.extract_strided_slice %63 {offsets = [0, 384], sizes = [8, 128], strides = [1, 1]} : vector<8x512xf32> to vector<8x128xf32>
    %74 = math.tanh %73 : vector<8x128xf32>
    %75 = arith.mulf %71, %55 : vector<8x128xf32>
    %76 = arith.mulf %70, %74 : vector<8x128xf32>
    %77 = arith.addf %75, %76 : vector<8x128xf32>
    %78 = math.tanh %77 : vector<8x128xf32>
    %79 = arith.mulf %72, %78 : vector<8x128xf32>
    %c3_i32 = arith.constant 3 : i32
    %c8_i32_27 = arith.constant 8 : i32
    %80 = arith.muli %c3_i32, %c8_i32_27 : i32
    %81 = tpu.assume_multiple %80, 8 : i32
    %82 = arith.index_cast %81 : i32 to index
    %c0_28 = arith.constant 0 : index
    %83 = vector.load %arg7[%82, %c0_28] : memref<64x512xf32, #tpu.memory_space<vmem>>, vector<8x512xf32>
    %cst_29 = arith.constant dense<0.000000e+00> : vector<8x512xf32>
    %84 = tpu.matmul %79, %11, %cst_29 {dimension_numbers = #tpu.dot_dimension_numbers<[1], [0], [0], [1], [0, 0, 1, 1], [], []>} : vector<8x128xf32>, vector<128x512xf32>, vector<8x512xf32> -> vector<8x512xf32>
    %85 = arith.addf %83, %84 : vector<8x512xf32>
    %86 = vector.extract_strided_slice %85 {offsets = [0, 0], sizes = [8, 384], strides = [1, 1]} : vector<8x512xf32> to vector<8x384xf32>
    %87 = arith.negf %86 : vector<8x384xf32>
    %88 = math.exp %87 : vector<8x384xf32>
    %cst_30 = arith.constant 1.000000e+00 : f32
    %89 = vector.broadcast %cst_30 : f32 to vector<8x384xf32>
    %90 = arith.addf %89, %88 : vector<8x384xf32>
    %91 = arith.divf %89, %90 : vector<8x384xf32>
    %92 = vector.extract_strided_slice %91 {offsets = [0, 0], sizes = [8, 128], strides = [1, 1]} : vector<8x384xf32> to vector<8x128xf32>
    %93 = vector.extract_strided_slice %91 {offsets = [0, 128], sizes = [8, 128], strides = [1, 1]} : vector<8x384xf32> to vector<8x128xf32>
    %94 = vector.extract_strided_slice %91 {offsets = [0, 256], sizes = [8, 128], strides = [1, 1]} : vector<8x384xf32> to vector<8x128xf32>
    %95 = vector.extract_strided_slice %85 {offsets = [0, 384], sizes = [8, 128], strides = [1, 1]} : vector<8x512xf32> to vector<8x128xf32>
    %96 = math.tanh %95 : vector<8x128xf32>
    %97 = arith.mulf %93, %77 : vector<8x128xf32>
    %98 = arith.mulf %92, %96 : vector<8x128xf32>
    %99 = arith.addf %97, %98 : vector<8x128xf32>
    %100 = math.tanh %99 : vector<8x128xf32>
    %101 = arith.mulf %94, %100 : vector<8x128xf32>
    %c4_i32 = arith.constant 4 : i32
    %c8_i32_31 = arith.constant 8 : i32
    %102 = arith.muli %c4_i32, %c8_i32_31 : i32
    %103 = tpu.assume_multiple %102, 8 : i32
    %104 = arith.index_cast %103 : i32 to index
    %c0_32 = arith.constant 0 : index
    %105 = vector.load %arg7[%104, %c0_32] : memref<64x512xf32, #tpu.memory_space<vmem>>, vector<8x512xf32>
    %cst_33 = arith.constant dense<0.000000e+00> : vector<8x512xf32>
    %106 = tpu.matmul %101, %11, %cst_33 {dimension_numbers = #tpu.dot_dimension_numbers<[1], [0], [0], [1], [0, 0, 1, 1], [], []>} : vector<8x128xf32>, vector<128x512xf32>, vector<8x512xf32> -> vector<8x512xf32>
    %107 = arith.addf %105, %106 : vector<8x512xf32>
    %108 = vector.extract_strided_slice %107 {offsets = [0, 0], sizes = [8, 384], strides = [1, 1]} : vector<8x512xf32> to vector<8x384xf32>
    %109 = arith.negf %108 : vector<8x384xf32>
    %110 = math.exp %109 : vector<8x384xf32>
    %cst_34 = arith.constant 1.000000e+00 : f32
    %111 = vector.broadcast %cst_34 : f32 to vector<8x384xf32>
    %112 = arith.addf %111, %110 : vector<8x384xf32>
    %113 = arith.divf %111, %112 : vector<8x384xf32>
    %114 = vector.extract_strided_slice %113 {offsets = [0, 0], sizes = [8, 128], strides = [1, 1]} : vector<8x384xf32> to vector<8x128xf32>
    %115 = vector.extract_strided_slice %113 {offsets = [0, 128], sizes = [8, 128], strides = [1, 1]} : vector<8x384xf32> to vector<8x128xf32>
    %116 = vector.extract_strided_slice %113 {offsets = [0, 256], sizes = [8, 128], strides = [1, 1]} : vector<8x384xf32> to vector<8x128xf32>
    %117 = vector.extract_strided_slice %107 {offsets = [0, 384], sizes = [8, 128], strides = [1, 1]} : vector<8x512xf32> to vector<8x128xf32>
    %118 = math.tanh %117 : vector<8x128xf32>
    %119 = arith.mulf %115, %99 : vector<8x128xf32>
    %120 = arith.mulf %114, %118 : vector<8x128xf32>
    %121 = arith.addf %119, %120 : vector<8x128xf32>
    %122 = math.tanh %121 : vector<8x128xf32>
    %123 = arith.mulf %116, %122 : vector<8x128xf32>
    %c5_i32 = arith.constant 5 : i32
    %c8_i32_35 = arith.constant 8 : i32
    %124 = arith.muli %c5_i32, %c8_i32_35 : i32
    %125 = tpu.assume_multiple %124, 8 : i32
    %126 = arith.index_cast %125 : i32 to index
    %c0_36 = arith.constant 0 : index
    %127 = vector.load %arg7[%126, %c0_36] : memref<64x512xf32, #tpu.memory_space<vmem>>, vector<8x512xf32>
    %cst_37 = arith.constant dense<0.000000e+00> : vector<8x512xf32>
    %128 = tpu.matmul %123, %11, %cst_37 {dimension_numbers = #tpu.dot_dimension_numbers<[1], [0], [0], [1], [0, 0, 1, 1], [], []>} : vector<8x128xf32>, vector<128x512xf32>, vector<8x512xf32> -> vector<8x512xf32>
    %129 = arith.addf %127, %128 : vector<8x512xf32>
    %130 = vector.extract_strided_slice %129 {offsets = [0, 0], sizes = [8, 384], strides = [1, 1]} : vector<8x512xf32> to vector<8x384xf32>
    %131 = arith.negf %130 : vector<8x384xf32>
    %132 = math.exp %131 : vector<8x384xf32>
    %cst_38 = arith.constant 1.000000e+00 : f32
    %133 = vector.broadcast %cst_38 : f32 to vector<8x384xf32>
    %134 = arith.addf %133, %132 : vector<8x384xf32>
    %135 = arith.divf %133, %134 : vector<8x384xf32>
    %136 = vector.extract_strided_slice %135 {offsets = [0, 0], sizes = [8, 128], strides = [1, 1]} : vector<8x384xf32> to vector<8x128xf32>
    %137 = vector.extract_strided_slice %135 {offsets = [0, 128], sizes = [8, 128], strides = [1, 1]} : vector<8x384xf32> to vector<8x128xf32>
    %138 = vector.extract_strided_slice %135 {offsets = [0, 256], sizes = [8, 128], strides = [1, 1]} : vector<8x384xf32> to vector<8x128xf32>
    %139 = vector.extract_strided_slice %129 {offsets = [0, 384], sizes = [8, 128], strides = [1, 1]} : vector<8x512xf32> to vector<8x128xf32>
    %140 = math.tanh %139 : vector<8x128xf32>
    %141 = arith.mulf %137, %121 : vector<8x128xf32>
    %142 = arith.mulf %136, %140 : vector<8x128xf32>
    %143 = arith.addf %141, %142 : vector<8x128xf32>
    %144 = math.tanh %143 : vector<8x128xf32>
    %145 = arith.mulf %138, %144 : vector<8x128xf32>
    %c6_i32 = arith.constant 6 : i32
    %c8_i32_39 = arith.constant 8 : i32
    %146 = arith.muli %c6_i32, %c8_i32_39 : i32
    %147 = tpu.assume_multiple %146, 8 : i32
    %148 = arith.index_cast %147 : i32 to index
    %c0_40 = arith.constant 0 : index
    %149 = vector.load %arg7[%148, %c0_40] : memref<64x512xf32, #tpu.memory_space<vmem>>, vector<8x512xf32>
    %cst_41 = arith.constant dense<0.000000e+00> : vector<8x512xf32>
    %150 = tpu.matmul %145, %11, %cst_41 {dimension_numbers = #tpu.dot_dimension_numbers<[1], [0], [0], [1], [0, 0, 1, 1], [], []>} : vector<8x128xf32>, vector<128x512xf32>, vector<8x512xf32> -> vector<8x512xf32>
    %151 = arith.addf %149, %150 : vector<8x512xf32>
    %152 = vector.extract_strided_slice %151 {offsets = [0, 0], sizes = [8, 384], strides = [1, 1]} : vector<8x512xf32> to vector<8x384xf32>
    %153 = arith.negf %152 : vector<8x384xf32>
    %154 = math.exp %153 : vector<8x384xf32>
    %cst_42 = arith.constant 1.000000e+00 : f32
    %155 = vector.broadcast %cst_42 : f32 to vector<8x384xf32>
    %156 = arith.addf %155, %154 : vector<8x384xf32>
    %157 = arith.divf %155, %156 : vector<8x384xf32>
    %158 = vector.extract_strided_slice %157 {offsets = [0, 0], sizes = [8, 128], strides = [1, 1]} : vector<8x384xf32> to vector<8x128xf32>
    %159 = vector.extract_strided_slice %157 {offsets = [0, 128], sizes = [8, 128], strides = [1, 1]} : vector<8x384xf32> to vector<8x128xf32>
    %160 = vector.extract_strided_slice %157 {offsets = [0, 256], sizes = [8, 128], strides = [1, 1]} : vector<8x384xf32> to vector<8x128xf32>
    %161 = vector.extract_strided_slice %151 {offsets = [0, 384], sizes = [8, 128], strides = [1, 1]} : vector<8x512xf32> to vector<8x128xf32>
    %162 = math.tanh %161 : vector<8x128xf32>
    %163 = arith.mulf %159, %143 : vector<8x128xf32>
    %164 = arith.mulf %158, %162 : vector<8x128xf32>
    %165 = arith.addf %163, %164 : vector<8x128xf32>
    %166 = math.tanh %165 : vector<8x128xf32>
    %167 = arith.mulf %160, %166 : vector<8x128xf32>
    %c7_i32 = arith.constant 7 : i32
    %c8_i32_43 = arith.constant 8 : i32
    %168 = arith.muli %c7_i32, %c8_i32_43 : i32
    %169 = tpu.assume_multiple %168, 8 : i32
    %170 = arith.index_cast %169 : i32 to index
    %c0_44 = arith.constant 0 : index
    %171 = vector.load %arg7[%170, %c0_44] : memref<64x512xf32, #tpu.memory_space<vmem>>, vector<8x512xf32>
    %cst_45 = arith.constant dense<0.000000e+00> : vector<8x512xf32>
    %172 = tpu.matmul %167, %11, %cst_45 {dimension_numbers = #tpu.dot_dimension_numbers<[1], [0], [0], [1], [0, 0, 1, 1], [], []>} : vector<8x128xf32>, vector<128x512xf32>, vector<8x512xf32> -> vector<8x512xf32>
    %173 = arith.addf %171, %172 : vector<8x512xf32>
    %174 = vector.extract_strided_slice %173 {offsets = [0, 0], sizes = [8, 384], strides = [1, 1]} : vector<8x512xf32> to vector<8x384xf32>
    %175 = arith.negf %174 : vector<8x384xf32>
    %176 = math.exp %175 : vector<8x384xf32>
    %cst_46 = arith.constant 1.000000e+00 : f32
    %177 = vector.broadcast %cst_46 : f32 to vector<8x384xf32>
    %178 = arith.addf %177, %176 : vector<8x384xf32>
    %179 = arith.divf %177, %178 : vector<8x384xf32>
    %180 = vector.extract_strided_slice %179 {offsets = [0, 0], sizes = [8, 128], strides = [1, 1]} : vector<8x384xf32> to vector<8x128xf32>
    %181 = vector.extract_strided_slice %179 {offsets = [0, 128], sizes = [8, 128], strides = [1, 1]} : vector<8x384xf32> to vector<8x128xf32>
    %182 = vector.extract_strided_slice %179 {offsets = [0, 256], sizes = [8, 128], strides = [1, 1]} : vector<8x384xf32> to vector<8x128xf32>
    %183 = vector.extract_strided_slice %173 {offsets = [0, 384], sizes = [8, 128], strides = [1, 1]} : vector<8x512xf32> to vector<8x128xf32>
    %184 = math.tanh %183 : vector<8x128xf32>
    %185 = arith.mulf %181, %165 : vector<8x128xf32>
    %186 = arith.mulf %180, %184 : vector<8x128xf32>
    %187 = arith.addf %185, %186 : vector<8x128xf32>
    %188 = math.tanh %187 : vector<8x128xf32>
    %189 = arith.mulf %182, %188 : vector<8x128xf32>
    %c8_i32_47 = arith.constant 8 : i32
    %c0_48 = arith.constant 0 : index
    %c0_49 = arith.constant 0 : index
    %190 = vector.load %arg8[%c0_48, %c0_49] : memref<8x128xf32, #tpu.memory_space<vmem>>, vector<8x128xf32>
    tpu.vector_store %arg8[%c0_48, %c0_49], %189 {strides = array<i32>} : memref<8x128xf32, #tpu.memory_space<vmem>>, vector<8x128xf32>,
    %c0_50 = arith.constant 0 : index
    %c0_51 = arith.constant 0 : index
    %191 = vector.load %arg9[%c0_50, %c0_51] : memref<8x128xf32, #tpu.memory_space<vmem>>, vector<8x128xf32>
    tpu.vector_store %arg9[%c0_50, %c0_51], %187 {strides = array<i32>} : memref<8x128xf32, #tpu.memory_space<vmem>>, vector<8x128xf32>,
    %c0_i32_52 = arith.constant 0 : i32
    %192 = arith.cmpi eq, %arg1, %c0_i32_52 : i32
    %193 = arith.extui %192 : i1 to i32
    %c0_i32_53 = arith.constant 0 : i32
    %194 = arith.cmpi ne, %193, %c0_i32_53 : i32
    scf.if %194 {
      %c0_54 = arith.constant 0 : index
      %c0_55 = arith.constant 0 : index
      %195 = vector.load %arg6[%c0_54, %c0_55] : memref<8x128xf32, #tpu.memory_space<vmem>>, vector<8x128xf32>
      tpu.vector_store %arg6[%c0_54, %c0_55], %189 {strides = array<i32>} : memref<8x128xf32, #tpu.memory_space<vmem>>, vector<8x128xf32>,
    } else {
    }
    return
  }
  func.func @transform_0(%arg0: i32, %arg1: i32) -> (i32, i32, i32) {
    %c0_i32 = arith.constant 0 : i32
    %c0_i32_0 = arith.constant 0 : i32
    return %arg1, %arg0, %c0_i32 : i32, i32, i32
  }
  func.func @transform_1(%arg0: i32, %arg1: i32) -> (i32, i32) {
    %c0_i32 = arith.constant 0 : i32
    %c0_i32_0 = arith.constant 0 : i32
    %c0_i32_1 = arith.constant 0 : i32
    return %c0_i32, %c0_i32_0 : i32, i32
  }
  func.func @transform_2(%arg0: i32, %arg1: i32) -> (i32, i32) {
    %c0_i32 = arith.constant 0 : i32
    %c0_i32_0 = arith.constant 0 : i32
    %c0_i32_1 = arith.constant 0 : i32
    return %c0_i32, %c0_i32_0 : i32, i32
  }
  func.func @transform_3(%arg0: i32, %arg1: i32) -> (i32, i32) {
    %c0_i32 = arith.constant 0 : i32
    %c0_i32_0 = arith.constant 0 : i32
    %c0_i32_1 = arith.constant 0 : i32
    return %c0_i32, %c0_i32_0 : i32, i32
  }
  func.func @transform_4(%arg0: i32, %arg1: i32) -> (i32, i32) {
    %c0_i32 = arith.constant 0 : i32
    %c0_i32_0 = arith.constant 0 : i32
    return %arg0, %c0_i32 : i32, i32
  }
}

module attributes {stable_mosaic.version = 11 : i64} {
  func.func @matmul_bias_kernel(%arg0: i32, %arg1: i32, %arg2: memref<16x128xf32, #tpu.memory_space<vmem>>, %arg3: memref<128x128xf32, #tpu.memory_space<vmem>>, %arg4: memref<1x128xf32, #tpu.memory_space<vmem>>, %arg5: memref<16x128xf32, #tpu.memory_space<vmem>>) attributes {dimension_semantics = [#tpu.dimension_semantics<parallel>, #tpu.dimension_semantics<parallel>], iteration_bounds = array<i64: 1, 1>, scalar_prefetch = 0 : i64, scratch_operands = 0 : i64, tpu.core_type = #tpu.core_type<tc>, window_params = [{transform_indices = @transform_0, window_bounds = array<i64: 16, 128>}, {transform_indices = @transform_1, window_bounds = array<i64: 128, 128>}, {transform_indices = @transform_2, window_bounds = array<i64: 1, 128>}, {transform_indices = @transform_3, window_bounds = array<i64: 16, 128>}]} {
    %c0 = arith.constant 0 : index
    %c0_0 = arith.constant 0 : index
    %0 = vector.load %arg2[%c0, %c0_0] : memref<16x128xf32, #tpu.memory_space<vmem>>, vector<16x128xf32>
    %c0_1 = arith.constant 0 : index
    %c0_2 = arith.constant 0 : index
    %1 = vector.load %arg3[%c0_1, %c0_2] : memref<128x128xf32, #tpu.memory_space<vmem>>, vector<128x128xf32>
    %cst = arith.constant dense<0.000000e+00> : vector<16x128xf32>
    %2 = tpu.matmul %0, %1, %cst {dimension_numbers = #tpu.dot_dimension_numbers<[1], [0], [0], [1], [0, 0, 1, 1], [], []>} : vector<16x128xf32>, vector<128x128xf32>, vector<16x128xf32> -> vector<16x128xf32>
    %c0_3 = arith.constant 0 : index
    %c0_4 = arith.constant 0 : index
    %3 = vector.load %arg4[%c0_3, %c0_4] : memref<1x128xf32, #tpu.memory_space<vmem>>, vector<1x128xf32>
    %4 = vector.broadcast %3 : vector<1x128xf32> to vector<16x128xf32>
    %5 = arith.addf %2, %4 : vector<16x128xf32>
    %c0_5 = arith.constant 0 : index
    %c0_6 = arith.constant 0 : index
    %6 = vector.load %arg5[%c0_5, %c0_6] : memref<16x128xf32, #tpu.memory_space<vmem>>, vector<16x128xf32>
    tpu.vector_store %arg5[%c0_5, %c0_6], %5 {strides = array<i32>} : memref<16x128xf32, #tpu.memory_space<vmem>>, vector<16x128xf32>,
    return
  }
  func.func @transform_0(%arg0: i32, %arg1: i32) -> (i32, i32) {
    %c0_i32 = arith.constant 0 : i32
    %c0_i32_0 = arith.constant 0 : i32
    return %arg0, %c0_i32 : i32, i32
  }
  func.func @transform_1(%arg0: i32, %arg1: i32) -> (i32, i32) {
    %c0_i32 = arith.constant 0 : i32
    %c0_i32_0 = arith.constant 0 : i32
    return %c0_i32, %arg1 : i32, i32
  }
  func.func @transform_2(%arg0: i32, %arg1: i32) -> (i32, i32) {
    %c0_i32 = arith.constant 0 : i32
    %c0_i32_0 = arith.constant 0 : i32
    return %c0_i32, %arg1 : i32, i32
  }
  func.func @transform_3(%arg0: i32, %arg1: i32) -> (i32, i32) {
    %c0_i32 = arith.constant 0 : i32
    return %arg0, %arg1 : i32, i32
  }
}

</mosaic_0001>

<llo_original>
// kernel: olstm_forward.5
$region0: #{olstm_forward.5}
  #allocation0 [shape = 'u32[]', space=smem, size = 0x4, offset = 0x4, fixed_abs, tag = 'smem constant byte address 0x4 - core index']
  #allocation1 [shape = 'u32[144,128]{1,0:T(1,128)}', space=vmem, size = 0x12000, scoped, tag = 'internal scratch']
  %s0 = inlined_call_operand.vmem [shape: f32[16,128], index: 0, kind: input, shape index: {}]
  %s1 = inlined_call_operand.vmem [shape: f32[128,128], index: 1, kind: input, shape index: {}]
  %s2 = inlined_call_operand.vmem [shape: f32[1,128], index: 2, kind: input, shape index: {}]
  %s3 = inlined_call_operand.vmem [shape: f32[16,128], index: 3, kind: output, shape index: {}]
  %s4 = sld [smem:[#allocation0]]
  $region22: #{olstm_forward.5} parent=0
    _
  %s6 = ssub.s32 1, %s4
  %s7 = scalar_select 0, %s6, %s4
  // Predicated region
  $region2: #{olstm_forward.5} parent=0 // pred_check
    _
  $region3: #{olstm_forward.5} parent=0 // pred_check_branch
    %9 = sbr.rel (0) target = $region5
  $region4: #{olstm_forward.5} parent=0 // pred_region
    _
  $region5: #{olstm_forward.5} parent=0 // pred_fallthru
    _
  // Predicated region
  $region6: #{olstm_forward.5} parent=0 // pred_check
    _
  $region7: #{olstm_forward.5} parent=0 // pred_check_branch
    %11 = sbr.rel (0) target = $region9
  $region8: #{olstm_forward.5} parent=0 // pred_region
    _
  $region9: #{olstm_forward.5} parent=0 // pred_fallthru
    _
  // Predicated region
  $region10: #{olstm_forward.5} parent=0 // pred_check
    _
  $region11: #{olstm_forward.5} parent=0 // pred_check_branch
    %13 = sbr.rel (0) target = $region13
  $region12: #{olstm_forward.5} parent=0 // pred_region
    _
  $region13: #{olstm_forward.5} parent=0 // pred_fallthru
    _
  %v14 = vld [vmem:[%s0] sm:$0xff]
  %v15 = vld [vmem:[%s0 + $0x8] sm:$0xff]
  %v16 = vld [vmem:[%s1] sm:$0xff]
  %v17 = vld [vmem:[%s1 + $0x8] sm:$0xff]
  %v18 = vld [vmem:[%s1 + $0x10] sm:$0xff]
  %v19 = vld [vmem:[%s1 + $0x18] sm:$0xff]
  %v20 = vld [vmem:[%s1 + $0x20] sm:$0xff]
  %v21 = vld [vmem:[%s1 + $0x28] sm:$0xff]
  %v22 = vld [vmem:[%s1 + $0x30] sm:$0xff]
  %v23 = vld [vmem:[%s1 + $0x38] sm:$0xff]
  %v24 = vld [vmem:[%s1 + $0x40] sm:$0xff]
  %v25 = vld [vmem:[%s1 + $0x48] sm:$0xff]
  %v26 = vld [vmem:[%s1 + $0x50] sm:$0xff]
  %v27 = vld [vmem:[%s1 + $0x58] sm:$0xff]
  %v28 = vld [vmem:[%s1 + $0x60] sm:$0xff]
  %v29 = vld [vmem:[%s1 + $0x68] sm:$0xff]
  %v30 = vld [vmem:[%s1 + $0x70] sm:$0xff]
  %v31 = vld [vmem:[%s1 + $0x78] sm:$0xff]
  %v32 = vld [vmem:[%s2] sm:$0x1]
  %v34 = vlaneseq
  %v35 = vshrl.u32 %v34, 7
  %v36 = vsub.s32 0, %v35
  %v37 = vrot.slane %v32, %v36
  %39 = vmatprep.subr.mxu0 0.0
  %40 = vmatpush1.msra.mxu0 %v31
  %41 = vmatprep.subr.mxu0 0.0
  %42 = vmatpush1.msra.mxu0 %v30
  %43 = vmatprep.subr.mxu0 0.0
  %44 = vmatpush1.msra.mxu0 %v29
  %45 = vmatprep.subr.mxu0 0.0
  %46 = vmatpush1.msra.mxu0 %v28
  %47 = vmatprep.subr.mxu0 0.0
  %48 = vmatpush1.msra.mxu0 %v27
  %49 = vmatprep.subr.mxu0 0.0
  %50 = vmatpush1.msra.mxu0 %v26
  %51 = vmatprep.subr.mxu0 0.0
  %52 = vmatpush1.msra.mxu0 %v25
  %53 = vmatprep.subr.mxu0 0.0
  %54 = vmatpush1.msra.mxu0 %v24
  %55 = vmatprep.subr.mxu0 0.0
  %56 = vmatpush1.msra.mxu0 %v23
  %57 = vmatprep.subr.mxu0 0.0
  %58 = vmatpush1.msra.mxu0 %v22
  %59 = vmatprep.subr.mxu0 0.0
  %60 = vmatpush1.msra.mxu0 %v21
  %61 = vmatprep.subr.mxu0 0.0
  %62 = vmatpush1.msra.mxu0 %v20
  %63 = vmatprep.subr.mxu0 0.0
  %64 = vmatpush1.msra.mxu0 %v19
  %65 = vmatprep.subr.mxu0 0.0
  %66 = vmatpush1.msra.mxu0 %v18
  %67 = vmatprep.subr.mxu0 0.0
  %68 = vmatpush1.msra.mxu0 %v17
  %69 = vmatprep.subr.mxu0 0.0
  %70 = vmatpush1.msra.mxu0 %v16
  %71 = vmatprep.subr.mxu0 0.0
  %72 = vmatpush2.msra.mxu0 0.0
  %73 = vmatprep.subr.mxu0 0.0
  %74 = vmatpush2.msra.mxu0 0.0
  %75 = vmatprep.subr.mxu0 0.0
  %76 = vmatpush2.msra.mxu0 0.0
  %77 = vmatprep.subr.mxu0 0.0
  %78 = vmatpush2.msra.mxu0 0.0
  %79 = vmatprep.subr.mxu0 0.0
  %80 = vmatpush2.msra.mxu0 0.0
  %81 = vmatprep.subr.mxu0 0.0
  %82 = vmatpush2.msra.mxu0 0.0
  %83 = vmatprep.subr.mxu0 0.0
  %84 = vmatpush2.msra.mxu0 0.0
  %85 = vmatprep.subr.mxu0 0.0
  %86 = vmatpush2.msra.mxu0 0.0
  %87 = vmatprep.subr.mxu0 0.0
  %88 = vmatpush2.msra.mxu0 0.0
  %89 = vmatprep.subr.mxu0 0.0
  %90 = vmatpush2.msra.mxu0 0.0
  %91 = vmatprep.subr.mxu0 0.0
  %92 = vmatpush2.msra.mxu0 0.0
  %93 = vmatprep.subr.mxu0 0.0
  %94 = vmatpush2.msra.mxu0 0.0
  %95 = vmatprep.subr.mxu0 0.0
  %96 = vmatpush2.msra.mxu0 0.0
  %97 = vmatprep.subr.mxu0 0.0
  %98 = vmatpush2.msra.mxu0 0.0
  %99 = vmatprep.subr.mxu0 0.0
  %100 = vmatpush2.msra.mxu0 0.0
  %101 = vmatprep.subr.mxu0 0.0
  %102 = vmatpush2.msra.mxu0 0.0
  %103 = vmatprep.mubr.f32.mxu0 0.0
  %104 = vmatmul.mubr.f32.gmra.mxu0 %v14
  %v105 = vpop.f32.mrf.mxu0
  %v106 = vadd.f32 %v37, %v105
  %v107 = vpop.f32.mrf.mxu0
  %108 = vmatprep.mubr.f32.mxu0 0.0
  %109 = vmatmul.mubr.f32.gmra.mxu0 %v15
  %v110 = vpop.f32.mrf.mxu0
  %v111 = vadd.f32 %v37, %v110
  %v112 = vpop.f32.mrf.mxu0
  %113 = vdwg.mxu0
  %114 = vst [vmem:[%s3] sm:$0xff] %v106
  %115 = vst [vmem:[%s3 + $0x8] sm:$0xff] %v111
  // Predicated region
  $region14: #{olstm_forward.5} parent=0 // pred_check
    _
  $region15: #{olstm_forward.5} parent=0 // pred_check_branch
    %117 = sbr.rel (0) target = $region17
  $region16: #{olstm_forward.5} parent=0 // pred_region
    _
  $region17: #{olstm_forward.5} parent=0 // pred_fallthru
    _
  // Predicated region
  $region18: #{olstm_forward.5} parent=0 // pred_check
    _
  $region19: #{olstm_forward.5} parent=0 // pred_check_branch
    %119 = sbr.rel (0) target = $region21
  $region20: #{olstm_forward.5} parent=0 // pred_region
    _
  $region21: #{olstm_forward.5} parent=0 // pred_fallthru
    _

// kernel: olstm_forward.4
$region0: #{olstm_forward.4}
  #allocation0 [shape = 'u32[]', space=smem, size = 0x4, offset = 0x4, fixed_abs, tag = 'smem constant byte address 0x4 - core index']
  #allocation1 [shape = 'u32[144,128]{1,0:T(1,128)}', space=vmem, size = 0x12000, scoped, tag = 'internal scratch']
  #allocation2 [shape = 'f32[64,512]{1,0:T(8,128)}', space=vmem, size = 0x20000, scoped, tag = 'scratch operand']
  #allocation3 [shape = 'f32[8,128]{1,0:T(8,128)}', space=vmem, size = 0x1000, scoped, tag = 'scratch operand']
  #allocation4 [shape = 'f32[8,128]{1,0:T(8,128)}', space=vmem, size = 0x1000, scoped, tag = 'scratch operand']
  %s0 = inlined_call_operand.vmem [shape: f32[8,8,128], index: 0, kind: input, shape index: {}]
  %s1 = inlined_call_operand.vmem [shape: f32[128,512], index: 1, kind: input, shape index: {}]
  %s2 = inlined_call_operand.vmem [shape: f32[1,512], index: 2, kind: input, shape index: {}]
  %s3 = inlined_call_operand.vmem [shape: f32[128,512], index: 3, kind: input, shape index: {}]
  %s4 = inlined_call_operand.vmem [shape: f32[8,128], index: 4, kind: output, shape index: {}]
  %s5 = sld [smem:[#allocation0]]
  $region34: #{olstm_forward.4} parent=0
    _
  %s7 = ssub.s32 1, %s5
  %s8 = scalar_select 0, %s7, %s5
  // Predicated region
  $region2: #{olstm_forward.4} parent=0 // pred_check
    _
  $region3: #{olstm_forward.4} parent=0 // pred_check_branch
    %10 = sbr.rel (0) target = $region5
  $region4: #{olstm_forward.4} parent=0 // pred_region
    _
  $region5: #{olstm_forward.4} parent=0 // pred_fallthru
    _
  // Predicated region
  $region6: #{olstm_forward.4} parent=0 // pred_check
    _
  $region7: #{olstm_forward.4} parent=0 // pred_check_branch
    %12 = sbr.rel (0) target = $region9
  $region8: #{olstm_forward.4} parent=0 // pred_region
    _
  $region9: #{olstm_forward.4} parent=0 // pred_fallthru
    _
  // Predicated region
  $region10: #{olstm_forward.4} parent=0 // pred_check
    _
  $region11: #{olstm_forward.4} parent=0 // pred_check_branch
    %14 = sbr.rel (0) target = $region13
  $region12: #{olstm_forward.4} parent=0 // pred_region
    _
  $region13: #{olstm_forward.4} parent=0 // pred_fallthru
    _
  // Predicated region
  $region14: #{olstm_forward.4} parent=0 // pred_check
    _
  $region15: #{olstm_forward.4} parent=0 // pred_check_branch
    %16 = sbr.rel (0) target = $region17
  $region16: #{olstm_forward.4} parent=0 // pred_region
    _
  $region17: #{olstm_forward.4} parent=0 // pred_fallthru
    _
  %p17 = scmp.eq.s32.totalorder 0, 0
  // Predicated region
  $region18: #{olstm_forward.4} parent=0 // pred_check
    %p18 = pneg %p17
  $region19: #{olstm_forward.4} parent=0 // pred_check_branch
    %20 = sbr.rel (%p18) target = $region21
  $region20: #{olstm_forward.4} parent=0 // pred_region
    %21 = vst [vmem:[#allocation3] sm:$0xff] 0.0
    %22 = vst [vmem:[#allocation4] sm:$0xff] 0.0
  $region21: #{olstm_forward.4} parent=0 // pred_fallthru
    _
  %v23 = vld [vmem:[%s0] sm:$0xff]
  %v24 = vld [vmem:[%s0 + $0x8] sm:$0xff]
  %v25 = vld [vmem:[%s0 + $0x10] sm:$0xff]
  %v26 = vld [vmem:[%s0 + $0x18] sm:$0xff]
  %v27 = vld [vmem:[%s0 + $0x20] sm:$0xff]
  %v28 = vld [vmem:[%s0 + $0x28] sm:$0xff]
  %v29 = vld [vmem:[%s0 + $0x30] sm:$0xff]
  %v30 = vld [vmem:[%s0 + $0x38] sm:$0xff]
  %v31 = vld [vmem:[%s1] sm:$0xff]
  %v32 = vld [vmem:[%s1 + $0x8] sm:$0xff]
  %v33 = vld [vmem:[%s1 + $0x10] sm:$0xff]
  %v34 = vld [vmem:[%s1 + $0x18] sm:$0xff]
  %v35 = vld [vmem:[%s1 + $0x20] sm:$0xff]
  %v36 = vld [vmem:[%s1 + $0x28] sm:$0xff]
  %v37 = vld [vmem:[%s1 + $0x30] sm:$0xff]
  %v38 = vld [vmem:[%s1 + $0x38] sm:$0xff]
  %v39 = vld [vmem:[%s1 + $0x40] sm:$0xff]
  %v40 = vld [vmem:[%s1 + $0x48] sm:$0xff]
  %v41 = vld [vmem:[%s1 + $0x50] sm:$0xff]
  %v42 = vld [vmem:[%s1 + $0x58] sm:$0xff]
  %v43 = vld [vmem:[%s1 + $0x60] sm:$0xff]
  %v44 = vld [vmem:[%s1 + $0x68] sm:$0xff]
  %v45 = vld [vmem:[%s1 + $0x70] sm:$0xff]
  %v46 = vld [vmem:[%s1 + $0x78] sm:$0xff]
  %v47 = vld [vmem:[%s1 + $0x80] sm:$0xff]
  %v48 = vld [vmem:[%s1 + $0x88] sm:$0xff]
  %v49 = vld [vmem:[%s1 + $0x90] sm:$0xff]
  %v50 = vld [vmem:[%s1 + $0x98] sm:$0xff]
  %v51 = vld [vmem:[%s1 + $0xa0] sm:$0xff]
  %v52 = vld [vmem:[%s1 + $0xa8] sm:$0xff]
  %v53 = vld [vmem:[%s1 + $0xb0] sm:$0xff]
  %v54 = vld [vmem:[%s1 + $0xb8] sm:$0xff]
  %v55 = vld [vmem:[%s1 + $0xc0] sm:$0xff]
  %v56 = vld [vmem:[%s1 + $0xc8] sm:$0xff]
  %v57 = vld [vmem:[%s1 + $0xd0] sm:$0xff]
  %v58 = vld [vmem:[%s1 + $0xd8] sm:$0xff]
  %v59 = vld [vmem:[%s1 + $0xe0] sm:$0xff]
  %v60 = vld [vmem:[%s1 + $0xe8] sm:$0xff]
  %v61 = vld [vmem:[%s1 + $0xf0] sm:$0xff]
  %v62 = vld [vmem:[%s1 + $0xf8] sm:$0xff]
  %v63 = vld [vmem:[%s1 + $0x100] sm:$0xff]
  %v64 = vld [vmem:[%s1 + $0x108] sm:$0xff]
  %v65 = vld [vmem:[%s1 + $0x110] sm:$0xff]
  %v66 = vld [vmem:[%s1 + $0x118] sm:$0xff]
  %v67 = vld [vmem:[%s1 + $0x120] sm:$0xff]
  %v68 = vld [vmem:[%s1 + $0x128] sm:$0xff]
  %v69 = vld [vmem:[%s1 + $0x130] sm:$0xff]
  %v70 = vld [vmem:[%s1 + $0x138] sm:$0xff]
  %v71 = vld [vmem:[%s1 + $0x140] sm:$0xff]
  %v72 = vld [vmem:[%s1 + $0x148] sm:$0xff]
  %v73 = vld [vmem:[%s1 + $0x150] sm:$0xff]
  %v74 = vld [vmem:[%s1 + $0x158] sm:$0xff]
  %v75 = vld [vmem:[%s1 + $0x160] sm:$0xff]
  %v76 = vld [vmem:[%s1 + $0x168] sm:$0xff]
  %v77 = vld [vmem:[%s1 + $0x170] sm:$0xff]
  %v78 = vld [vmem:[%s1 + $0x178] sm:$0xff]
  %v79 = vld [vmem:[%s1 + $0x180] sm:$0xff]
  %v80 = vld [vmem:[%s1 + $0x188] sm:$0xff]
  %v81 = vld [vmem:[%s1 + $0x190] sm:$0xff]
  %v82 = vld [vmem:[%s1 + $0x198] sm:$0xff]
  %v83 = vld [vmem:[%s1 + $0x1a0] sm:$0xff]
  %v84 = vld [vmem:[%s1 + $0x1a8] sm:$0xff]
  %v85 = vld [vmem:[%s1 + $0x1b0] sm:$0xff]
  %v86 = vld [vmem:[%s1 + $0x1b8] sm:$0xff]
  %v87 = vld [vmem:[%s1 + $0x1c0] sm:$0xff]
  %v88 = vld [vmem:[%s1 + $0x1c8] sm:$0xff]
  %v89 = vld [vmem:[%s1 + $0x1d0] sm:$0xff]
  %v90 = vld [vmem:[%s1 + $0x1d8] sm:$0xff]
  %v91 = vld [vmem:[%s1 + $0x1e0] sm:$0xff]
  %v92 = vld [vmem:[%s1 + $0x1e8] sm:$0xff]
  %v93 = vld [vmem:[%s1 + $0x1f0] sm:$0xff]
  %v94 = vld [vmem:[%s1 + $0x1f8] sm:$0xff]
  %v95 = vld [vmem:[%s2] sm:$0xf]
  %v97 = vlaneseq
  %v98 = vshrl.u32 %v97, 7
  %v99 = vsub.s32 0, %v98
  %v100 = vrot.slane %v95, %v99
  %v101 = vlaneseq
  %v102 = vshrl.u32 %v101, 7
  %v103 = vsub.s32 1, %v102
  %v104 = vrot.slane %v95, %v103
  %v105 = vlaneseq
  %v106 = vshrl.u32 %v105, 7
  %v107 = vsub.s32 2, %v106
  %v108 = vrot.slane %v95, %v107
  %v109 = vlaneseq
  %v110 = vshrl.u32 %v109, 7
  %v111 = vsub.s32 3, %v110
  %v112 = vrot.slane %v95, %v111
  %117 = vmatprep.subr.mxu0 %v92
  %118 = vmatpush1.msra.mxu0 %v91
  %119 = vmatprep.subr.mxu0 %v88
  %120 = vmatpush1.msra.mxu0 %v87
  %121 = vmatprep.subr.mxu0 %v84
  %122 = vmatpush1.msra.mxu0 %v83
  %123 = vmatprep.subr.mxu0 %v80
  %124 = vmatpush1.msra.mxu0 %v79
  %125 = vmatprep.subr.mxu0 %v76
  %126 = vmatpush1.msra.mxu0 %v75
  %127 = vmatprep.subr.mxu0 %v72
  %128 = vmatpush1.msra.mxu0 %v71
  %129 = vmatprep.subr.mxu0 %v68
  %130 = vmatpush1.msra.mxu0 %v67
  %131 = vmatprep.subr.mxu0 %v64
  %132 = vmatpush1.msra.mxu0 %v63
  %133 = vmatprep.subr.mxu0 %v60
  %134 = vmatpush1.msra.mxu0 %v59
  %135 = vmatprep.subr.mxu0 %v56
  %136 = vmatpush1.msra.mxu0 %v55
  %137 = vmatprep.subr.mxu0 %v52
  %138 = vmatpush1.msra.mxu0 %v51
  %139 = vmatprep.subr.mxu0 %v48
  %140 = vmatpush1.msra.mxu0 %v47
  %141 = vmatprep.subr.mxu0 %v44
  %142 = vmatpush1.msra.mxu0 %v43
  %143 = vmatprep.subr.mxu0 %v40
  %144 = vmatpush1.msra.mxu0 %v39
  %145 = vmatprep.subr.mxu0 %v36
  %146 = vmatpush1.msra.mxu0 %v35
  %147 = vmatprep.subr.mxu0 %v32
  %148 = vmatpush1.msra.mxu0 %v31
  %149 = vmatprep.subr.mxu0 0.0
  %150 = vmatpush2.msra.mxu0 0.0
  %151 = vmatprep.subr.mxu0 0.0
  %152 = vmatpush2.msra.mxu0 0.0
  %153 = vmatprep.subr.mxu0 0.0
  %154 = vmatpush2.msra.mxu0 0.0
  %155 = vmatprep.subr.mxu0 0.0
  %156 = vmatpush2.msra.mxu0 0.0
  %157 = vmatprep.subr.mxu0 0.0
  %158 = vmatpush2.msra.mxu0 0.0
  %159 = vmatprep.subr.mxu0 0.0
  %160 = vmatpush2.msra.mxu0 0.0
  %161 = vmatprep.subr.mxu0 0.0
  %162 = vmatpush2.msra.mxu0 0.0
  %163 = vmatprep.subr.mxu0 0.0
  %164 = vmatpush2.msra.mxu0 0.0
  %165 = vmatprep.subr.mxu0 0.0
  %166 = vmatpush2.msra.mxu0 0.0
  %167 = vmatprep.subr.mxu0 0.0
  %168 = vmatpush2.msra.mxu0 0.0
  %169 = vmatprep.subr.mxu0 0.0
  %170 = vmatpush2.msra.mxu0 0.0
  %171 = vmatprep.subr.mxu0 0.0
  %172 = vmatpush2.msra.mxu0 0.0
  %173 = vmatprep.subr.mxu0 0.0
  %174 = vmatpush2.msra.mxu0 0.0
  %175 = vmatprep.subr.mxu0 0.0
  %176 = vmatpush2.msra.mxu0 0.0
  %177 = vmatprep.subr.mxu0 0.0
  %178 = vmatpush2.msra.mxu0 0.0
  %179 = vmatprep.subr.mxu0 0.0
  %180 = vmatpush2.msra.mxu0 0.0
  %181 = vmatprep.mubr.f32.mxu0 0.0
  %182 = vmatmul.mubr.f32.gmra.mxu0 %v23
  %v183 = vpop.f32.mrf.mxu0
  %v184 = vadd.f32 %v100, %v183
  %v185 = vpop.f32.mrf.mxu0
  %v186 = vadd.f32 %v104, %v185
  %187 = vmatprep.mubr.f32.mxu0 0.0
  %188 = vmatmul.mubr.f32.gmra.mxu0 %v24
  %v189 = vpop.f32.mrf.mxu0
  %v190 = vadd.f32 %v100, %v189
  %v191 = vpop.f32.mrf.mxu0
  %v192 = vadd.f32 %v104, %v191
  %193 = vmatprep.mubr.f32.mxu0 0.0
  %194 = vmatmul.mubr.f32.gmra.mxu0 %v25
  %v195 = vpop.f32.mrf.mxu0
  %v196 = vadd.f32 %v100, %v195
  %v197 = vpop.f32.mrf.mxu0
  %v198 = vadd.f32 %v104, %v197
  %199 = vmatprep.mubr.f32.mxu0 0.0
  %200 = vmatmul.mubr.f32.gmra.mxu0 %v26
  %v201 = vpop.f32.mrf.mxu0
  %v202 = vadd.f32 %v100, %v201
  %v203 = vpop.f32.mrf.mxu0
  %v204 = vadd.f32 %v104, %v203
  %205 = vmatprep.mubr.f32.mxu0 0.0
  %206 = vmatmul.mubr.f32.gmra.mxu0 %v27
  %v207 = vpop.f32.mrf.mxu0
  %v208 = vadd.f32 %v100, %v207
  %v209 = vpop.f32.mrf.mxu0
  %v210 = vadd.f32 %v104, %v209
  %211 = vmatprep.mubr.f32.mxu0 0.0
  %212 = vmatmul.mubr.f32.gmra.mxu0 %v28
  %v213 = vpop.f32.mrf.mxu0
  %v214 = vadd.f32 %v100, %v213
  %v215 = vpop.f32.mrf.mxu0
  %v216 = vadd.f32 %v104, %v215
  %217 = vmatprep.mubr.f32.mxu0 0.0
  %218 = vmatmul.mubr.f32.gmra.mxu0 %v29
  %v219 = vpop.f32.mrf.mxu0
  %v220 = vadd.f32 %v100, %v219
  %v221 = vpop.f32.mrf.mxu0
  %v222 = vadd.f32 %v104, %v221
  %223 = vmatprep.mubr.f32.mxu0 0.0
  %224 = vmatmul.mubr.f32.gmra.mxu0 %v30
  %v225 = vpop.f32.mrf.mxu0
  %v226 = vadd.f32 %v100, %v225
  %v227 = vpop.f32.mrf.mxu0
  %v228 = vadd.f32 %v104, %v227
  %229 = vdwg.mxu0
  %230 = vmatprep.subr.mxu0 %v94
  %231 = vmatpush1.msra.mxu0 %v93
  %232 = vmatprep.subr.mxu0 %v90
  %233 = vmatpush1.msra.mxu0 %v89
  %234 = vmatprep.subr.mxu0 %v86
  %235 = vmatpush1.msra.mxu0 %v85
  %236 = vmatprep.subr.mxu0 %v82
  %237 = vmatpush1.msra.mxu0 %v81
  %238 = vmatprep.subr.mxu0 %v78
  %239 = vmatpush1.msra.mxu0 %v77
  %240 = vmatprep.subr.mxu0 %v74
  %241 = vmatpush1.msra.mxu0 %v73
  %242 = vmatprep.subr.mxu0 %v70
  %243 = vmatpush1.msra.mxu0 %v69
  %244 = vmatprep.subr.mxu0 %v66
  %245 = vmatpush1.msra.mxu0 %v65
  %246 = vmatprep.subr.mxu0 %v62
  %247 = vmatpush1.msra.mxu0 %v61
  %248 = vmatprep.subr.mxu0 %v58
  %249 = vmatpush1.msra.mxu0 %v57
  %250 = vmatprep.subr.mxu0 %v54
  %251 = vmatpush1.msra.mxu0 %v53
  %252 = vmatprep.subr.mxu0 %v50
  %253 = vmatpush1.msra.mxu0 %v49
  %254 = vmatprep.subr.mxu0 %v46
  %255 = vmatpush1.msra.mxu0 %v45
  %256 = vmatprep.subr.mxu0 %v42
  %257 = vmatpush1.msra.mxu0 %v41
  %258 = vmatprep.subr.mxu0 %v38
  %259 = vmatpush1.msra.mxu0 %v37
  %260 = vmatprep.subr.mxu0 %v34
  %261 = vmatpush1.msra.mxu0 %v33
  %262 = vmatprep.subr.mxu0 0.0
  %263 = vmatpush2.msra.mxu0 0.0
  %264 = vmatprep.subr.mxu0 0.0
  %265 = vmatpush2.msra.mxu0 0.0
  %266 = vmatprep.subr.mxu0 0.0
  %267 = vmatpush2.msra.mxu0 0.0
  %268 = vmatprep.subr.mxu0 0.0
  %269 = vmatpush2.msra.mxu0 0.0
  %270 = vmatprep.subr.mxu0 0.0
  %271 = vmatpush2.msra.mxu0 0.0
  %272 = vmatprep.subr.mxu0 0.0
  %273 = vmatpush2.msra.mxu0 0.0
  %274 = vmatprep.subr.mxu0 0.0
  %275 = vmatpush2.msra.mxu0 0.0
  %276 = vmatprep.subr.mxu0 0.0
  %277 = vmatpush2.msra.mxu0 0.0
  %278 = vmatprep.subr.mxu0 0.0
  %279 = vmatpush2.msra.mxu0 0.0
  %280 = vmatprep.subr.mxu0 0.0
  %281 = vmatpush2.msra.mxu0 0.0
  %282 = vmatprep.subr.mxu0 0.0
  %283 = vmatpush2.msra.mxu0 0.0
  %284 = vmatprep.subr.mxu0 0.0
  %285 = vmatpush2.msra.mxu0 0.0
  %286 = vmatprep.subr.mxu0 0.0
  %287 = vmatpush2.msra.mxu0 0.0
  %288 = vmatprep.subr.mxu0 0.0
  %289 = vmatpush2.msra.mxu0 0.0
  %290 = vmatprep.subr.mxu0 0.0
  %291 = vmatpush2.msra.mxu0 0.0
  %292 = vmatprep.subr.mxu0 0.0
  %293 = vmatpush2.msra.mxu0 0.0
  %294 = vmatprep.mubr.f32.mxu0 0.0
  %295 = vmatmul.mubr.f32.gmra.mxu0 %v23
  %v296 = vpop.f32.mrf.mxu0
  %v297 = vadd.f32 %v108, %v296
  %v298 = vpop.f32.mrf.mxu0
  %v299 = vadd.f32 %v112, %v298
  %300 = vmatprep.mubr.f32.mxu0 0.0
  %301 = vmatmul.mubr.f32.gmra.mxu0 %v24
  %v302 = vpop.f32.mrf.mxu0
  %v303 = vadd.f32 %v108, %v302
  %v304 = vpop.f32.mrf.mxu0
  %v305 = vadd.f32 %v112, %v304
  %306 = vmatprep.mubr.f32.mxu0 0.0
  %307 = vmatmul.mubr.f32.gmra.mxu0 %v25
  %v308 = vpop.f32.mrf.mxu0
  %v309 = vadd.f32 %v108, %v308
  %v310 = vpop.f32.mrf.mxu0
  %v311 = vadd.f32 %v112, %v310
  %312 = vmatprep.mubr.f32.mxu0 0.0
  %313 = vmatmul.mubr.f32.gmra.mxu0 %v26
  %v314 = vpop.f32.mrf.mxu0
  %v315 = vadd.f32 %v108, %v314
  %v316 = vpop.f32.mrf.mxu0
  %v317 = vadd.f32 %v112, %v316
  %318 = vmatprep.mubr.f32.mxu0 0.0
  %319 = vmatmul.mubr.f32.gmra.mxu0 %v27
  %v320 = vpop.f32.mrf.mxu0
  %v321 = vadd.f32 %v108, %v320
  %v322 = vpop.f32.mrf.mxu0
  %v323 = vadd.f32 %v112, %v322
  %324 = vmatprep.mubr.f32.mxu0 0.0
  %325 = vmatmul.mubr.f32.gmra.mxu0 %v28
  %v326 = vpop.f32.mrf.mxu0
  %v327 = vadd.f32 %v108, %v326
  %v328 = vpop.f32.mrf.mxu0
  %v329 = vadd.f32 %v112, %v328
  %330 = vmatprep.mubr.f32.mxu0 0.0
  %331 = vmatmul.mubr.f32.gmra.mxu0 %v29
  %v332 = vpop.f32.mrf.mxu0
  %v333 = vadd.f32 %v108, %v332
  %v334 = vpop.f32.mrf.mxu0
  %v335 = vadd.f32 %v112, %v334
  %336 = vmatprep.mubr.f32.mxu0 0.0
  %337 = vmatmul.mubr.f32.gmra.mxu0 %v30
  %v338 = vpop.f32.mrf.mxu0
  %v339 = vadd.f32 %v108, %v338
  %v340 = vpop.f32.mrf.mxu0
  %v341 = vadd.f32 %v112, %v340
  %342 = vdwg.mxu0
  %343 = vst [vmem:[#allocation2] sm:$0xff] %v184
  %344 = vst [vmem:[#allocation2 + $0x8] sm:$0xff] %v186
  %345 = vst [vmem:[#allocation2 + $0x10] sm:$0xff] %v297
  %346 = vst [vmem:[#allocation2 + $0x18] sm:$0xff] %v299
  %347 = vst [vmem:[#allocation2 + $0x20] sm:$0xff] %v190
  %348 = vst [vmem:[#allocation2 + $0x28] sm:$0xff] %v192
  %349 = vst [vmem:[#allocation2 + $0x30] sm:$0xff] %v303
  %350 = vst [vmem:[#allocation2 + $0x38] sm:$0xff] %v305
  %351 = vst [vmem:[#allocation2 + $0x40] sm:$0xff] %v196
  %352 = vst [vmem:[#allocation2 + $0x48] sm:$0xff] %v198
  %353 = vst [vmem:[#allocation2 + $0x50] sm:$0xff] %v309
  %354 = vst [vmem:[#allocation2 + $0x58] sm:$0xff] %v311
  %355 = vst [vmem:[#allocation2 + $0x60] sm:$0xff] %v202
  %356 = vst [vmem:[#allocation2 + $0x68] sm:$0xff] %v204
  %357 = vst [vmem:[#allocation2 + $0x70] sm:$0xff] %v315
  %358 = vst [vmem:[#allocation2 + $0x78] sm:$0xff] %v317
  %359 = vst [vmem:[#allocation2 + $0x80] sm:$0xff] %v208
  %360 = vst [vmem:[#allocation2 + $0x88] sm:$0xff] %v210
  %361 = vst [vmem:[#allocation2 + $0x90] sm:$0xff] %v321
  %362 = vst [vmem:[#allocation2 + $0x98] sm:$0xff] %v323
  %363 = vst [vmem:[#allocation2 + $0xa0] sm:$0xff] %v214
  %364 = vst [vmem:[#allocation2 + $0xa8] sm:$0xff] %v216
  %365 = vst [vmem:[#allocation2 + $0xb0] sm:$0xff] %v327
  %366 = vst [vmem:[#allocation2 + $0xb8] sm:$0xff] %v329
  %367 = vst [vmem:[#allocation2 + $0xc0] sm:$0xff] %v220
  %368 = vst [vmem:[#allocation2 + $0xc8] sm:$0xff] %v222
  %369 = vst [vmem:[#allocation2 + $0xd0] sm:$0xff] %v333
  %370 = vst [vmem:[#allocation2 + $0xd8] sm:$0xff] %v335
  %371 = vst [vmem:[#allocation2 + $0xe0] sm:$0xff] %v226
  %372 = vst [vmem:[#allocation2 + $0xe8] sm:$0xff] %v228
  %373 = vst [vmem:[#allocation2 + $0xf0] sm:$0xff] %v339
  %374 = vst [vmem:[#allocation2 + $0xf8] sm:$0xff] %v341
  %v375 = vld [vmem:[%s3] sm:$0xff]
  %v376 = vld [vmem:[%s3 + $0x8] sm:$0xff]
  %v377 = vld [vmem:[%s3 + $0x10] sm:$0xff]
  %v378 = vld [vmem:[%s3 + $0x18] sm:$0xff]
  %v379 = vld [vmem:[%s3 + $0x20] sm:$0xff]
  %v380 = vld [vmem:[%s3 + $0x28] sm:$0xff]
  %v381 = vld [vmem:[%s3 + $0x30] sm:$0xff]
  %v382 = vld [vmem:[%s3 + $0x38] sm:$0xff]
  %v383 = vld [vmem:[%s3 + $0x40] sm:$0xff]
  %v384 = vld [vmem:[%s3 + $0x48] sm:$0xff]
  %v385 = vld [vmem:[%s3 + $0x50] sm:$0xff]
  %v386 = vld [vmem:[%s3 + $0x58] sm:$0xff]
  %v387 = vld [vmem:[%s3 + $0x60] sm:$0xff]
  %v388 = vld [vmem:[%s3 + $0x68] sm:$0xff]
  %v389 = vld [vmem:[%s3 + $0x70] sm:$0xff]
  %v390 = vld [vmem:[%s3 + $0x78] sm:$0xff]
  %v391 = vld [vmem:[%s3 + $0x80] sm:$0xff]
  %v392 = vld [vmem:[%s3 + $0x88] sm:$0xff]
  %v393 = vld [vmem:[%s3 + $0x90] sm:$0xff]
  %v394 = vld [vmem:[%s3 + $0x98] sm:$0xff]
  %v395 = vld [vmem:[%s3 + $0xa0] sm:$0xff]
  %v396 = vld [vmem:[%s3 + $0xa8] sm:$0xff]
  %v397 = vld [vmem:[%s3 + $0xb0] sm:$0xff]
  %v398 = vld [vmem:[%s3 + $0xb8] sm:$0xff]
  %v399 = vld [vmem:[%s3 + $0xc0] sm:$0xff]
  %v400 = vld [vmem:[%s3 + $0xc8] sm:$0xff]
  %v401 = vld [vmem:[%s3 + $0xd0] sm:$0xff]
  %v402 = vld [vmem:[%s3 + $0xd8] sm:$0xff]
  %v403 = vld [vmem:[%s3 + $0xe0] sm:$0xff]
  %v404 = vld [vmem:[%s3 + $0xe8] sm:$0xff]
  %v405 = vld [vmem:[%s3 + $0xf0] sm:$0xff]
  %v406 = vld [vmem:[%s3 + $0xf8] sm:$0xff]
  %v407 = vld [vmem:[%s3 + $0x100] sm:$0xff]
  %v408 = vld [vmem:[%s3 + $0x108] sm:$0xff]
  %v409 = vld [vmem:[%s3 + $0x110] sm:$0xff]
  %v410 = vld [vmem:[%s3 + $0x118] sm:$0xff]
  %v411 = vld [vmem:[%s3 + $0x120] sm:$0xff]
  %v412 = vld [vmem:[%s3 + $0x128] sm:$0xff]
  %v413 = vld [vmem:[%s3 + $0x130] sm:$0xff]
  %v414 = vld [vmem:[%s3 + $0x138] sm:$0xff]
  %v415 = vld [vmem:[%s3 + $0x140] sm:$0xff]
  %v416 = vld [vmem:[%s3 + $0x148] sm:$0xff]
  %v417 = vld [vmem:[%s3 + $0x150] sm:$0xff]
  %v418 = vld [vmem:[%s3 + $0x158] sm:$0xff]
  %v419 = vld [vmem:[%s3 + $0x160] sm:$0xff]
  %v420 = vld [vmem:[%s3 + $0x168] sm:$0xff]
  %v421 = vld [vmem:[%s3 + $0x170] sm:$0xff]
  %v422 = vld [vmem:[%s3 + $0x178] sm:$0xff]
  %v423 = vld [vmem:[%s3 + $0x180] sm:$0xff]
  %v424 = vld [vmem:[%s3 + $0x188] sm:$0xff]
  %v425 = vld [vmem:[%s3 + $0x190] sm:$0xff]
  %v426 = vld [vmem:[%s3 + $0x198] sm:$0xff]
  %v427 = vld [vmem:[%s3 + $0x1a0] sm:$0xff]
  %v428 = vld [vmem:[%s3 + $0x1a8] sm:$0xff]
  %v429 = vld [vmem:[%s3 + $0x1b0] sm:$0xff]
  %v430 = vld [vmem:[%s3 + $0x1b8] sm:$0xff]
  %v431 = vld [vmem:[%s3 + $0x1c0] sm:$0xff]
  %v432 = vld [vmem:[%s3 + $0x1c8] sm:$0xff]
  %v433 = vld [vmem:[%s3 + $0x1d0] sm:$0xff]
  %v434 = vld [vmem:[%s3 + $0x1d8] sm:$0xff]
  %v435 = vld [vmem:[%s3 + $0x1e0] sm:$0xff]
  %v436 = vld [vmem:[%s3 + $0x1e8] sm:$0xff]
  %v437 = vld [vmem:[%s3 + $0x1f0] sm:$0xff]
  %v438 = vld [vmem:[%s3 + $0x1f8] sm:$0xff]
  %v439 = vld [vmem:[#allocation3] sm:$0xff]
  %v440 = vld [vmem:[#allocation4] sm:$0xff]
  %s441 = smul.u32 0, 4
  %s442 = smul.addr %s441, 8
  %s443 = scalar_lea.vmem [#allocation2], %s442
  %v444 = vld [vmem:[%s443] sm:$0xff]
  %v445 = vld [vmem:[%s443 + $0x8] sm:$0xff]
  %v446 = vld [vmem:[%s443 + $0x10] sm:$0xff]
  %v447 = vld [vmem:[%s443 + $0x18] sm:$0xff]
  %448 = vmatprep.subr.mxu0 %v436
  %449 = vmatpush1.msra.mxu0 %v435
  %450 = vmatprep.subr.mxu0 %v432
  %451 = vmatpush1.msra.mxu0 %v431
  %452 = vmatprep.subr.mxu0 %v428
  %453 = vmatpush1.msra.mxu0 %v427
  %454 = vmatprep.subr.mxu0 %v424
  %455 = vmatpush1.msra.mxu0 %v423
  %456 = vmatprep.subr.mxu0 %v420
  %457 = vmatpush1.msra.mxu0 %v419
  %458 = vmatprep.subr.mxu0 %v416
  %459 = vmatpush1.msra.mxu0 %v415
  %460 = vmatprep.subr.mxu0 %v412
  %461 = vmatpush1.msra.mxu0 %v411
  %462 = vmatprep.subr.mxu0 %v408
  %463 = vmatpush1.msra.mxu0 %v407
  %464 = vmatprep.subr.mxu0 %v404
  %465 = vmatpush1.msra.mxu0 %v403
  %466 = vmatprep.subr.mxu0 %v400
  %467 = vmatpush1.msra.mxu0 %v399
  %468 = vmatprep.subr.mxu0 %v396
  %469 = vmatpush1.msra.mxu0 %v395
  %470 = vmatprep.subr.mxu0 %v392
  %471 = vmatpush1.msra.mxu0 %v391
  %472 = vmatprep.subr.mxu0 %v388
  %473 = vmatpush1.msra.mxu0 %v387
  %474 = vmatprep.subr.mxu0 %v384
  %475 = vmatpush1.msra.mxu0 %v383
  %476 = vmatprep.subr.mxu0 %v380
  %477 = vmatpush1.msra.mxu0 %v379
  %478 = vmatprep.subr.mxu0 %v376
  %479 = vmatpush1.msra.mxu0 %v375
  %480 = vmatprep.subr.mxu0 0.0
  %481 = vmatpush2.msra.mxu0 0.0
  %482 = vmatprep.subr.mxu0 0.0
  %483 = vmatpush2.msra.mxu0 0.0
  %484 = vmatprep.subr.mxu0 0.0
  %485 = vmatpush2.msra.mxu0 0.0
  %486 = vmatprep.subr.mxu0 0.0
  %487 = vmatpush2.msra.mxu0 0.0
  %488 = vmatprep.subr.mxu0 0.0
  %489 = vmatpush2.msra.mxu0 0.0
  %490 = vmatprep.subr.mxu0 0.0
  %491 = vmatpush2.msra.mxu0 0.0
  %492 = vmatprep.subr.mxu0 0.0
  %493 = vmatpush2.msra.mxu0 0.0
  %494 = vmatprep.subr.mxu0 0.0
  %495 = vmatpush2.msra.mxu0 0.0
  %496 = vmatprep.subr.mxu0 0.0
  %497 = vmatpush2.msra.mxu0 0.0
  %498 = vmatprep.subr.mxu0 0.0
  %499 = vmatpush2.msra.mxu0 0.0
  %500 = vmatprep.subr.mxu0 0.0
  %501 = vmatpush2.msra.mxu0 0.0
  %502 = vmatprep.subr.mxu0 0.0
  %503 = vmatpush2.msra.mxu0 0.0
  %504 = vmatprep.subr.mxu0 0.0
  %505 = vmatpush2.msra.mxu0 0.0
  %506 = vmatprep.subr.mxu0 0.0
  %507 = vmatpush2.msra.mxu0 0.0
  %508 = vmatprep.subr.mxu0 0.0
  %509 = vmatpush2.msra.mxu0 0.0
  %510 = vmatprep.subr.mxu0 0.0
  %511 = vmatpush2.msra.mxu0 0.0
  %512 = vmatprep.mubr.f32.mxu0 0.0
  %513 = vmatmul.mubr.f32.gmra.mxu0 %v439
  %v514 = vpop.f32.mrf.mxu0
  %v515 = vadd.f32 0.0, %v514
  %v516 = vpop.f32.mrf.mxu0
  %v517 = vadd.f32 0.0, %v516
  %518 = vdwg.mxu0
  %519 = vmatprep.subr.mxu0 %v438
  %520 = vmatpush1.msra.mxu0 %v437
  %521 = vmatprep.subr.mxu0 %v434
  %522 = vmatpush1.msra.mxu0 %v433
  %523 = vmatprep.subr.mxu0 %v430
  %524 = vmatpush1.msra.mxu0 %v429
  %525 = vmatprep.subr.mxu0 %v426
  %526 = vmatpush1.msra.mxu0 %v425
  %527 = vmatprep.subr.mxu0 %v422
  %528 = vmatpush1.msra.mxu0 %v421
  %529 = vmatprep.subr.mxu0 %v418
  %530 = vmatpush1.msra.mxu0 %v417
  %531 = vmatprep.subr.mxu0 %v414
  %532 = vmatpush1.msra.mxu0 %v413
  %533 = vmatprep.subr.mxu0 %v410
  %534 = vmatpush1.msra.mxu0 %v409
  %535 = vmatprep.subr.mxu0 %v406
  %536 = vmatpush1.msra.mxu0 %v405
  %537 = vmatprep.subr.mxu0 %v402
  %538 = vmatpush1.msra.mxu0 %v401
  %539 = vmatprep.subr.mxu0 %v398
  %540 = vmatpush1.msra.mxu0 %v397
  %541 = vmatprep.subr.mxu0 %v394
  %542 = vmatpush1.msra.mxu0 %v393
  %543 = vmatprep.subr.mxu0 %v390
  %544 = vmatpush1.msra.mxu0 %v389
  %545 = vmatprep.subr.mxu0 %v386
  %546 = vmatpush1.msra.mxu0 %v385
  %547 = vmatprep.subr.mxu0 %v382
  %548 = vmatpush1.msra.mxu0 %v381
  %549 = vmatprep.subr.mxu0 %v378
  %550 = vmatpush1.msra.mxu0 %v377
  %551 = vmatprep.subr.mxu0 0.0
  %552 = vmatpush2.msra.mxu0 0.0
  %553 = vmatprep.subr.mxu0 0.0
  %554 = vmatpush2.msra.mxu0 0.0
  %555 = vmatprep.subr.mxu0 0.0
  %556 = vmatpush2.msra.mxu0 0.0
  %557 = vmatprep.subr.mxu0 0.0
  %558 = vmatpush2.msra.mxu0 0.0
  %559 = vmatprep.subr.mxu0 0.0
  %560 = vmatpush2.msra.mxu0 0.0
  %561 = vmatprep.subr.mxu0 0.0
  %562 = vmatpush2.msra.mxu0 0.0
  %563 = vmatprep.subr.mxu0 0.0
  %564 = vmatpush2.msra.mxu0 0.0
  %565 = vmatprep.subr.mxu0 0.0
  %566 = vmatpush2.msra.mxu0 0.0
  %567 = vmatprep.subr.mxu0 0.0
  %568 = vmatpush2.msra.mxu0 0.0
  %569 = vmatprep.subr.mxu0 0.0
  %570 = vmatpush2.msra.mxu0 0.0
  %571 = vmatprep.subr.mxu0 0.0
  %572 = vmatpush2.msra.mxu0 0.0
  %573 = vmatprep.subr.mxu0 0.0
  %574 = vmatpush2.msra.mxu0 0.0
  %575 = vmatprep.subr.mxu0 0.0
  %576 = vmatpush2.msra.mxu0 0.0
  %577 = vmatprep.subr.mxu0 0.0
  %578 = vmatpush2.msra.mxu0 0.0
  %579 = vmatprep.subr.mxu0 0.0
  %580 = vmatpush2.msra.mxu0 0.0
  %581 = vmatprep.subr.mxu0 0.0
  %582 = vmatpush2.msra.mxu0 0.0
  %583 = vmatprep.mubr.f32.mxu0 0.0
  %584 = vmatmul.mubr.f32.gmra.mxu0 %v439
  %v585 = vpop.f32.mrf.mxu0
  %v586 = vadd.f32 0.0, %v585
  %v587 = vpop.f32.mrf.mxu0
  %v588 = vadd.f32 0.0, %v587
  %589 = vdwg.mxu0
  %v590 = vadd.f32 %v444, %v515
  %v591 = vadd.f32 %v445, %v517
  %v592 = vadd.f32 %v446, %v586
  %v593 = vadd.f32 %v447, %v588
  %v594 = vxor.u32 %v590, 2147483648
  %v595 = vxor.u32 %v591, 2147483648
  %v596 = vxor.u32 %v592, 2147483648
  %v597 = vmul.f32 %v594, 1.442695
  %v598 = vpow.pop %v597
  %v599 = vmul.f32 %v595, 1.442695
  %v600 = vpow.pop %v599
  %v601 = vmul.f32 %v596, 1.442695
  %v602 = vpow.pop %v601
  %v603 = vadd.f32 %v598, 1.0
  %v604 = vadd.f32 %v600, 1.0
  %v605 = vadd.f32 %v602, 1.0
  %v606 = vrcp.pop %v603
  %v607 = vmul.f32 1.0, %v606
  %v608 = vrcp.pop %v604
  %v609 = vmul.f32 1.0, %v608
  %v610 = vrcp.pop %v605
  %v611 = vmul.f32 1.0, %v610
  %v612 = vtanh.pop %v593
  %v613 = vmul.f32 %v609, %v440
  %v614 = vmul.f32 %v607, %v612
  %v615 = vadd.f32 %v613, %v614
  %v616 = vtanh.pop %v615
  %v617 = vmul.f32 %v611, %v616
  %s618 = smul.u32 1, 4
  %s619 = smul.addr %s618, 8
  %s620 = scalar_lea.vmem [#allocation2], %s619
  %v621 = vld [vmem:[%s620] sm:$0xff]
  %v622 = vld [vmem:[%s620 + $0x8] sm:$0xff]
  %v623 = vld [vmem:[%s620 + $0x10] sm:$0xff]
  %v624 = vld [vmem:[%s620 + $0x18] sm:$0xff]
  %625 = vmatprep.subr.mxu0 %v436
  %626 = vmatpush1.msra.mxu0 %v435
  %627 = vmatprep.subr.mxu0 %v432
  %628 = vmatpush1.msra.mxu0 %v431
  %629 = vmatprep.subr.mxu0 %v428
  %630 = vmatpush1.msra.mxu0 %v427
  %631 = vmatprep.subr.mxu0 %v424
  %632 = vmatpush1.msra.mxu0 %v423
  %633 = vmatprep.subr.mxu0 %v420
  %634 = vmatpush1.msra.mxu0 %v419
  %635 = vmatprep.subr.mxu0 %v416
  %636 = vmatpush1.msra.mxu0 %v415
  %637 = vmatprep.subr.mxu0 %v412
  %638 = vmatpush1.msra.mxu0 %v411
  %639 = vmatprep.subr.mxu0 %v408
  %640 = vmatpush1.msra.mxu0 %v407
  %641 = vmatprep.subr.mxu0 %v404
  %642 = vmatpush1.msra.mxu0 %v403
  %643 = vmatprep.subr.mxu0 %v400
  %644 = vmatpush1.msra.mxu0 %v399
  %645 = vmatprep.subr.mxu0 %v396
  %646 = vmatpush1.msra.mxu0 %v395
  %647 = vmatprep.subr.mxu0 %v392
  %648 = vmatpush1.msra.mxu0 %v391
  %649 = vmatprep.subr.mxu0 %v388
  %650 = vmatpush1.msra.mxu0 %v387
  %651 = vmatprep.subr.mxu0 %v384
  %652 = vmatpush1.msra.mxu0 %v383
  %653 = vmatprep.subr.mxu0 %v380
  %654 = vmatpush1.msra.mxu0 %v379
  %655 = vmatprep.subr.mxu0 %v376
  %656 = vmatpush1.msra.mxu0 %v375
  %657 = vmatprep.subr.mxu0 0.0
  %658 = vmatpush2.msra.mxu0 0.0
  %659 = vmatprep.subr.mxu0 0.0
  %660 = vmatpush2.msra.mxu0 0.0
  %661 = vmatprep.subr.mxu0 0.0
  %662 = vmatpush2.msra.mxu0 0.0
  %663 = vmatprep.subr.mxu0 0.0
  %664 = vmatpush2.msra.mxu0 0.0
  %665 = vmatprep.subr.mxu0 0.0
  %666 = vmatpush2.msra.mxu0 0.0
  %667 = vmatprep.subr.mxu0 0.0
  %668 = vmatpush2.msra.mxu0 0.0
  %669 = vmatprep.subr.mxu0 0.0
  %670 = vmatpush2.msra.mxu0 0.0
  %671 = vmatprep.subr.mxu0 0.0
  %672 = vmatpush2.msra.mxu0 0.0
  %673 = vmatprep.subr.mxu0 0.0
  %674 = vmatpush2.msra.mxu0 0.0
  %675 = vmatprep.subr.mxu0 0.0
  %676 = vmatpush2.msra.mxu0 0.0
  %677 = vmatprep.subr.mxu0 0.0
  %678 = vmatpush2.msra.mxu0 0.0
  %679 = vmatprep.subr.mxu0 0.0
  %680 = vmatpush2.msra.mxu0 0.0
  %681 = vmatprep.subr.mxu0 0.0
  %682 = vmatpush2.msra.mxu0 0.0
  %683 = vmatprep.subr.mxu0 0.0
  %684 = vmatpush2.msra.mxu0 0.0
  %685 = vmatprep.subr.mxu0 0.0
  %686 = vmatpush2.msra.mxu0 0.0
  %687 = vmatprep.subr.mxu0 0.0
  %688 = vmatpush2.msra.mxu0 0.0
  %689 = vmatprep.mubr.f32.mxu0 0.0
  %690 = vmatmul.mubr.f32.gmra.mxu0 %v617
  %v691 = vpop.f32.mrf.mxu0
  %v692 = vadd.f32 0.0, %v691
  %v693 = vpop.f32.mrf.mxu0
  %v694 = vadd.f32 0.0, %v693
  %695 = vdwg.mxu0
  %696 = vmatprep.subr.mxu0 %v438
  %697 = vmatpush1.msra.mxu0 %v437
  %698 = vmatprep.subr.mxu0 %v434
  %699 = vmatpush1.msra.mxu0 %v433
  %700 = vmatprep.subr.mxu0 %v430
  %701 = vmatpush1.msra.mxu0 %v429
  %702 = vmatprep.subr.mxu0 %v426
  %703 = vmatpush1.msra.mxu0 %v425
  %704 = vmatprep.subr.mxu0 %v422
  %705 = vmatpush1.msra.mxu0 %v421
  %706 = vmatprep.subr.mxu0 %v418
  %707 = vmatpush1.msra.mxu0 %v417
  %708 = vmatprep.subr.mxu0 %v414
  %709 = vmatpush1.msra.mxu0 %v413
  %710 = vmatprep.subr.mxu0 %v410
  %711 = vmatpush1.msra.mxu0 %v409
  %712 = vmatprep.subr.mxu0 %v406
  %713 = vmatpush1.msra.mxu0 %v405
  %714 = vmatprep.subr.mxu0 %v402
  %715 = vmatpush1.msra.mxu0 %v401
  %716 = vmatprep.subr.mxu0 %v398
  %717 = vmatpush1.msra.mxu0 %v397
  %718 = vmatprep.subr.mxu0 %v394
  %719 = vmatpush1.msra.mxu0 %v393
  %720 = vmatprep.subr.mxu0 %v390
  %721 = vmatpush1.msra.mxu0 %v389
  %722 = vmatprep.subr.mxu0 %v386
  %723 = vmatpush1.msra.mxu0 %v385
  %724 = vmatprep.subr.mxu0 %v382
  %725 = vmatpush1.msra.mxu0 %v381
  %726 = vmatprep.subr.mxu0 %v378
  %727 = vmatpush1.msra.mxu0 %v377
  %728 = vmatprep.subr.mxu0 0.0
  %729 = vmatpush2.msra.mxu0 0.0
  %730 = vmatprep.subr.mxu0 0.0
  %731 = vmatpush2.msra.mxu0 0.0
  %732 = vmatprep.subr.mxu0 0.0
  %733 = vmatpush2.msra.mxu0 0.0
  %734 = vmatprep.subr.mxu0 0.0
  %735 = vmatpush2.msra.mxu0 0.0
  %736 = vmatprep.subr.mxu0 0.0
  %737 = vmatpush2.msra.mxu0 0.0
  %738 = vmatprep.subr.mxu0 0.0
  %739 = vmatpush2.msra.mxu0 0.0
  %740 = vmatprep.subr.mxu0 0.0
  %741 = vmatpush2.msra.mxu0 0.0
  %742 = vmatprep.subr.mxu0 0.0
  %743 = vmatpush2.msra.mxu0 0.0
  %744 = vmatprep.subr.mxu0 0.0
  %745 = vmatpush2.msra.mxu0 0.0
  %746 = vmatprep.subr.mxu0 0.0
  %747 = vmatpush2.msra.mxu0 0.0
  %748 = vmatprep.subr.mxu0 0.0
  %749 = vmatpush2.msra.mxu0 0.0
  %750 = vmatprep.subr.mxu0 0.0
  %751 = vmatpush2.msra.mxu0 0.0
  %752 = vmatprep.subr.mxu0 0.0
  %753 = vmatpush2.msra.mxu0 0.0
  %754 = vmatprep.subr.mxu0 0.0
  %755 = vmatpush2.msra.mxu0 0.0
  %756 = vmatprep.subr.mxu0 0.0
  %757 = vmatpush2.msra.mxu0 0.0
  %758 = vmatprep.subr.mxu0 0.0
  %759 = vmatpush2.msra.mxu0 0.0
  %760 = vmatprep.mubr.f32.mxu0 0.0
  %761 = vmatmul.mubr.f32.gmra.mxu0 %v617
  %v762 = vpop.f32.mrf.mxu0
  %v763 = vadd.f32 0.0, %v762
  %v764 = vpop.f32.mrf.mxu0
  %v765 = vadd.f32 0.0, %v764
  %766 = vdwg.mxu0
  %v767 = vadd.f32 %v621, %v692
  %v768 = vadd.f32 %v622, %v694
  %v769 = vadd.f32 %v623, %v763
  %v770 = vadd.f32 %v624, %v765
  %v771 = vxor.u32 %v767, 2147483648
  %v772 = vxor.u32 %v768, 2147483648
  %v773 = vxor.u32 %v769, 2147483648
  %v774 = vmul.f32 %v771, 1.442695
  %v775 = vpow.pop %v774
  %v776 = vmul.f32 %v772, 1.442695
  %v777 = vpow.pop %v776
  %v778 = vmul.f32 %v773, 1.442695
  %v779 = vpow.pop %v778
  %v780 = vadd.f32 %v775, 1.0
  %v781 = vadd.f32 %v777, 1.0
  %v782 = vadd.f32 %v779, 1.0
  %v783 = vrcp.pop %v780
  %v784 = vmul.f32 1.0, %v783
  %v785 = vrcp.pop %v781
  %v786 = vmul.f32 1.0, %v785
  %v787 = vrcp.pop %v782
  %v788 = vmul.f32 1.0, %v787
  %v789 = vtanh.pop %v770
  %v790 = vmul.f32 %v786, %v615
  %v791 = vmul.f32 %v784, %v789
  %v792 = vadd.f32 %v790, %v791
  %v793 = vtanh.pop %v792
  %v794 = vmul.f32 %v788, %v793
  %s795 = smul.u32 2, 4
  %s796 = smul.addr %s795, 8
  %s797 = scalar_lea.vmem [#allocation2], %s796
  %v798 = vld [vmem:[%s797] sm:$0xff]
  %v799 = vld [vmem:[%s797 + $0x8] sm:$0xff]
  %v800 = vld [vmem:[%s797 + $0x10] sm:$0xff]
  %v801 = vld [vmem:[%s797 + $0x18] sm:$0xff]
  %802 = vmatprep.subr.mxu0 %v436
  %803 = vmatpush1.msra.mxu0 %v435
  %804 = vmatprep.subr.mxu0 %v432
  %805 = vmatpush1.msra.mxu0 %v431
  %806 = vmatprep.subr.mxu0 %v428
  %807 = vmatpush1.msra.mxu0 %v427
  %808 = vmatprep.subr.mxu0 %v424
  %809 = vmatpush1.msra.mxu0 %v423
  %810 = vmatprep.subr.mxu0 %v420
  %811 = vmatpush1.msra.mxu0 %v419
  %812 = vmatprep.subr.mxu0 %v416
  %813 = vmatpush1.msra.mxu0 %v415
  %814 = vmatprep.subr.mxu0 %v412
  %815 = vmatpush1.msra.mxu0 %v411
  %816 = vmatprep.subr.mxu0 %v408
  %817 = vmatpush1.msra.mxu0 %v407
  %818 = vmatprep.subr.mxu0 %v404
  %819 = vmatpush1.msra.mxu0 %v403
  %820 = vmatprep.subr.mxu0 %v400
  %821 = vmatpush1.msra.mxu0 %v399
  %822 = vmatprep.subr.mxu0 %v396
  %823 = vmatpush1.msra.mxu0 %v395
  %824 = vmatprep.subr.mxu0 %v392
  %825 = vmatpush1.msra.mxu0 %v391
  %826 = vmatprep.subr.mxu0 %v388
  %827 = vmatpush1.msra.mxu0 %v387
  %828 = vmatprep.subr.mxu0 %v384
  %829 = vmatpush1.msra.mxu0 %v383
  %830 = vmatprep.subr.mxu0 %v380
  %831 = vmatpush1.msra.mxu0 %v379
  %832 = vmatprep.subr.mxu0 %v376
  %833 = vmatpush1.msra.mxu0 %v375
  %834 = vmatprep.subr.mxu0 0.0
  %835 = vmatpush2.msra.mxu0 0.0
  %836 = vmatprep.subr.mxu0 0.0
  %837 = vmatpush2.msra.mxu0 0.0
  %838 = vmatprep.subr.mxu0 0.0
  %839 = vmatpush2.msra.mxu0 0.0
  %840 = vmatprep.subr.mxu0 0.0
  %841 = vmatpush2.msra.mxu0 0.0
  %842 = vmatprep.subr.mxu0 0.0
  %843 = vmatpush2.msra.mxu0 0.0
  %844 = vmatprep.subr.mxu0 0.0
  %845 = vmatpush2.msra.mxu0 0.0
  %846 = vmatprep.subr.mxu0 0.0
  %847 = vmatpush2.msra.mxu0 0.0
  %848 = vmatprep.subr.mxu0 0.0
  %849 = vmatpush2.msra.mxu0 0.0
  %850 = vmatprep.subr.mxu0 0.0
  %851 = vmatpush2.msra.mxu0 0.0
  %852 = vmatprep.subr.mxu0 0.0
  %853 = vmatpush2.msra.mxu0 0.0
  %854 = vmatprep.subr.mxu0 0.0
  %855 = vmatpush2.msra.mxu0 0.0
  %856 = vmatprep.subr.mxu0 0.0
  %857 = vmatpush2.msra.mxu0 0.0
  %858 = vmatprep.subr.mxu0 0.0
  %859 = vmatpush2.msra.mxu0 0.0
  %860 = vmatprep.subr.mxu0 0.0
  %861 = vmatpush2.msra.mxu0 0.0
  %862 = vmatprep.subr.mxu0 0.0
  %863 = vmatpush2.msra.mxu0 0.0
  %864 = vmatprep.subr.mxu0 0.0
  %865 = vmatpush2.msra.mxu0 0.0
  %866 = vmatprep.mubr.f32.mxu0 0.0
  %867 = vmatmul.mubr.f32.gmra.mxu0 %v794
  %v868 = vpop.f32.mrf.mxu0
  %v869 = vadd.f32 0.0, %v868
  %v870 = vpop.f32.mrf.mxu0
  %v871 = vadd.f32 0.0, %v870
  %872 = vdwg.mxu0
  %873 = vmatprep.subr.mxu0 %v438
  %874 = vmatpush1.msra.mxu0 %v437
  %875 = vmatprep.subr.mxu0 %v434
  %876 = vmatpush1.msra.mxu0 %v433
  %877 = vmatprep.subr.mxu0 %v430
  %878 = vmatpush1.msra.mxu0 %v429
  %879 = vmatprep.subr.mxu0 %v426
  %880 = vmatpush1.msra.mxu0 %v425
  %881 = vmatprep.subr.mxu0 %v422
  %882 = vmatpush1.msra.mxu0 %v421
  %883 = vmatprep.subr.mxu0 %v418
  %884 = vmatpush1.msra.mxu0 %v417
  %885 = vmatprep.subr.mxu0 %v414
  %886 = vmatpush1.msra.mxu0 %v413
  %887 = vmatprep.subr.mxu0 %v410
  %888 = vmatpush1.msra.mxu0 %v409
  %889 = vmatprep.subr.mxu0 %v406
  %890 = vmatpush1.msra.mxu0 %v405
  %891 = vmatprep.subr.mxu0 %v402
  %892 = vmatpush1.msra.mxu0 %v401
  %893 = vmatprep.subr.mxu0 %v398
  %894 = vmatpush1.msra.mxu0 %v397
  %895 = vmatprep.subr.mxu0 %v394
  %896 = vmatpush1.msra.mxu0 %v393
  %897 = vmatprep.subr.mxu0 %v390
  %898 = vmatpush1.msra.mxu0 %v389
  %899 = vmatprep.subr.mxu0 %v386
  %900 = vmatpush1.msra.mxu0 %v385
  %901 = vmatprep.subr.mxu0 %v382
  %902 = vmatpush1.msra.mxu0 %v381
  %903 = vmatprep.subr.mxu0 %v378
  %904 = vmatpush1.msra.mxu0 %v377
  %905 = vmatprep.subr.mxu0 0.0
  %906 = vmatpush2.msra.mxu0 0.0
  %907 = vmatprep.subr.mxu0 0.0
  %908 = vmatpush2.msra.mxu0 0.0
  %909 = vmatprep.subr.mxu0 0.0
  %910 = vmatpush2.msra.mxu0 0.0
  %911 = vmatprep.subr.mxu0 0.0
  %912 = vmatpush2.msra.mxu0 0.0
  %913 = vmatprep.subr.mxu0 0.0
  %914 = vmatpush2.msra.mxu0 0.0
  %915 = vmatprep.subr.mxu0 0.0
  %916 = vmatpush2.msra.mxu0 0.0
  %917 = vmatprep.subr.mxu0 0.0
  %918 = vmatpush2.msra.mxu0 0.0
  %919 = vmatprep.subr.mxu0 0.0
  %920 = vmatpush2.msra.mxu0 0.0
  %921 = vmatprep.subr.mxu0 0.0
  %922 = vmatpush2.msra.mxu0 0.0
  %923 = vmatprep.subr.mxu0 0.0
  %924 = vmatpush2.msra.mxu0 0.0
  %925 = vmatprep.subr.mxu0 0.0
  %926 = vmatpush2.msra.mxu0 0.0
  %927 = vmatprep.subr.mxu0 0.0
  %928 = vmatpush2.msra.mxu0 0.0
  %929 = vmatprep.subr.mxu0 0.0
  %930 = vmatpush2.msra.mxu0 0.0
  %931 = vmatprep.subr.mxu0 0.0
  %932 = vmatpush2.msra.mxu0 0.0
  %933 = vmatprep.subr.mxu0 0.0
  %934 = vmatpush2.msra.mxu0 0.0
  %935 = vmatprep.subr.mxu0 0.0
  %936 = vmatpush2.msra.mxu0 0.0
  %937 = vmatprep.mubr.f32.mxu0 0.0
  %938 = vmatmul.mubr.f32.gmra.mxu0 %v794
  %v939 = vpop.f32.mrf.mxu0
  %v940 = vadd.f32 0.0, %v939
  %v941 = vpop.f32.mrf.mxu0
  %v942 = vadd.f32 0.0, %v941
  %943 = vdwg.mxu0
  %v944 = vadd.f32 %v798, %v869
  %v945 = vadd.f32 %v799, %v871
  %v946 = vadd.f32 %v800, %v940
  %v947 = vadd.f32 %v801, %v942
  %v948 = vxor.u32 %v944, 2147483648
  %v949 = vxor.u32 %v945, 2147483648
  %v950 = vxor.u32 %v946, 2147483648
  %v951 = vmul.f32 %v948, 1.442695
  %v952 = vpow.pop %v951
  %v953 = vmul.f32 %v949, 1.442695
  %v954 = vpow.pop %v953
  %v955 = vmul.f32 %v950, 1.442695
  %v956 = vpow.pop %v955
  %v957 = vadd.f32 %v952, 1.0
  %v958 = vadd.f32 %v954, 1.0
  %v959 = vadd.f32 %v956, 1.0
  %v960 = vrcp.pop %v957
  %v961 = vmul.f32 1.0, %v960
  %v962 = vrcp.pop %v958
  %v963 = vmul.f32 1.0, %v962
  %v964 = vrcp.pop %v959
  %v965 = vmul.f32 1.0, %v964
  %v966 = vtanh.pop %v947
  %v967 = vmul.f32 %v963, %v792
  %v968 = vmul.f32 %v961, %v966
  %v969 = vadd.f32 %v967, %v968
  %v970 = vtanh.pop %v969
  %v971 = vmul.f32 %v965, %v970
  %s972 = smul.u32 3, 4
  %s973 = smul.addr %s972, 8
  %s974 = scalar_lea.vmem [#allocation2], %s973
  %v975 = vld [vmem:[%s974] sm:$0xff]
  %v976 = vld [vmem:[%s974 + $0x8] sm:$0xff]
  %v977 = vld [vmem:[%s974 + $0x10] sm:$0xff]
  %v978 = vld [vmem:[%s974 + $0x18] sm:$0xff]
  %979 = vmatprep.subr.mxu0 %v436
  %980 = vmatpush1.msra.mxu0 %v435
  %981 = vmatprep.subr.mxu0 %v432
  %982 = vmatpush1.msra.mxu0 %v431
  %983 = vmatprep.subr.mxu0 %v428
  %984 = vmatpush1.msra.mxu0 %v427
  %985 = vmatprep.subr.mxu0 %v424
  %986 = vmatpush1.msra.mxu0 %v423
  %987 = vmatprep.subr.mxu0 %v420
  %988 = vmatpush1.msra.mxu0 %v419
  %989 = vmatprep.subr.mxu0 %v416
  %990 = vmatpush1.msra.mxu0 %v415
  %991 = vmatprep.subr.mxu0 %v412
  %992 = vmatpush1.msra.mxu0 %v411
  %993 = vmatprep.subr.mxu0 %v408
  %994 = vmatpush1.msra.mxu0 %v407
  %995 = vmatprep.subr.mxu0 %v404
  %996 = vmatpush1.msra.mxu0 %v403
  %997 = vmatprep.subr.mxu0 %v400
  %998 = vmatpush1.msra.mxu0 %v399
  %999 = vmatprep.subr.mxu0 %v396
  %1000 = vmatpush1.msra.mxu0 %v395
  %1001 = vmatprep.subr.mxu0 %v392
  %1002 = vmatpush1.msra.mxu0 %v391
  %1003 = vmatprep.subr.mxu0 %v388
  %1004 = vmatpush1.msra.mxu0 %v387
  %1005 = vmatprep.subr.mxu0 %v384
  %1006 = vmatpush1.msra.mxu0 %v383
  %1007 = vmatprep.subr.mxu0 %v380
  %1008 = vmatpush1.msra.mxu0 %v379
  %1009 = vmatprep.subr.mxu0 %v376
  %1010 = vmatpush1.msra.mxu0 %v375
  %1011 = vmatprep.subr.mxu0 0.0
  %1012 = vmatpush2.msra.mxu0 0.0
  %1013 = vmatprep.subr.mxu0 0.0
  %1014 = vmatpush2.msra.mxu0 0.0
  %1015 = vmatprep.subr.mxu0 0.0
  %1016 = vmatpush2.msra.mxu0 0.0
  %1017 = vmatprep.subr.mxu0 0.0
  %1018 = vmatpush2.msra.mxu0 0.0
  %1019 = vmatprep.subr.mxu0 0.0
  %1020 = vmatpush2.msra.mxu0 0.0
  %1021 = vmatprep.subr.mxu0 0.0
  %1022 = vmatpush2.msra.mxu0 0.0
  %1023 = vmatprep.subr.mxu0 0.0
  %1024 = vmatpush2.msra.mxu0 0.0
  %1025 = vmatprep.subr.mxu0 0.0
  %1026 = vmatpush2.msra.mxu0 0.0
  %1027 = vmatprep.subr.mxu0 0.0
  %1028 = vmatpush2.msra.mxu0 0.0
  %1029 = vmatprep.subr.mxu0 0.0
  %1030 = vmatpush2.msra.mxu0 0.0
  %1031 = vmatprep.subr.mxu0 0.0
  %1032 = vmatpush2.msra.mxu0 0.0
  %1033 = vmatprep.subr.mxu0 0.0
  %1034 = vmatpush2.msra.mxu0 0.0
  %1035 = vmatprep.subr.mxu0 0.0
  %1036 = vmatpush2.msra.mxu0 0.0
  %1037 = vmatprep.subr.mxu0 0.0
  %1038 = vmatpush2.msra.mxu0 0.0
  %1039 = vmatprep.subr.mxu0 0.0
  %1040 = vmatpush2.msra.mxu0 0.0
  %1041 = vmatprep.subr.mxu0 0.0
  %1042 = vmatpush2.msra.mxu0 0.0
  %1043 = vmatprep.mubr.f32.mxu0 0.0
  %1044 = vmatmul.mubr.f32.gmra.mxu0 %v971
  %v1045 = vpop.f32.mrf.mxu0
  %v1046 = vadd.f32 0.0, %v1045
  %v1047 = vpop.f32.mrf.mxu0
  %v1048 = vadd.f32 0.0, %v1047
  %1049 = vdwg.mxu0
  %1050 = vmatprep.subr.mxu0 %v438
  %1051 = vmatpush1.msra.mxu0 %v437
  %1052 = vmatprep.subr.mxu0 %v434
  %1053 = vmatpush1.msra.mxu0 %v433
  %1054 = vmatprep.subr.mxu0 %v430
  %1055 = vmatpush1.msra.mxu0 %v429
  %1056 = vmatprep.subr.mxu0 %v426
  %1057 = vmatpush1.msra.mxu0 %v425
  %1058 = vmatprep.subr.mxu0 %v422
  %1059 = vmatpush1.msra.mxu0 %v421
  %1060 = vmatprep.subr.mxu0 %v418
  %1061 = vmatpush1.msra.mxu0 %v417
  %1062 = vmatprep.subr.mxu0 %v414
  %1063 = vmatpush1.msra.mxu0 %v413
  %1064 = vmatprep.subr.mxu0 %v410
  %1065 = vmatpush1.msra.mxu0 %v409
  %1066 = vmatprep.subr.mxu0 %v406
  %1067 = vmatpush1.msra.mxu0 %v405
  %1068 = vmatprep.subr.mxu0 %v402
  %1069 = vmatpush1.msra.mxu0 %v401
  %1070 = vmatprep.subr.mxu0 %v398
  %1071 = vmatpush1.msra.mxu0 %v397
  %1072 = vmatprep.subr.mxu0 %v394
  %1073 = vmatpush1.msra.mxu0 %v393
  %1074 = vmatprep.subr.mxu0 %v390
  %1075 = vmatpush1.msra.mxu0 %v389
  %1076 = vmatprep.subr.mxu0 %v386
  %1077 = vmatpush1.msra.mxu0 %v385
  %1078 = vmatprep.subr.mxu0 %v382
  %1079 = vmatpush1.msra.mxu0 %v381
  %1080 = vmatprep.subr.mxu0 %v378
  %1081 = vmatpush1.msra.mxu0 %v377
  %1082 = vmatprep.subr.mxu0 0.0
  %1083 = vmatpush2.msra.mxu0 0.0
  %1084 = vmatprep.subr.mxu0 0.0
  %1085 = vmatpush2.msra.mxu0 0.0
  %1086 = vmatprep.subr.mxu0 0.0
  %1087 = vmatpush2.msra.mxu0 0.0
  %1088 = vmatprep.subr.mxu0 0.0
  %1089 = vmatpush2.msra.mxu0 0.0
  %1090 = vmatprep.subr.mxu0 0.0
  %1091 = vmatpush2.msra.mxu0 0.0
  %1092 = vmatprep.subr.mxu0 0.0
  %1093 = vmatpush2.msra.mxu0 0.0
  %1094 = vmatprep.subr.mxu0 0.0
  %1095 = vmatpush2.msra.mxu0 0.0
  %1096 = vmatprep.subr.mxu0 0.0
  %1097 = vmatpush2.msra.mxu0 0.0
  %1098 = vmatprep.subr.mxu0 0.0
  %1099 = vmatpush2.msra.mxu0 0.0
  %1100 = vmatprep.subr.mxu0 0.0
  %1101 = vmatpush2.msra.mxu0 0.0
  %1102 = vmatprep.subr.mxu0 0.0
  %1103 = vmatpush2.msra.mxu0 0.0
  %1104 = vmatprep.subr.mxu0 0.0
  %1105 = vmatpush2.msra.mxu0 0.0
  %1106 = vmatprep.subr.mxu0 0.0
  %1107 = vmatpush2.msra.mxu0 0.0
  %1108 = vmatprep.subr.mxu0 0.0
  %1109 = vmatpush2.msra.mxu0 0.0
  %1110 = vmatprep.subr.mxu0 0.0
  %1111 = vmatpush2.msra.mxu0 0.0
  %1112 = vmatprep.subr.mxu0 0.0
  %1113 = vmatpush2.msra.mxu0 0.0
  %1114 = vmatprep.mubr.f32.mxu0 0.0
  %1115 = vmatmul.mubr.f32.gmra.mxu0 %v971
  %v1116 = vpop.f32.mrf.mxu0
  %v1117 = vadd.f32 0.0, %v1116
  %v1118 = vpop.f32.mrf.mxu0
  %v1119 = vadd.f32 0.0, %v1118
  %1120 = vdwg.mxu0
  %v1121 = vadd.f32 %v975, %v1046
  %v1122 = vadd.f32 %v976, %v1048
  %v1123 = vadd.f32 %v977, %v1117
  %v1124 = vadd.f32 %v978, %v1119
  %v1125 = vxor.u32 %v1121, 2147483648
  %v1126 = vxor.u32 %v1122, 2147483648
  %v1127 = vxor.u32 %v1123, 2147483648
  %v1128 = vmul.f32 %v1125, 1.442695
  %v1129 = vpow.pop %v1128
  %v1130 = vmul.f32 %v1126, 1.442695
  %v1131 = vpow.pop %v1130
  %v1132 = vmul.f32 %v1127, 1.442695
  %v1133 = vpow.pop %v1132
  %v1134 = vadd.f32 %v1129, 1.0
  %v1135 = vadd.f32 %v1131, 1.0
  %v1136 = vadd.f32 %v1133, 1.0
  %v1137 = vrcp.pop %v1134
  %v1138 = vmul.f32 1.0, %v1137
  %v1139 = vrcp.pop %v1135
  %v1140 = vmul.f32 1.0, %v1139
  %v1141 = vrcp.pop %v1136
  %v1142 = vmul.f32 1.0, %v1141
  %v1143 = vtanh.pop %v1124
  %v1144 = vmul.f32 %v1140, %v969
  %v1145 = vmul.f32 %v1138, %v1143
  %v1146 = vadd.f32 %v1144, %v1145
  %v1147 = vtanh.pop %v1146
  %v1148 = vmul.f32 %v1142, %v1147
  %s1149 = smul.u32 4, 4
  %s1150 = smul.addr %s1149, 8
  %s1151 = scalar_lea.vmem [#allocation2], %s1150
  %v1152 = vld [vmem:[%s1151] sm:$0xff]
  %v1153 = vld [vmem:[%s1151 + $0x8] sm:$0xff]
  %v1154 = vld [vmem:[%s1151 + $0x10] sm:$0xff]
  %v1155 = vld [vmem:[%s1151 + $0x18] sm:$0xff]
  %1156 = vmatprep.subr.mxu0 %v436
  %1157 = vmatpush1.msra.mxu0 %v435
  %1158 = vmatprep.subr.mxu0 %v432
  %1159 = vmatpush1.msra.mxu0 %v431
  %1160 = vmatprep.subr.mxu0 %v428
  %1161 = vmatpush1.msra.mxu0 %v427
  %1162 = vmatprep.subr.mxu0 %v424
  %1163 = vmatpush1.msra.mxu0 %v423
  %1164 = vmatprep.subr.mxu0 %v420
  %1165 = vmatpush1.msra.mxu0 %v419
  %1166 = vmatprep.subr.mxu0 %v416
  %1167 = vmatpush1.msra.mxu0 %v415
  %1168 = vmatprep.subr.mxu0 %v412
  %1169 = vmatpush1.msra.mxu0 %v411
  %1170 = vmatprep.subr.mxu0 %v408
  %1171 = vmatpush1.msra.mxu0 %v407
  %1172 = vmatprep.subr.mxu0 %v404
  %1173 = vmatpush1.msra.mxu0 %v403
  %1174 = vmatprep.subr.mxu0 %v400
  %1175 = vmatpush1.msra.mxu0 %v399
  %1176 = vmatprep.subr.mxu0 %v396
  %1177 = vmatpush1.msra.mxu0 %v395
  %1178 = vmatprep.subr.mxu0 %v392
  %1179 = vmatpush1.msra.mxu0 %v391
  %1180 = vmatprep.subr.mxu0 %v388
  %1181 = vmatpush1.msra.mxu0 %v387
  %1182 = vmatprep.subr.mxu0 %v384
  %1183 = vmatpush1.msra.mxu0 %v383
  %1184 = vmatprep.subr.mxu0 %v380
  %1185 = vmatpush1.msra.mxu0 %v379
  %1186 = vmatprep.subr.mxu0 %v376
  %1187 = vmatpush1.msra.mxu0 %v375
  %1188 = vmatprep.subr.mxu0 0.0
  %1189 = vmatpush2.msra.mxu0 0.0
  %1190 = vmatprep.subr.mxu0 0.0
  %1191 = vmatpush2.msra.mxu0 0.0
  %1192 = vmatprep.subr.mxu0 0.0
  %1193 = vmatpush2.msra.mxu0 0.0
  %1194 = vmatprep.subr.mxu0 0.0
  %1195 = vmatpush2.msra.mxu0 0.0
  %1196 = vmatprep.subr.mxu0 0.0
  %1197 = vmatpush2.msra.mxu0 0.0
  %1198 = vmatprep.subr.mxu0 0.0
  %1199 = vmatpush2.msra.mxu0 0.0
  %1200 = vmatprep.subr.mxu0 0.0
  %1201 = vmatpush2.msra.mxu0 0.0
  %1202 = vmatprep.subr.mxu0 0.0
  %1203 = vmatpush2.msra.mxu0 0.0
  %1204 = vmatprep.subr.mxu0 0.0
  %1205 = vmatpush2.msra.mxu0 0.0
  %1206 = vmatprep.subr.mxu0 0.0
  %1207 = vmatpush2.msra.mxu0 0.0
  %1208 = vmatprep.subr.mxu0 0.0
  %1209 = vmatpush2.msra.mxu0 0.0
  %1210 = vmatprep.subr.mxu0 0.0
  %1211 = vmatpush2.msra.mxu0 0.0
  %1212 = vmatprep.subr.mxu0 0.0
  %1213 = vmatpush2.msra.mxu0 0.0
  %1214 = vmatprep.subr.mxu0 0.0
  %1215 = vmatpush2.msra.mxu0 0.0
  %1216 = vmatprep.subr.mxu0 0.0
  %1217 = vmatpush2.msra.mxu0 0.0
  %1218 = vmatprep.subr.mxu0 0.0
  %1219 = vmatpush2.msra.mxu0 0.0
  %1220 = vmatprep.mubr.f32.mxu0 0.0
  %1221 = vmatmul.mubr.f32.gmra.mxu0 %v1148
  %v1222 = vpop.f32.mrf.mxu0
  %v1223 = vadd.f32 0.0, %v1222
  %v1224 = vpop.f32.mrf.mxu0
  %v1225 = vadd.f32 0.0, %v1224
  %1226 = vdwg.mxu0
  %1227 = vmatprep.subr.mxu0 %v438
  %1228 = vmatpush1.msra.mxu0 %v437
  %1229 = vmatprep.subr.mxu0 %v434
  %1230 = vmatpush1.msra.mxu0 %v433
  %1231 = vmatprep.subr.mxu0 %v430
  %1232 = vmatpush1.msra.mxu0 %v429
  %1233 = vmatprep.subr.mxu0 %v426
  %1234 = vmatpush1.msra.mxu0 %v425
  %1235 = vmatprep.subr.mxu0 %v422
  %1236 = vmatpush1.msra.mxu0 %v421
  %1237 = vmatprep.subr.mxu0 %v418
  %1238 = vmatpush1.msra.mxu0 %v417
  %1239 = vmatprep.subr.mxu0 %v414
  %1240 = vmatpush1.msra.mxu0 %v413
  %1241 = vmatprep.subr.mxu0 %v410
  %1242 = vmatpush1.msra.mxu0 %v409
  %1243 = vmatprep.subr.mxu0 %v406
  %1244 = vmatpush1.msra.mxu0 %v405
  %1245 = vmatprep.subr.mxu0 %v402
  %1246 = vmatpush1.msra.mxu0 %v401
  %1247 = vmatprep.subr.mxu0 %v398
  %1248 = vmatpush1.msra.mxu0 %v397
  %1249 = vmatprep.subr.mxu0 %v394
  %1250 = vmatpush1.msra.mxu0 %v393
  %1251 = vmatprep.subr.mxu0 %v390
  %1252 = vmatpush1.msra.mxu0 %v389
  %1253 = vmatprep.subr.mxu0 %v386
  %1254 = vmatpush1.msra.mxu0 %v385
  %1255 = vmatprep.subr.mxu0 %v382
  %1256 = vmatpush1.msra.mxu0 %v381
  %1257 = vmatprep.subr.mxu0 %v378
  %1258 = vmatpush1.msra.mxu0 %v377
  %1259 = vmatprep.subr.mxu0 0.0
  %1260 = vmatpush2.msra.mxu0 0.0
  %1261 = vmatprep.subr.mxu0 0.0
  %1262 = vmatpush2.msra.mxu0 0.0
  %1263 = vmatprep.subr.mxu0 0.0
  %1264 = vmatpush2.msra.mxu0 0.0
  %1265 = vmatprep.subr.mxu0 0.0
  %1266 = vmatpush2.msra.mxu0 0.0
  %1267 = vmatprep.subr.mxu0 0.0
  %1268 = vmatpush2.msra.mxu0 0.0
  %1269 = vmatprep.subr.mxu0 0.0
  %1270 = vmatpush2.msra.mxu0 0.0
  %1271 = vmatprep.subr.mxu0 0.0
  %1272 = vmatpush2.msra.mxu0 0.0
  %1273 = vmatprep.subr.mxu0 0.0
  %1274 = vmatpush2.msra.mxu0 0.0
  %1275 = vmatprep.subr.mxu0 0.0
  %1276 = vmatpush2.msra.mxu0 0.0
  %1277 = vmatprep.subr.mxu0 0.0
  %1278 = vmatpush2.msra.mxu0 0.0
  %1279 = vmatprep.subr.mxu0 0.0
  %1280 = vmatpush2.msra.mxu0 0.0
  %1281 = vmatprep.subr.mxu0 0.0
  %1282 = vmatpush2.msra.mxu0 0.0
  %1283 = vmatprep.subr.mxu0 0.0
  %1284 = vmatpush2.msra.mxu0 0.0
  %1285 = vmatprep.subr.mxu0 0.0
  %1286 = vmatpush2.msra.mxu0 0.0
  %1287 = vmatprep.subr.mxu0 0.0
  %1288 = vmatpush2.msra.mxu0 0.0
  %1289 = vmatprep.subr.mxu0 0.0
  %1290 = vmatpush2.msra.mxu0 0.0
  %1291 = vmatprep.mubr.f32.mxu0 0.0
  %1292 = vmatmul.mubr.f32.gmra.mxu0 %v1148
  %v1293 = vpop.f32.mrf.mxu0
  %v1294 = vadd.f32 0.0, %v1293
  %v1295 = vpop.f32.mrf.mxu0
  %v1296 = vadd.f32 0.0, %v1295
  %1297 = vdwg.mxu0
  %v1298 = vadd.f32 %v1152, %v1223
  %v1299 = vadd.f32 %v1153, %v1225
  %v1300 = vadd.f32 %v1154, %v1294
  %v1301 = vadd.f32 %v1155, %v1296
  %v1302 = vxor.u32 %v1298, 2147483648
  %v1303 = vxor.u32 %v1299, 2147483648
  %v1304 = vxor.u32 %v1300, 2147483648
  %v1305 = vmul.f32 %v1302, 1.442695
  %v1306 = vpow.pop %v1305
  %v1307 = vmul.f32 %v1303, 1.442695
  %v1308 = vpow.pop %v1307
  %v1309 = vmul.f32 %v1304, 1.442695
  %v1310 = vpow.pop %v1309
  %v1311 = vadd.f32 %v1306, 1.0
  %v1312 = vadd.f32 %v1308, 1.0
  %v1313 = vadd.f32 %v1310, 1.0
  %v1314 = vrcp.pop %v1311
  %v1315 = vmul.f32 1.0, %v1314
  %v1316 = vrcp.pop %v1312
  %v1317 = vmul.f32 1.0, %v1316
  %v1318 = vrcp.pop %v1313
  %v1319 = vmul.f32 1.0, %v1318
  %v1320 = vtanh.pop %v1301
  %v1321 = vmul.f32 %v1317, %v1146
  %v1322 = vmul.f32 %v1315, %v1320
  %v1323 = vadd.f32 %v1321, %v1322
  %v1324 = vtanh.pop %v1323
  %v1325 = vmul.f32 %v1319, %v1324
  %s1326 = smul.u32 5, 4
  %s1327 = smul.addr %s1326, 8
  %s1328 = scalar_lea.vmem [#allocation2], %s1327
  %v1329 = vld [vmem:[%s1328] sm:$0xff]
  %v1330 = vld [vmem:[%s1328 + $0x8] sm:$0xff]
  %v1331 = vld [vmem:[%s1328 + $0x10] sm:$0xff]
  %v1332 = vld [vmem:[%s1328 + $0x18] sm:$0xff]
  %1333 = vmatprep.subr.mxu0 %v436
  %1334 = vmatpush1.msra.mxu0 %v435
  %1335 = vmatprep.subr.mxu0 %v432
  %1336 = vmatpush1.msra.mxu0 %v431
  %1337 = vmatprep.subr.mxu0 %v428
  %1338 = vmatpush1.msra.mxu0 %v427
  %1339 = vmatprep.subr.mxu0 %v424
  %1340 = vmatpush1.msra.mxu0 %v423
  %1341 = vmatprep.subr.mxu0 %v420
  %1342 = vmatpush1.msra.mxu0 %v419
  %1343 = vmatprep.subr.mxu0 %v416
  %1344 = vmatpush1.msra.mxu0 %v415
  %1345 = vmatprep.subr.mxu0 %v412
  %1346 = vmatpush1.msra.mxu0 %v411
  %1347 = vmatprep.subr.mxu0 %v408
  %1348 = vmatpush1.msra.mxu0 %v407
  %1349 = vmatprep.subr.mxu0 %v404
  %1350 = vmatpush1.msra.mxu0 %v403
  %1351 = vmatprep.subr.mxu0 %v400
  %1352 = vmatpush1.msra.mxu0 %v399
  %1353 = vmatprep.subr.mxu0 %v396
  %1354 = vmatpush1.msra.mxu0 %v395
  %1355 = vmatprep.subr.mxu0 %v392
  %1356 = vmatpush1.msra.mxu0 %v391
  %1357 = vmatprep.subr.mxu0 %v388
  %1358 = vmatpush1.msra.mxu0 %v387
  %1359 = vmatprep.subr.mxu0 %v384
  %1360 = vmatpush1.msra.mxu0 %v383
  %1361 = vmatprep.subr.mxu0 %v380
  %1362 = vmatpush1.msra.mxu0 %v379
  %1363 = vmatprep.subr.mxu0 %v376
  %1364 = vmatpush1.msra.mxu0 %v375
  %1365 = vmatprep.subr.mxu0 0.0
  %1366 = vmatpush2.msra.mxu0 0.0
  %1367 = vmatprep.subr.mxu0 0.0
  %1368 = vmatpush2.msra.mxu0 0.0
  %1369 = vmatprep.subr.mxu0 0.0
  %1370 = vmatpush2.msra.mxu0 0.0
  %1371 = vmatprep.subr.mxu0 0.0
  %1372 = vmatpush2.msra.mxu0 0.0
  %1373 = vmatprep.subr.mxu0 0.0
  %1374 = vmatpush2.msra.mxu0 0.0
  %1375 = vmatprep.subr.mxu0 0.0
  %1376 = vmatpush2.msra.mxu0 0.0
  %1377 = vmatprep.subr.mxu0 0.0
  %1378 = vmatpush2.msra.mxu0 0.0
  %1379 = vmatprep.subr.mxu0 0.0
  %1380 = vmatpush2.msra.mxu0 0.0
  %1381 = vmatprep.subr.mxu0 0.0
  %1382 = vmatpush2.msra.mxu0 0.0
  %1383 = vmatprep.subr.mxu0 0.0
  %1384 = vmatpush2.msra.mxu0 0.0
  %1385 = vmatprep.subr.mxu0 0.0
  %1386 = vmatpush2.msra.mxu0 0.0
  %1387 = vmatprep.subr.mxu0 0.0
  %1388 = vmatpush2.msra.mxu0 0.0
  %1389 = vmatprep.subr.mxu0 0.0
  %1390 = vmatpush2.msra.mxu0 0.0
  %1391 = vmatprep.subr.mxu0 0.0
  %1392 = vmatpush2.msra.mxu0 0.0
  %1393 = vmatprep.subr.mxu0 0.0
  %1394 = vmatpush2.msra.mxu0 0.0
  %1395 = vmatprep.subr.mxu0 0.0
  %1396 = vmatpush2.msra.mxu0 0.0
  %1397 = vmatprep.mubr.f32.mxu0 0.0
  %1398 = vmatmul.mubr.f32.gmra.mxu0 %v1325
  %v1399 = vpop.f32.mrf.mxu0
  %v1400 = vadd.f32 0.0, %v1399
  %v1401 = vpop.f32.mrf.mxu0
  %v1402 = vadd.f32 0.0, %v1401
  %1403 = vdwg.mxu0
  %1404 = vmatprep.subr.mxu0 %v438
  %1405 = vmatpush1.msra.mxu0 %v437
  %1406 = vmatprep.subr.mxu0 %v434
  %1407 = vmatpush1.msra.mxu0 %v433
  %1408 = vmatprep.subr.mxu0 %v430
  %1409 = vmatpush1.msra.mxu0 %v429
  %1410 = vmatprep.subr.mxu0 %v426
  %1411 = vmatpush1.msra.mxu0 %v425
  %1412 = vmatprep.subr.mxu0 %v422
  %1413 = vmatpush1.msra.mxu0 %v421
  %1414 = vmatprep.subr.mxu0 %v418
  %1415 = vmatpush1.msra.mxu0 %v417
  %1416 = vmatprep.subr.mxu0 %v414
  %1417 = vmatpush1.msra.mxu0 %v413
  %1418 = vmatprep.subr.mxu0 %v410
  %1419 = vmatpush1.msra.mxu0 %v409
  %1420 = vmatprep.subr.mxu0 %v406
  %1421 = vmatpush1.msra.mxu0 %v405
  %1422 = vmatprep.subr.mxu0 %v402
  %1423 = vmatpush1.msra.mxu0 %v401
  %1424 = vmatprep.subr.mxu0 %v398
  %1425 = vmatpush1.msra.mxu0 %v397
  %1426 = vmatprep.subr.mxu0 %v394
  %1427 = vmatpush1.msra.mxu0 %v393
  %1428 = vmatprep.subr.mxu0 %v390
  %1429 = vmatpush1.msra.mxu0 %v389
  %1430 = vmatprep.subr.mxu0 %v386
  %1431 = vmatpush1.msra.mxu0 %v385
  %1432 = vmatprep.subr.mxu0 %v382
  %1433 = vmatpush1.msra.mxu0 %v381
  %1434 = vmatprep.subr.mxu0 %v378
  %1435 = vmatpush1.msra.mxu0 %v377
  %1436 = vmatprep.subr.mxu0 0.0
  %1437 = vmatpush2.msra.mxu0 0.0
  %1438 = vmatprep.subr.mxu0 0.0
  %1439 = vmatpush2.msra.mxu0 0.0
  %1440 = vmatprep.subr.mxu0 0.0
  %1441 = vmatpush2.msra.mxu0 0.0
  %1442 = vmatprep.subr.mxu0 0.0
  %1443 = vmatpush2.msra.mxu0 0.0
  %1444 = vmatprep.subr.mxu0 0.0
  %1445 = vmatpush2.msra.mxu0 0.0
  %1446 = vmatprep.subr.mxu0 0.0
  %1447 = vmatpush2.msra.mxu0 0.0
  %1448 = vmatprep.subr.mxu0 0.0
  %1449 = vmatpush2.msra.mxu0 0.0
  %1450 = vmatprep.subr.mxu0 0.0
  %1451 = vmatpush2.msra.mxu0 0.0
  %1452 = vmatprep.subr.mxu0 0.0
  %1453 = vmatpush2.msra.mxu0 0.0
  %1454 = vmatprep.subr.mxu0 0.0
  %1455 = vmatpush2.msra.mxu0 0.0
  %1456 = vmatprep.subr.mxu0 0.0
  %1457 = vmatpush2.msra.mxu0 0.0
  %1458 = vmatprep.subr.mxu0 0.0
  %1459 = vmatpush2.msra.mxu0 0.0
  %1460 = vmatprep.subr.mxu0 0.0
  %1461 = vmatpush2.msra.mxu0 0.0
  %1462 = vmatprep.subr.mxu0 0.0
  %1463 = vmatpush2.msra.mxu0 0.0
  %1464 = vmatprep.subr.mxu0 0.0
  %1465 = vmatpush2.msra.mxu0 0.0
  %1466 = vmatprep.subr.mxu0 0.0
  %1467 = vmatpush2.msra.mxu0 0.0
  %1468 = vmatprep.mubr.f32.mxu0 0.0
  %1469 = vmatmul.mubr.f32.gmra.mxu0 %v1325
  %v1470 = vpop.f32.mrf.mxu0
  %v1471 = vadd.f32 0.0, %v1470
  %v1472 = vpop.f32.mrf.mxu0
  %v1473 = vadd.f32 0.0, %v1472
  %1474 = vdwg.mxu0
  %v1475 = vadd.f32 %v1329, %v1400
  %v1476 = vadd.f32 %v1330, %v1402
  %v1477 = vadd.f32 %v1331, %v1471
  %v1478 = vadd.f32 %v1332, %v1473
  %v1479 = vxor.u32 %v1475, 2147483648
  %v1480 = vxor.u32 %v1476, 2147483648
  %v1481 = vxor.u32 %v1477, 2147483648
  %v1482 = vmul.f32 %v1479, 1.442695
  %v1483 = vpow.pop %v1482
  %v1484 = vmul.f32 %v1480, 1.442695
  %v1485 = vpow.pop %v1484
  %v1486 = vmul.f32 %v1481, 1.442695
  %v1487 = vpow.pop %v1486
  %v1488 = vadd.f32 %v1483, 1.0
  %v1489 = vadd.f32 %v1485, 1.0
  %v1490 = vadd.f32 %v1487, 1.0
  %v1491 = vrcp.pop %v1488
  %v1492 = vmul.f32 1.0, %v1491
  %v1493 = vrcp.pop %v1489
  %v1494 = vmul.f32 1.0, %v1493
  %v1495 = vrcp.pop %v1490
  %v1496 = vmul.f32 1.0, %v1495
  %v1497 = vtanh.pop %v1478
  %v1498 = vmul.f32 %v1494, %v1323
  %v1499 = vmul.f32 %v1492, %v1497
  %v1500 = vadd.f32 %v1498, %v1499
  %v1501 = vtanh.pop %v1500
  %v1502 = vmul.f32 %v1496, %v1501
  %s1503 = smul.u32 6, 4
  %s1504 = smul.addr %s1503, 8
  %s1505 = scalar_lea.vmem [#allocation2], %s1504
  %v1506 = vld [vmem:[%s1505] sm:$0xff]
  %v1507 = vld [vmem:[%s1505 + $0x8] sm:$0xff]
  %v1508 = vld [vmem:[%s1505 + $0x10] sm:$0xff]
  %v1509 = vld [vmem:[%s1505 + $0x18] sm:$0xff]
  %1510 = vmatprep.subr.mxu0 %v436
  %1511 = vmatpush1.msra.mxu0 %v435
  %1512 = vmatprep.subr.mxu0 %v432
  %1513 = vmatpush1.msra.mxu0 %v431
  %1514 = vmatprep.subr.mxu0 %v428
  %1515 = vmatpush1.msra.mxu0 %v427
  %1516 = vmatprep.subr.mxu0 %v424
  %1517 = vmatpush1.msra.mxu0 %v423
  %1518 = vmatprep.subr.mxu0 %v420
  %1519 = vmatpush1.msra.mxu0 %v419
  %1520 = vmatprep.subr.mxu0 %v416
  %1521 = vmatpush1.msra.mxu0 %v415
  %1522 = vmatprep.subr.mxu0 %v412
  %1523 = vmatpush1.msra.mxu0 %v411
  %1524 = vmatprep.subr.mxu0 %v408
  %1525 = vmatpush1.msra.mxu0 %v407
  %1526 = vmatprep.subr.mxu0 %v404
  %1527 = vmatpush1.msra.mxu0 %v403
  %1528 = vmatprep.subr.mxu0 %v400
  %1529 = vmatpush1.msra.mxu0 %v399
  %1530 = vmatprep.subr.mxu0 %v396
  %1531 = vmatpush1.msra.mxu0 %v395
  %1532 = vmatprep.subr.mxu0 %v392
  %1533 = vmatpush1.msra.mxu0 %v391
  %1534 = vmatprep.subr.mxu0 %v388
  %1535 = vmatpush1.msra.mxu0 %v387
  %1536 = vmatprep.subr.mxu0 %v384
  %1537 = vmatpush1.msra.mxu0 %v383
  %1538 = vmatprep.subr.mxu0 %v380
  %1539 = vmatpush1.msra.mxu0 %v379
  %1540 = vmatprep.subr.mxu0 %v376
  %1541 = vmatpush1.msra.mxu0 %v375
  %1542 = vmatprep.subr.mxu0 0.0
  %1543 = vmatpush2.msra.mxu0 0.0
  %1544 = vmatprep.subr.mxu0 0.0
  %1545 = vmatpush2.msra.mxu0 0.0
  %1546 = vmatprep.subr.mxu0 0.0
  %1547 = vmatpush2.msra.mxu0 0.0
  %1548 = vmatprep.subr.mxu0 0.0
  %1549 = vmatpush2.msra.mxu0 0.0
  %1550 = vmatprep.subr.mxu0 0.0
  %1551 = vmatpush2.msra.mxu0 0.0
  %1552 = vmatprep.subr.mxu0 0.0
  %1553 = vmatpush2.msra.mxu0 0.0
  %1554 = vmatprep.subr.mxu0 0.0
  %1555 = vmatpush2.msra.mxu0 0.0
  %1556 = vmatprep.subr.mxu0 0.0
  %1557 = vmatpush2.msra.mxu0 0.0
  %1558 = vmatprep.subr.mxu0 0.0
  %1559 = vmatpush2.msra.mxu0 0.0
  %1560 = vmatprep.subr.mxu0 0.0
  %1561 = vmatpush2.msra.mxu0 0.0
  %1562 = vmatprep.subr.mxu0 0.0
  %1563 = vmatpush2.msra.mxu0 0.0
  %1564 = vmatprep.subr.mxu0 0.0
  %1565 = vmatpush2.msra.mxu0 0.0
  %1566 = vmatprep.subr.mxu0 0.0
  %1567 = vmatpush2.msra.mxu0 0.0
  %1568 = vmatprep.subr.mxu0 0.0
  %1569 = vmatpush2.msra.mxu0 0.0
  %1570 = vmatprep.subr.mxu0 0.0
  %1571 = vmatpush2.msra.mxu0 0.0
  %1572 = vmatprep.subr.mxu0 0.0
  %1573 = vmatpush2.msra.mxu0 0.0
  %1574 = vmatprep.mubr.f32.mxu0 0.0
  %1575 = vmatmul.mubr.f32.gmra.mxu0 %v1502
  %v1576 = vpop.f32.mrf.mxu0
  %v1577 = vadd.f32 0.0, %v1576
  %v1578 = vpop.f32.mrf.mxu0
  %v1579 = vadd.f32 0.0, %v1578
  %1580 = vdwg.mxu0
  %1581 = vmatprep.subr.mxu0 %v438
  %1582 = vmatpush1.msra.mxu0 %v437
  %1583 = vmatprep.subr.mxu0 %v434
  %1584 = vmatpush1.msra.mxu0 %v433
  %1585 = vmatprep.subr.mxu0 %v430
  %1586 = vmatpush1.msra.mxu0 %v429
  %1587 = vmatprep.subr.mxu0 %v426
  %1588 = vmatpush1.msra.mxu0 %v425
  %1589 = vmatprep.subr.mxu0 %v422
  %1590 = vmatpush1.msra.mxu0 %v421
  %1591 = vmatprep.subr.mxu0 %v418
  %1592 = vmatpush1.msra.mxu0 %v417
  %1593 = vmatprep.subr.mxu0 %v414
  %1594 = vmatpush1.msra.mxu0 %v413
  %1595 = vmatprep.subr.mxu0 %v410
  %1596 = vmatpush1.msra.mxu0 %v409
  %1597 = vmatprep.subr.mxu0 %v406
  %1598 = vmatpush1.msra.mxu0 %v405
  %1599 = vmatprep.subr.mxu0 %v402
  %1600 = vmatpush1.msra.mxu0 %v401
  %1601 = vmatprep.subr.mxu0 %v398
  %1602 = vmatpush1.msra.mxu0 %v397
  %1603 = vmatprep.subr.mxu0 %v394
  %1604 = vmatpush1.msra.mxu0 %v393
  %1605 = vmatprep.subr.mxu0 %v390
  %1606 = vmatpush1.msra.mxu0 %v389
  %1607 = vmatprep.subr.mxu0 %v386
  %1608 = vmatpush1.msra.mxu0 %v385
  %1609 = vmatprep.subr.mxu0 %v382
  %1610 = vmatpush1.msra.mxu0 %v381
  %1611 = vmatprep.subr.mxu0 %v378
  %1612 = vmatpush1.msra.mxu0 %v377
  %1613 = vmatprep.subr.mxu0 0.0
  %1614 = vmatpush2.msra.mxu0 0.0
  %1615 = vmatprep.subr.mxu0 0.0
  %1616 = vmatpush2.msra.mxu0 0.0
  %1617 = vmatprep.subr.mxu0 0.0
  %1618 = vmatpush2.msra.mxu0 0.0
  %1619 = vmatprep.subr.mxu0 0.0
  %1620 = vmatpush2.msra.mxu0 0.0
  %1621 = vmatprep.subr.mxu0 0.0
  %1622 = vmatpush2.msra.mxu0 0.0
  %1623 = vmatprep.subr.mxu0 0.0
  %1624 = vmatpush2.msra.mxu0 0.0
  %1625 = vmatprep.subr.mxu0 0.0
  %1626 = vmatpush2.msra.mxu0 0.0
  %1627 = vmatprep.subr.mxu0 0.0
  %1628 = vmatpush2.msra.mxu0 0.0
  %1629 = vmatprep.subr.mxu0 0.0
  %1630 = vmatpush2.msra.mxu0 0.0
  %1631 = vmatprep.subr.mxu0 0.0
  %1632 = vmatpush2.msra.mxu0 0.0
  %1633 = vmatprep.subr.mxu0 0.0
  %1634 = vmatpush2.msra.mxu0 0.0
  %1635 = vmatprep.subr.mxu0 0.0
  %1636 = vmatpush2.msra.mxu0 0.0
  %1637 = vmatprep.subr.mxu0 0.0
  %1638 = vmatpush2.msra.mxu0 0.0
  %1639 = vmatprep.subr.mxu0 0.0
  %1640 = vmatpush2.msra.mxu0 0.0
  %1641 = vmatprep.subr.mxu0 0.0
  %1642 = vmatpush2.msra.mxu0 0.0
  %1643 = vmatprep.subr.mxu0 0.0
  %1644 = vmatpush2.msra.mxu0 0.0
  %1645 = vmatprep.mubr.f32.mxu0 0.0
  %1646 = vmatmul.mubr.f32.gmra.mxu0 %v1502
  %v1647 = vpop.f32.mrf.mxu0
  %v1648 = vadd.f32 0.0, %v1647
  %v1649 = vpop.f32.mrf.mxu0
  %v1650 = vadd.f32 0.0, %v1649
  %1651 = vdwg.mxu0
  %v1652 = vadd.f32 %v1506, %v1577
  %v1653 = vadd.f32 %v1507, %v1579
  %v1654 = vadd.f32 %v1508, %v1648
  %v1655 = vadd.f32 %v1509, %v1650
  %v1656 = vxor.u32 %v1652, 2147483648
  %v1657 = vxor.u32 %v1653, 2147483648
  %v1658 = vxor.u32 %v1654, 2147483648
  %v1659 = vmul.f32 %v1656, 1.442695
  %v1660 = vpow.pop %v1659
  %v1661 = vmul.f32 %v1657, 1.442695
  %v1662 = vpow.pop %v1661
  %v1663 = vmul.f32 %v1658, 1.442695
  %v1664 = vpow.pop %v1663
  %v1665 = vadd.f32 %v1660, 1.0
  %v1666 = vadd.f32 %v1662, 1.0
  %v1667 = vadd.f32 %v1664, 1.0
  %v1668 = vrcp.pop %v1665
  %v1669 = vmul.f32 1.0, %v1668
  %v1670 = vrcp.pop %v1666
  %v1671 = vmul.f32 1.0, %v1670
  %v1672 = vrcp.pop %v1667
  %v1673 = vmul.f32 1.0, %v1672
  %v1674 = vtanh.pop %v1655
  %v1675 = vmul.f32 %v1671, %v1500
  %v1676 = vmul.f32 %v1669, %v1674
  %v1677 = vadd.f32 %v1675, %v1676
  %v1678 = vtanh.pop %v1677
  %v1679 = vmul.f32 %v1673, %v1678
  %s1680 = smul.u32 7, 4
  %s1681 = smul.addr %s1680, 8
  %s1682 = scalar_lea.vmem [#allocation2], %s1681
  %v1683 = vld [vmem:[%s1682] sm:$0xff]
  %v1684 = vld [vmem:[%s1682 + $0x8] sm:$0xff]
  %v1685 = vld [vmem:[%s1682 + $0x10] sm:$0xff]
  %v1686 = vld [vmem:[%s1682 + $0x18] sm:$0xff]
  %1687 = vmatprep.subr.mxu0 %v436
  %1688 = vmatpush1.msra.mxu0 %v435
  %1689 = vmatprep.subr.mxu0 %v432
  %1690 = vmatpush1.msra.mxu0 %v431
  %1691 = vmatprep.subr.mxu0 %v428
  %1692 = vmatpush1.msra.mxu0 %v427
  %1693 = vmatprep.subr.mxu0 %v424
  %1694 = vmatpush1.msra.mxu0 %v423
  %1695 = vmatprep.subr.mxu0 %v420
  %1696 = vmatpush1.msra.mxu0 %v419
  %1697 = vmatprep.subr.mxu0 %v416
  %1698 = vmatpush1.msra.mxu0 %v415
  %1699 = vmatprep.subr.mxu0 %v412
  %1700 = vmatpush1.msra.mxu0 %v411
  %1701 = vmatprep.subr.mxu0 %v408
  %1702 = vmatpush1.msra.mxu0 %v407
  %1703 = vmatprep.subr.mxu0 %v404
  %1704 = vmatpush1.msra.mxu0 %v403
  %1705 = vmatprep.subr.mxu0 %v400
  %1706 = vmatpush1.msra.mxu0 %v399
  %1707 = vmatprep.subr.mxu0 %v396
  %1708 = vmatpush1.msra.mxu0 %v395
  %1709 = vmatprep.subr.mxu0 %v392
  %1710 = vmatpush1.msra.mxu0 %v391
  %1711 = vmatprep.subr.mxu0 %v388
  %1712 = vmatpush1.msra.mxu0 %v387
  %1713 = vmatprep.subr.mxu0 %v384
  %1714 = vmatpush1.msra.mxu0 %v383
  %1715 = vmatprep.subr.mxu0 %v380
  %1716 = vmatpush1.msra.mxu0 %v379
  %1717 = vmatprep.subr.mxu0 %v376
  %1718 = vmatpush1.msra.mxu0 %v375
  %1719 = vmatprep.subr.mxu0 0.0
  %1720 = vmatpush2.msra.mxu0 0.0
  %1721 = vmatprep.subr.mxu0 0.0
  %1722 = vmatpush2.msra.mxu0 0.0
  %1723 = vmatprep.subr.mxu0 0.0
  %1724 = vmatpush2.msra.mxu0 0.0
  %1725 = vmatprep.subr.mxu0 0.0
  %1726 = vmatpush2.msra.mxu0 0.0
  %1727 = vmatprep.subr.mxu0 0.0
  %1728 = vmatpush2.msra.mxu0 0.0
  %1729 = vmatprep.subr.mxu0 0.0
  %1730 = vmatpush2.msra.mxu0 0.0
  %1731 = vmatprep.subr.mxu0 0.0
  %1732 = vmatpush2.msra.mxu0 0.0
  %1733 = vmatprep.subr.mxu0 0.0
  %1734 = vmatpush2.msra.mxu0 0.0
  %1735 = vmatprep.subr.mxu0 0.0
  %1736 = vmatpush2.msra.mxu0 0.0
  %1737 = vmatprep.subr.mxu0 0.0
  %1738 = vmatpush2.msra.mxu0 0.0
  %1739 = vmatprep.subr.mxu0 0.0
  %1740 = vmatpush2.msra.mxu0 0.0
  %1741 = vmatprep.subr.mxu0 0.0
  %1742 = vmatpush2.msra.mxu0 0.0
  %1743 = vmatprep.subr.mxu0 0.0
  %1744 = vmatpush2.msra.mxu0 0.0
  %1745 = vmatprep.subr.mxu0 0.0
  %1746 = vmatpush2.msra.mxu0 0.0
  %1747 = vmatprep.subr.mxu0 0.0
  %1748 = vmatpush2.msra.mxu0 0.0
  %1749 = vmatprep.subr.mxu0 0.0
  %1750 = vmatpush2.msra.mxu0 0.0
  %1751 = vmatprep.mubr.f32.mxu0 0.0
  %1752 = vmatmul.mubr.f32.gmra.mxu0 %v1679
  %v1753 = vpop.f32.mrf.mxu0
  %v1754 = vadd.f32 0.0, %v1753
  %v1755 = vpop.f32.mrf.mxu0
  %v1756 = vadd.f32 0.0, %v1755
  %1757 = vdwg.mxu0
  %1758 = vmatprep.subr.mxu0 %v438
  %1759 = vmatpush1.msra.mxu0 %v437
  %1760 = vmatprep.subr.mxu0 %v434
  %1761 = vmatpush1.msra.mxu0 %v433
  %1762 = vmatprep.subr.mxu0 %v430
  %1763 = vmatpush1.msra.mxu0 %v429
  %1764 = vmatprep.subr.mxu0 %v426
  %1765 = vmatpush1.msra.mxu0 %v425
  %1766 = vmatprep.subr.mxu0 %v422
  %1767 = vmatpush1.msra.mxu0 %v421
  %1768 = vmatprep.subr.mxu0 %v418
  %1769 = vmatpush1.msra.mxu0 %v417
  %1770 = vmatprep.subr.mxu0 %v414
  %1771 = vmatpush1.msra.mxu0 %v413
  %1772 = vmatprep.subr.mxu0 %v410
  %1773 = vmatpush1.msra.mxu0 %v409
  %1774 = vmatprep.subr.mxu0 %v406
  %1775 = vmatpush1.msra.mxu0 %v405
  %1776 = vmatprep.subr.mxu0 %v402
  %1777 = vmatpush1.msra.mxu0 %v401
  %1778 = vmatprep.subr.mxu0 %v398
  %1779 = vmatpush1.msra.mxu0 %v397
  %1780 = vmatprep.subr.mxu0 %v394
  %1781 = vmatpush1.msra.mxu0 %v393
  %1782 = vmatprep.subr.mxu0 %v390
  %1783 = vmatpush1.msra.mxu0 %v389
  %1784 = vmatprep.subr.mxu0 %v386
  %1785 = vmatpush1.msra.mxu0 %v385
  %1786 = vmatprep.subr.mxu0 %v382
  %1787 = vmatpush1.msra.mxu0 %v381
  %1788 = vmatprep.subr.mxu0 %v378
  %1789 = vmatpush1.msra.mxu0 %v377
  %1790 = vmatprep.subr.mxu0 0.0
  %1791 = vmatpush2.msra.mxu0 0.0
  %1792 = vmatprep.subr.mxu0 0.0
  %1793 = vmatpush2.msra.mxu0 0.0
  %1794 = vmatprep.subr.mxu0 0.0
  %1795 = vmatpush2.msra.mxu0 0.0
  %1796 = vmatprep.subr.mxu0 0.0
  %1797 = vmatpush2.msra.mxu0 0.0
  %1798 = vmatprep.subr.mxu0 0.0
  %1799 = vmatpush2.msra.mxu0 0.0
  %1800 = vmatprep.subr.mxu0 0.0
  %1801 = vmatpush2.msra.mxu0 0.0
  %1802 = vmatprep.subr.mxu0 0.0
  %1803 = vmatpush2.msra.mxu0 0.0
  %1804 = vmatprep.subr.mxu0 0.0
  %1805 = vmatpush2.msra.mxu0 0.0
  %1806 = vmatprep.subr.mxu0 0.0
  %1807 = vmatpush2.msra.mxu0 0.0
  %1808 = vmatprep.subr.mxu0 0.0
  %1809 = vmatpush2.msra.mxu0 0.0
  %1810 = vmatprep.subr.mxu0 0.0
  %1811 = vmatpush2.msra.mxu0 0.0
  %1812 = vmatprep.subr.mxu0 0.0
  %1813 = vmatpush2.msra.mxu0 0.0
  %1814 = vmatprep.subr.mxu0 0.0
  %1815 = vmatpush2.msra.mxu0 0.0
  %1816 = vmatprep.subr.mxu0 0.0
  %1817 = vmatpush2.msra.mxu0 0.0
  %1818 = vmatprep.subr.mxu0 0.0
  %1819 = vmatpush2.msra.mxu0 0.0
  %1820 = vmatprep.subr.mxu0 0.0
  %1821 = vmatpush2.msra.mxu0 0.0
  %1822 = vmatprep.mubr.f32.mxu0 0.0
  %1823 = vmatmul.mubr.f32.gmra.mxu0 %v1679
  %v1824 = vpop.f32.mrf.mxu0
  %v1825 = vadd.f32 0.0, %v1824
  %v1826 = vpop.f32.mrf.mxu0
  %v1827 = vadd.f32 0.0, %v1826
  %1828 = vdwg.mxu0
  %v1829 = vadd.f32 %v1683, %v1754
  %v1830 = vadd.f32 %v1684, %v1756
  %v1831 = vadd.f32 %v1685, %v1825
  %v1832 = vadd.f32 %v1686, %v1827
  %v1833 = vxor.u32 %v1829, 2147483648
  %v1834 = vxor.u32 %v1830, 2147483648
  %v1835 = vxor.u32 %v1831, 2147483648
  %v1836 = vmul.f32 %v1833, 1.442695
  %v1837 = vpow.pop %v1836
  %v1838 = vmul.f32 %v1834, 1.442695
  %v1839 = vpow.pop %v1838
  %v1840 = vmul.f32 %v1835, 1.442695
  %v1841 = vpow.pop %v1840
  %v1842 = vadd.f32 %v1837, 1.0
  %v1843 = vadd.f32 %v1839, 1.0
  %v1844 = vadd.f32 %v1841, 1.0
  %v1845 = vrcp.pop %v1842
  %v1846 = vmul.f32 1.0, %v1845
  %v1847 = vrcp.pop %v1843
  %v1848 = vmul.f32 1.0, %v1847
  %v1849 = vrcp.pop %v1844
  %v1850 = vmul.f32 1.0, %v1849
  %v1851 = vtanh.pop %v1832
  %v1852 = vmul.f32 %v1848, %v1677
  %v1853 = vmul.f32 %v1846, %v1851
  %v1854 = vadd.f32 %v1852, %v1853
  %v1855 = vtanh.pop %v1854
  %v1856 = vmul.f32 %v1850, %v1855
  %1857 = vst [vmem:[#allocation3] sm:$0xff] %v1856
  %1858 = vst [vmem:[#allocation4] sm:$0xff] %v1854
  // Predicated region
  $region22: #{olstm_forward.4} parent=0 // pred_check
    %p1859 = pneg %p17
  $region23: #{olstm_forward.4} parent=0 // pred_check_branch
    %1861 = sbr.rel (%p1859) target = $region25
  $region24: #{olstm_forward.4} parent=0 // pred_region
    %1862 = vst [vmem:[%s4] sm:$0xff] %v1856
  $region25: #{olstm_forward.4} parent=0 // pred_fallthru
    _
  // Predicated region
  $region26: #{olstm_forward.4} parent=0 // pred_check
    _
  $region27: #{olstm_forward.4} parent=0 // pred_check_branch
    %1864 = sbr.rel (0) target = $region29
  $region28: #{olstm_forward.4} parent=0 // pred_region
    _
  $region29: #{olstm_forward.4} parent=0 // pred_fallthru
    _
  // Predicated region
  $region30: #{olstm_forward.4} parent=0 // pred_check
    _
  $region31: #{olstm_forward.4} parent=0 // pred_check_branch
    %1866 = sbr.rel (0) target = $region33
  $region32: #{olstm_forward.4} parent=0 // pred_region
    _
  $region33: #{olstm_forward.4} parent=0 // pred_fallthru
    _

// kernel: olstm_forward.3
$region0: #{olstm_forward.3}
  #allocation0 [shape = 'u32[]', space=smem, size = 0x4, offset = 0x4, fixed_abs, tag = 'smem constant byte address 0x4 - core index']
  #allocation1 [shape = 'u32[144,128]{1,0:T(1,128)}', space=vmem, size = 0x12000, scoped, tag = 'internal scratch']
  #allocation2 [shape = 'f32[64,512]{1,0:T(8,128)}', space=vmem, size = 0x20000, scoped, tag = 'scratch operand']
  #allocation3 [shape = 'f32[8,128]{1,0:T(8,128)}', space=vmem, size = 0x1000, scoped, tag = 'scratch operand']
  #allocation4 [shape = 'f32[8,128]{1,0:T(8,128)}', space=vmem, size = 0x1000, scoped, tag = 'scratch operand']
  %s0 = inlined_call_operand.vmem [shape: f32[8,8,128], index: 0, kind: input, shape index: {}]
  %s1 = inlined_call_operand.vmem [shape: f32[128,512], index: 1, kind: input, shape index: {}]
  %s2 = inlined_call_operand.vmem [shape: f32[1,512], index: 2, kind: input, shape index: {}]
  %s3 = inlined_call_operand.vmem [shape: f32[128,512], index: 3, kind: input, shape index: {}]
  %s4 = inlined_call_operand.vmem [shape: f32[8,8,128], index: 4, kind: output, shape index: {0}]
  %s5 = inlined_call_operand.vmem [shape: f32[8,128], index: 5, kind: output, shape index: {1}]
  %6 = xla_tuple %s4, %s5
  %s7 = sld [smem:[#allocation0]]
  $region42: #{olstm_forward.3} parent=0
    _
  %s9 = ssub.s32 1, %s7
  %s10 = scalar_select 0, %s9, %s7
  // Predicated region
  $region2: #{olstm_forward.3} parent=0 // pred_check
    _
  $region3: #{olstm_forward.3} parent=0 // pred_check_branch
    %12 = sbr.rel (0) target = $region5
  $region4: #{olstm_forward.3} parent=0 // pred_region
    _
  $region5: #{olstm_forward.3} parent=0 // pred_fallthru
    _
  // Predicated region
  $region6: #{olstm_forward.3} parent=0 // pred_check
    _
  $region7: #{olstm_forward.3} parent=0 // pred_check_branch
    %14 = sbr.rel (0) target = $region9
  $region8: #{olstm_forward.3} parent=0 // pred_region
    _
  $region9: #{olstm_forward.3} parent=0 // pred_fallthru
    _
  // Predicated region
  $region10: #{olstm_forward.3} parent=0 // pred_check
    _
  $region11: #{olstm_forward.3} parent=0 // pred_check_branch
    %16 = sbr.rel (0) target = $region13
  $region12: #{olstm_forward.3} parent=0 // pred_region
    _
  $region13: #{olstm_forward.3} parent=0 // pred_fallthru
    _
  // Predicated region
  $region14: #{olstm_forward.3} parent=0 // pred_check
    _
  $region15: #{olstm_forward.3} parent=0 // pred_check_branch
    %18 = sbr.rel (0) target = $region17
  $region16: #{olstm_forward.3} parent=0 // pred_region
    _
  $region17: #{olstm_forward.3} parent=0 // pred_fallthru
    _
  %p19 = scmp.eq.s32.totalorder 0, 0
  // Predicated region
  $region18: #{olstm_forward.3} parent=0 // pred_check
    %p20 = pneg %p19
  $region19: #{olstm_forward.3} parent=0 // pred_check_branch
    %22 = sbr.rel (%p20) target = $region21
  $region20: #{olstm_forward.3} parent=0 // pred_region
    %23 = vst [vmem:[#allocation3] sm:$0xff] 0.0
    %24 = vst [vmem:[#allocation4] sm:$0xff] 0.0
  $region21: #{olstm_forward.3} parent=0 // pred_fallthru
    _
  %v25 = vld [vmem:[%s0] sm:$0xff]
  %v26 = vld [vmem:[%s0 + $0x8] sm:$0xff]
  %v27 = vld [vmem:[%s0 + $0x10] sm:$0xff]
  %v28 = vld [vmem:[%s0 + $0x18] sm:$0xff]
  %v29 = vld [vmem:[%s0 + $0x20] sm:$0xff]
  %v30 = vld [vmem:[%s0 + $0x28] sm:$0xff]
  %v31 = vld [vmem:[%s0 + $0x30] sm:$0xff]
  %v32 = vld [vmem:[%s0 + $0x38] sm:$0xff]
  %v33 = vld [vmem:[%s1] sm:$0xff]
  %v34 = vld [vmem:[%s1 + $0x8] sm:$0xff]
  %v35 = vld [vmem:[%s1 + $0x10] sm:$0xff]
  %v36 = vld [vmem:[%s1 + $0x18] sm:$0xff]
  %v37 = vld [vmem:[%s1 + $0x20] sm:$0xff]
  %v38 = vld [vmem:[%s1 + $0x28] sm:$0xff]
  %v39 = vld [vmem:[%s1 + $0x30] sm:$0xff]
  %v40 = vld [vmem:[%s1 + $0x38] sm:$0xff]
  %v41 = vld [vmem:[%s1 + $0x40] sm:$0xff]
  %v42 = vld [vmem:[%s1 + $0x48] sm:$0xff]
  %v43 = vld [vmem:[%s1 + $0x50] sm:$0xff]
  %v44 = vld [vmem:[%s1 + $0x58] sm:$0xff]
  %v45 = vld [vmem:[%s1 + $0x60] sm:$0xff]
  %v46 = vld [vmem:[%s1 + $0x68] sm:$0xff]
  %v47 = vld [vmem:[%s1 + $0x70] sm:$0xff]
  %v48 = vld [vmem:[%s1 + $0x78] sm:$0xff]
  %v49 = vld [vmem:[%s1 + $0x80] sm:$0xff]
  %v50 = vld [vmem:[%s1 + $0x88] sm:$0xff]
  %v51 = vld [vmem:[%s1 + $0x90] sm:$0xff]
  %v52 = vld [vmem:[%s1 + $0x98] sm:$0xff]
  %v53 = vld [vmem:[%s1 + $0xa0] sm:$0xff]
  %v54 = vld [vmem:[%s1 + $0xa8] sm:$0xff]
  %v55 = vld [vmem:[%s1 + $0xb0] sm:$0xff]
  %v56 = vld [vmem:[%s1 + $0xb8] sm:$0xff]
  %v57 = vld [vmem:[%s1 + $0xc0] sm:$0xff]
  %v58 = vld [vmem:[%s1 + $0xc8] sm:$0xff]
  %v59 = vld [vmem:[%s1 + $0xd0] sm:$0xff]
  %v60 = vld [vmem:[%s1 + $0xd8] sm:$0xff]
  %v61 = vld [vmem:[%s1 + $0xe0] sm:$0xff]
  %v62 = vld [vmem:[%s1 + $0xe8] sm:$0xff]
  %v63 = vld [vmem:[%s1 + $0xf0] sm:$0xff]
  %v64 = vld [vmem:[%s1 + $0xf8] sm:$0xff]
  %v65 = vld [vmem:[%s1 + $0x100] sm:$0xff]
  %v66 = vld [vmem:[%s1 + $0x108] sm:$0xff]
  %v67 = vld [vmem:[%s1 + $0x110] sm:$0xff]
  %v68 = vld [vmem:[%s1 + $0x118] sm:$0xff]
  %v69 = vld [vmem:[%s1 + $0x120] sm:$0xff]
  %v70 = vld [vmem:[%s1 + $0x128] sm:$0xff]
  %v71 = vld [vmem:[%s1 + $0x130] sm:$0xff]
  %v72 = vld [vmem:[%s1 + $0x138] sm:$0xff]
  %v73 = vld [vmem:[%s1 + $0x140] sm:$0xff]
  %v74 = vld [vmem:[%s1 + $0x148] sm:$0xff]
  %v75 = vld [vmem:[%s1 + $0x150] sm:$0xff]
  %v76 = vld [vmem:[%s1 + $0x158] sm:$0xff]
  %v77 = vld [vmem:[%s1 + $0x160] sm:$0xff]
  %v78 = vld [vmem:[%s1 + $0x168] sm:$0xff]
  %v79 = vld [vmem:[%s1 + $0x170] sm:$0xff]
  %v80 = vld [vmem:[%s1 + $0x178] sm:$0xff]
  %v81 = vld [vmem:[%s1 + $0x180] sm:$0xff]
  %v82 = vld [vmem:[%s1 + $0x188] sm:$0xff]
  %v83 = vld [vmem:[%s1 + $0x190] sm:$0xff]
  %v84 = vld [vmem:[%s1 + $0x198] sm:$0xff]
  %v85 = vld [vmem:[%s1 + $0x1a0] sm:$0xff]
  %v86 = vld [vmem:[%s1 + $0x1a8] sm:$0xff]
  %v87 = vld [vmem:[%s1 + $0x1b0] sm:$0xff]
  %v88 = vld [vmem:[%s1 + $0x1b8] sm:$0xff]
  %v89 = vld [vmem:[%s1 + $0x1c0] sm:$0xff]
  %v90 = vld [vmem:[%s1 + $0x1c8] sm:$0xff]
  %v91 = vld [vmem:[%s1 + $0x1d0] sm:$0xff]
  %v92 = vld [vmem:[%s1 + $0x1d8] sm:$0xff]
  %v93 = vld [vmem:[%s1 + $0x1e0] sm:$0xff]
  %v94 = vld [vmem:[%s1 + $0x1e8] sm:$0xff]
  %v95 = vld [vmem:[%s1 + $0x1f0] sm:$0xff]
  %v96 = vld [vmem:[%s1 + $0x1f8] sm:$0xff]
  %v97 = vld [vmem:[%s2] sm:$0xf]
  %v99 = vlaneseq
  %v100 = vshrl.u32 %v99, 7
  %v101 = vsub.s32 0, %v100
  %v102 = vrot.slane %v97, %v101
  %v103 = vlaneseq
  %v104 = vshrl.u32 %v103, 7
  %v105 = vsub.s32 1, %v104
  %v106 = vrot.slane %v97, %v105
  %v107 = vlaneseq
  %v108 = vshrl.u32 %v107, 7
  %v109 = vsub.s32 2, %v108
  %v110 = vrot.slane %v97, %v109
  %v111 = vlaneseq
  %v112 = vshrl.u32 %v111, 7
  %v113 = vsub.s32 3, %v112
  %v114 = vrot.slane %v97, %v113
  %119 = vmatprep.subr.mxu0 %v94
  %120 = vmatpush1.msra.mxu0 %v93
  %121 = vmatprep.subr.mxu0 %v90
  %122 = vmatpush1.msra.mxu0 %v89
  %123 = vmatprep.subr.mxu0 %v86
  %124 = vmatpush1.msra.mxu0 %v85
  %125 = vmatprep.subr.mxu0 %v82
  %126 = vmatpush1.msra.mxu0 %v81
  %127 = vmatprep.subr.mxu0 %v78
  %128 = vmatpush1.msra.mxu0 %v77
  %129 = vmatprep.subr.mxu0 %v74
  %130 = vmatpush1.msra.mxu0 %v73
  %131 = vmatprep.subr.mxu0 %v70
  %132 = vmatpush1.msra.mxu0 %v69
  %133 = vmatprep.subr.mxu0 %v66
  %134 = vmatpush1.msra.mxu0 %v65
  %135 = vmatprep.subr.mxu0 %v62
  %136 = vmatpush1.msra.mxu0 %v61
  %137 = vmatprep.subr.mxu0 %v58
  %138 = vmatpush1.msra.mxu0 %v57
  %139 = vmatprep.subr.mxu0 %v54
  %140 = vmatpush1.msra.mxu0 %v53
  %141 = vmatprep.subr.mxu0 %v50
  %142 = vmatpush1.msra.mxu0 %v49
  %143 = vmatprep.subr.mxu0 %v46
  %144 = vmatpush1.msra.mxu0 %v45
  %145 = vmatprep.subr.mxu0 %v42
  %146 = vmatpush1.msra.mxu0 %v41
  %147 = vmatprep.subr.mxu0 %v38
  %148 = vmatpush1.msra.mxu0 %v37
  %149 = vmatprep.subr.mxu0 %v34
  %150 = vmatpush1.msra.mxu0 %v33
  %151 = vmatprep.subr.mxu0 0.0
  %152 = vmatpush2.msra.mxu0 0.0
  %153 = vmatprep.subr.mxu0 0.0
  %154 = vmatpush2.msra.mxu0 0.0
  %155 = vmatprep.subr.mxu0 0.0
  %156 = vmatpush2.msra.mxu0 0.0
  %157 = vmatprep.subr.mxu0 0.0
  %158 = vmatpush2.msra.mxu0 0.0
  %159 = vmatprep.subr.mxu0 0.0
  %160 = vmatpush2.msra.mxu0 0.0
  %161 = vmatprep.subr.mxu0 0.0
  %162 = vmatpush2.msra.mxu0 0.0
  %163 = vmatprep.subr.mxu0 0.0
  %164 = vmatpush2.msra.mxu0 0.0
  %165 = vmatprep.subr.mxu0 0.0
  %166 = vmatpush2.msra.mxu0 0.0
  %167 = vmatprep.subr.mxu0 0.0
  %168 = vmatpush2.msra.mxu0 0.0
  %169 = vmatprep.subr.mxu0 0.0
  %170 = vmatpush2.msra.mxu0 0.0
  %171 = vmatprep.subr.mxu0 0.0
  %172 = vmatpush2.msra.mxu0 0.0
  %173 = vmatprep.subr.mxu0 0.0
  %174 = vmatpush2.msra.mxu0 0.0
  %175 = vmatprep.subr.mxu0 0.0
  %176 = vmatpush2.msra.mxu0 0.0
  %177 = vmatprep.subr.mxu0 0.0
  %178 = vmatpush2.msra.mxu0 0.0
  %179 = vmatprep.subr.mxu0 0.0
  %180 = vmatpush2.msra.mxu0 0.0
  %181 = vmatprep.subr.mxu0 0.0
  %182 = vmatpush2.msra.mxu0 0.0
  %183 = vmatprep.mubr.f32.mxu0 0.0
  %184 = vmatmul.mubr.f32.gmra.mxu0 %v25
  %v185 = vpop.f32.mrf.mxu0
  %v186 = vadd.f32 %v102, %v185
  %v187 = vpop.f32.mrf.mxu0
  %v188 = vadd.f32 %v106, %v187
  %189 = vmatprep.mubr.f32.mxu0 0.0
  %190 = vmatmul.mubr.f32.gmra.mxu0 %v26
  %v191 = vpop.f32.mrf.mxu0
  %v192 = vadd.f32 %v102, %v191
  %v193 = vpop.f32.mrf.mxu0
  %v194 = vadd.f32 %v106, %v193
  %195 = vmatprep.mubr.f32.mxu0 0.0
  %196 = vmatmul.mubr.f32.gmra.mxu0 %v27
  %v197 = vpop.f32.mrf.mxu0
  %v198 = vadd.f32 %v102, %v197
  %v199 = vpop.f32.mrf.mxu0
  %v200 = vadd.f32 %v106, %v199
  %201 = vmatprep.mubr.f32.mxu0 0.0
  %202 = vmatmul.mubr.f32.gmra.mxu0 %v28
  %v203 = vpop.f32.mrf.mxu0
  %v204 = vadd.f32 %v102, %v203
  %v205 = vpop.f32.mrf.mxu0
  %v206 = vadd.f32 %v106, %v205
  %207 = vmatprep.mubr.f32.mxu0 0.0
  %208 = vmatmul.mubr.f32.gmra.mxu0 %v29
  %v209 = vpop.f32.mrf.mxu0
  %v210 = vadd.f32 %v102, %v209
  %v211 = vpop.f32.mrf.mxu0
  %v212 = vadd.f32 %v106, %v211
  %213 = vmatprep.mubr.f32.mxu0 0.0
  %214 = vmatmul.mubr.f32.gmra.mxu0 %v30
  %v215 = vpop.f32.mrf.mxu0
  %v216 = vadd.f32 %v102, %v215
  %v217 = vpop.f32.mrf.mxu0
  %v218 = vadd.f32 %v106, %v217
  %219 = vmatprep.mubr.f32.mxu0 0.0
  %220 = vmatmul.mubr.f32.gmra.mxu0 %v31
  %v221 = vpop.f32.mrf.mxu0
  %v222 = vadd.f32 %v102, %v221
  %v223 = vpop.f32.mrf.mxu0
  %v224 = vadd.f32 %v106, %v223
  %225 = vmatprep.mubr.f32.mxu0 0.0
  %226 = vmatmul.mubr.f32.gmra.mxu0 %v32
  %v227 = vpop.f32.mrf.mxu0
  %v228 = vadd.f32 %v102, %v227
  %v229 = vpop.f32.mrf.mxu0
  %v230 = vadd.f32 %v106, %v229
  %231 = vdwg.mxu0
  %232 = vmatprep.subr.mxu0 %v96
  %233 = vmatpush1.msra.mxu0 %v95
  %234 = vmatprep.subr.mxu0 %v92
  %235 = vmatpush1.msra.mxu0 %v91
  %236 = vmatprep.subr.mxu0 %v88
  %237 = vmatpush1.msra.mxu0 %v87
  %238 = vmatprep.subr.mxu0 %v84
  %239 = vmatpush1.msra.mxu0 %v83
  %240 = vmatprep.subr.mxu0 %v80
  %241 = vmatpush1.msra.mxu0 %v79
  %242 = vmatprep.subr.mxu0 %v76
  %243 = vmatpush1.msra.mxu0 %v75
  %244 = vmatprep.subr.mxu0 %v72
  %245 = vmatpush1.msra.mxu0 %v71
  %246 = vmatprep.subr.mxu0 %v68
  %247 = vmatpush1.msra.mxu0 %v67
  %248 = vmatprep.subr.mxu0 %v64
  %249 = vmatpush1.msra.mxu0 %v63
  %250 = vmatprep.subr.mxu0 %v60
  %251 = vmatpush1.msra.mxu0 %v59
  %252 = vmatprep.subr.mxu0 %v56
  %253 = vmatpush1.msra.mxu0 %v55
  %254 = vmatprep.subr.mxu0 %v52
  %255 = vmatpush1.msra.mxu0 %v51
  %256 = vmatprep.subr.mxu0 %v48
  %257 = vmatpush1.msra.mxu0 %v47
  %258 = vmatprep.subr.mxu0 %v44
  %259 = vmatpush1.msra.mxu0 %v43
  %260 = vmatprep.subr.mxu0 %v40
  %261 = vmatpush1.msra.mxu0 %v39
  %262 = vmatprep.subr.mxu0 %v36
  %263 = vmatpush1.msra.mxu0 %v35
  %264 = vmatprep.subr.mxu0 0.0
  %265 = vmatpush2.msra.mxu0 0.0
  %266 = vmatprep.subr.mxu0 0.0
  %267 = vmatpush2.msra.mxu0 0.0
  %268 = vmatprep.subr.mxu0 0.0
  %269 = vmatpush2.msra.mxu0 0.0
  %270 = vmatprep.subr.mxu0 0.0
  %271 = vmatpush2.msra.mxu0 0.0
  %272 = vmatprep.subr.mxu0 0.0
  %273 = vmatpush2.msra.mxu0 0.0
  %274 = vmatprep.subr.mxu0 0.0
  %275 = vmatpush2.msra.mxu0 0.0
  %276 = vmatprep.subr.mxu0 0.0
  %277 = vmatpush2.msra.mxu0 0.0
  %278 = vmatprep.subr.mxu0 0.0
  %279 = vmatpush2.msra.mxu0 0.0
  %280 = vmatprep.subr.mxu0 0.0
  %281 = vmatpush2.msra.mxu0 0.0
  %282 = vmatprep.subr.mxu0 0.0
  %283 = vmatpush2.msra.mxu0 0.0
  %284 = vmatprep.subr.mxu0 0.0
  %285 = vmatpush2.msra.mxu0 0.0
  %286 = vmatprep.subr.mxu0 0.0
  %287 = vmatpush2.msra.mxu0 0.0
  %288 = vmatprep.subr.mxu0 0.0
  %289 = vmatpush2.msra.mxu0 0.0
  %290 = vmatprep.subr.mxu0 0.0
  %291 = vmatpush2.msra.mxu0 0.0
  %292 = vmatprep.subr.mxu0 0.0
  %293 = vmatpush2.msra.mxu0 0.0
  %294 = vmatprep.subr.mxu0 0.0
  %295 = vmatpush2.msra.mxu0 0.0
  %296 = vmatprep.mubr.f32.mxu0 0.0
  %297 = vmatmul.mubr.f32.gmra.mxu0 %v25
  %v298 = vpop.f32.mrf.mxu0
  %v299 = vadd.f32 %v110, %v298
  %v300 = vpop.f32.mrf.mxu0
  %v301 = vadd.f32 %v114, %v300
  %302 = vmatprep.mubr.f32.mxu0 0.0
  %303 = vmatmul.mubr.f32.gmra.mxu0 %v26
  %v304 = vpop.f32.mrf.mxu0
  %v305 = vadd.f32 %v110, %v304
  %v306 = vpop.f32.mrf.mxu0
  %v307 = vadd.f32 %v114, %v306
  %308 = vmatprep.mubr.f32.mxu0 0.0
  %309 = vmatmul.mubr.f32.gmra.mxu0 %v27
  %v310 = vpop.f32.mrf.mxu0
  %v311 = vadd.f32 %v110, %v310
  %v312 = vpop.f32.mrf.mxu0
  %v313 = vadd.f32 %v114, %v312
  %314 = vmatprep.mubr.f32.mxu0 0.0
  %315 = vmatmul.mubr.f32.gmra.mxu0 %v28
  %v316 = vpop.f32.mrf.mxu0
  %v317 = vadd.f32 %v110, %v316
  %v318 = vpop.f32.mrf.mxu0
  %v319 = vadd.f32 %v114, %v318
  %320 = vmatprep.mubr.f32.mxu0 0.0
  %321 = vmatmul.mubr.f32.gmra.mxu0 %v29
  %v322 = vpop.f32.mrf.mxu0
  %v323 = vadd.f32 %v110, %v322
  %v324 = vpop.f32.mrf.mxu0
  %v325 = vadd.f32 %v114, %v324
  %326 = vmatprep.mubr.f32.mxu0 0.0
  %327 = vmatmul.mubr.f32.gmra.mxu0 %v30
  %v328 = vpop.f32.mrf.mxu0
  %v329 = vadd.f32 %v110, %v328
  %v330 = vpop.f32.mrf.mxu0
  %v331 = vadd.f32 %v114, %v330
  %332 = vmatprep.mubr.f32.mxu0 0.0
  %333 = vmatmul.mubr.f32.gmra.mxu0 %v31
  %v334 = vpop.f32.mrf.mxu0
  %v335 = vadd.f32 %v110, %v334
  %v336 = vpop.f32.mrf.mxu0
  %v337 = vadd.f32 %v114, %v336
  %338 = vmatprep.mubr.f32.mxu0 0.0
  %339 = vmatmul.mubr.f32.gmra.mxu0 %v32
  %v340 = vpop.f32.mrf.mxu0
  %v341 = vadd.f32 %v110, %v340
  %v342 = vpop.f32.mrf.mxu0
  %v343 = vadd.f32 %v114, %v342
  %344 = vdwg.mxu0
  %345 = vst [vmem:[#allocation2] sm:$0xff] %v186
  %346 = vst [vmem:[#allocation2 + $0x8] sm:$0xff] %v188
  %347 = vst [vmem:[#allocation2 + $0x10] sm:$0xff] %v299
  %348 = vst [vmem:[#allocation2 + $0x18] sm:$0xff] %v301
  %349 = vst [vmem:[#allocation2 + $0x20] sm:$0xff] %v192
  %350 = vst [vmem:[#allocation2 + $0x28] sm:$0xff] %v194
  %351 = vst [vmem:[#allocation2 + $0x30] sm:$0xff] %v305
  %352 = vst [vmem:[#allocation2 + $0x38] sm:$0xff] %v307
  %353 = vst [vmem:[#allocation2 + $0x40] sm:$0xff] %v198
  %354 = vst [vmem:[#allocation2 + $0x48] sm:$0xff] %v200
  %355 = vst [vmem:[#allocation2 + $0x50] sm:$0xff] %v311
  %356 = vst [vmem:[#allocation2 + $0x58] sm:$0xff] %v313
  %357 = vst [vmem:[#allocation2 + $0x60] sm:$0xff] %v204
  %358 = vst [vmem:[#allocation2 + $0x68] sm:$0xff] %v206
  %359 = vst [vmem:[#allocation2 + $0x70] sm:$0xff] %v317
  %360 = vst [vmem:[#allocation2 + $0x78] sm:$0xff] %v319
  %361 = vst [vmem:[#allocation2 + $0x80] sm:$0xff] %v210
  %362 = vst [vmem:[#allocation2 + $0x88] sm:$0xff] %v212
  %363 = vst [vmem:[#allocation2 + $0x90] sm:$0xff] %v323
  %364 = vst [vmem:[#allocation2 + $0x98] sm:$0xff] %v325
  %365 = vst [vmem:[#allocation2 + $0xa0] sm:$0xff] %v216
  %366 = vst [vmem:[#allocation2 + $0xa8] sm:$0xff] %v218
  %367 = vst [vmem:[#allocation2 + $0xb0] sm:$0xff] %v329
  %368 = vst [vmem:[#allocation2 + $0xb8] sm:$0xff] %v331
  %369 = vst [vmem:[#allocation2 + $0xc0] sm:$0xff] %v222
  %370 = vst [vmem:[#allocation2 + $0xc8] sm:$0xff] %v224
  %371 = vst [vmem:[#allocation2 + $0xd0] sm:$0xff] %v335
  %372 = vst [vmem:[#allocation2 + $0xd8] sm:$0xff] %v337
  %373 = vst [vmem:[#allocation2 + $0xe0] sm:$0xff] %v228
  %374 = vst [vmem:[#allocation2 + $0xe8] sm:$0xff] %v230
  %375 = vst [vmem:[#allocation2 + $0xf0] sm:$0xff] %v341
  %376 = vst [vmem:[#allocation2 + $0xf8] sm:$0xff] %v343
  %v377 = vld [vmem:[%s3] sm:$0xff]
  %v378 = vld [vmem:[%s3 + $0x8] sm:$0xff]
  %v379 = vld [vmem:[%s3 + $0x10] sm:$0xff]
  %v380 = vld [vmem:[%s3 + $0x18] sm:$0xff]
  %v381 = vld [vmem:[%s3 + $0x20] sm:$0xff]
  %v382 = vld [vmem:[%s3 + $0x28] sm:$0xff]
  %v383 = vld [vmem:[%s3 + $0x30] sm:$0xff]
  %v384 = vld [vmem:[%s3 + $0x38] sm:$0xff]
  %v385 = vld [vmem:[%s3 + $0x40] sm:$0xff]
  %v386 = vld [vmem:[%s3 + $0x48] sm:$0xff]
  %v387 = vld [vmem:[%s3 + $0x50] sm:$0xff]
  %v388 = vld [vmem:[%s3 + $0x58] sm:$0xff]
  %v389 = vld [vmem:[%s3 + $0x60] sm:$0xff]
  %v390 = vld [vmem:[%s3 + $0x68] sm:$0xff]
  %v391 = vld [vmem:[%s3 + $0x70] sm:$0xff]
  %v392 = vld [vmem:[%s3 + $0x78] sm:$0xff]
  %v393 = vld [vmem:[%s3 + $0x80] sm:$0xff]
  %v394 = vld [vmem:[%s3 + $0x88] sm:$0xff]
  %v395 = vld [vmem:[%s3 + $0x90] sm:$0xff]
  %v396 = vld [vmem:[%s3 + $0x98] sm:$0xff]
  %v397 = vld [vmem:[%s3 + $0xa0] sm:$0xff]
  %v398 = vld [vmem:[%s3 + $0xa8] sm:$0xff]
  %v399 = vld [vmem:[%s3 + $0xb0] sm:$0xff]
  %v400 = vld [vmem:[%s3 + $0xb8] sm:$0xff]
  %v401 = vld [vmem:[%s3 + $0xc0] sm:$0xff]
  %v402 = vld [vmem:[%s3 + $0xc8] sm:$0xff]
  %v403 = vld [vmem:[%s3 + $0xd0] sm:$0xff]
  %v404 = vld [vmem:[%s3 + $0xd8] sm:$0xff]
  %v405 = vld [vmem:[%s3 + $0xe0] sm:$0xff]
  %v406 = vld [vmem:[%s3 + $0xe8] sm:$0xff]
  %v407 = vld [vmem:[%s3 + $0xf0] sm:$0xff]
  %v408 = vld [vmem:[%s3 + $0xf8] sm:$0xff]
  %v409 = vld [vmem:[%s3 + $0x100] sm:$0xff]
  %v410 = vld [vmem:[%s3 + $0x108] sm:$0xff]
  %v411 = vld [vmem:[%s3 + $0x110] sm:$0xff]
  %v412 = vld [vmem:[%s3 + $0x118] sm:$0xff]
  %v413 = vld [vmem:[%s3 + $0x120] sm:$0xff]
  %v414 = vld [vmem:[%s3 + $0x128] sm:$0xff]
  %v415 = vld [vmem:[%s3 + $0x130] sm:$0xff]
  %v416 = vld [vmem:[%s3 + $0x138] sm:$0xff]
  %v417 = vld [vmem:[%s3 + $0x140] sm:$0xff]
  %v418 = vld [vmem:[%s3 + $0x148] sm:$0xff]
  %v419 = vld [vmem:[%s3 + $0x150] sm:$0xff]
  %v420 = vld [vmem:[%s3 + $0x158] sm:$0xff]
  %v421 = vld [vmem:[%s3 + $0x160] sm:$0xff]
  %v422 = vld [vmem:[%s3 + $0x168] sm:$0xff]
  %v423 = vld [vmem:[%s3 + $0x170] sm:$0xff]
  %v424 = vld [vmem:[%s3 + $0x178] sm:$0xff]
  %v425 = vld [vmem:[%s3 + $0x180] sm:$0xff]
  %v426 = vld [vmem:[%s3 + $0x188] sm:$0xff]
  %v427 = vld [vmem:[%s3 + $0x190] sm:$0xff]
  %v428 = vld [vmem:[%s3 + $0x198] sm:$0xff]
  %v429 = vld [vmem:[%s3 + $0x1a0] sm:$0xff]
  %v430 = vld [vmem:[%s3 + $0x1a8] sm:$0xff]
  %v431 = vld [vmem:[%s3 + $0x1b0] sm:$0xff]
  %v432 = vld [vmem:[%s3 + $0x1b8] sm:$0xff]
  %v433 = vld [vmem:[%s3 + $0x1c0] sm:$0xff]
  %v434 = vld [vmem:[%s3 + $0x1c8] sm:$0xff]
  %v435 = vld [vmem:[%s3 + $0x1d0] sm:$0xff]
  %v436 = vld [vmem:[%s3 + $0x1d8] sm:$0xff]
  %v437 = vld [vmem:[%s3 + $0x1e0] sm:$0xff]
  %v438 = vld [vmem:[%s3 + $0x1e8] sm:$0xff]
  %v439 = vld [vmem:[%s3 + $0x1f0] sm:$0xff]
  %v440 = vld [vmem:[%s3 + $0x1f8] sm:$0xff]
  %v441 = vld [vmem:[#allocation3] sm:$0xff]
  %v442 = vld [vmem:[#allocation4] sm:$0xff]
  %s443 = smul.u32 0, 4
  %s444 = smul.addr %s443, 8
  %s445 = scalar_lea.vmem [#allocation2], %s444
  %v446 = vld [vmem:[%s445] sm:$0xff]
  %v447 = vld [vmem:[%s445 + $0x8] sm:$0xff]
  %v448 = vld [vmem:[%s445 + $0x10] sm:$0xff]
  %v449 = vld [vmem:[%s445 + $0x18] sm:$0xff]
  %450 = vmatprep.subr.mxu0 %v438
  %451 = vmatpush1.msra.mxu0 %v437
  %452 = vmatprep.subr.mxu0 %v434
  %453 = vmatpush1.msra.mxu0 %v433
  %454 = vmatprep.subr.mxu0 %v430
  %455 = vmatpush1.msra.mxu0 %v429
  %456 = vmatprep.subr.mxu0 %v426
  %457 = vmatpush1.msra.mxu0 %v425
  %458 = vmatprep.subr.mxu0 %v422
  %459 = vmatpush1.msra.mxu0 %v421
  %460 = vmatprep.subr.mxu0 %v418
  %461 = vmatpush1.msra.mxu0 %v417
  %462 = vmatprep.subr.mxu0 %v414
  %463 = vmatpush1.msra.mxu0 %v413
  %464 = vmatprep.subr.mxu0 %v410
  %465 = vmatpush1.msra.mxu0 %v409
  %466 = vmatprep.subr.mxu0 %v406
  %467 = vmatpush1.msra.mxu0 %v405
  %468 = vmatprep.subr.mxu0 %v402
  %469 = vmatpush1.msra.mxu0 %v401
  %470 = vmatprep.subr.mxu0 %v398
  %471 = vmatpush1.msra.mxu0 %v397
  %472 = vmatprep.subr.mxu0 %v394
  %473 = vmatpush1.msra.mxu0 %v393
  %474 = vmatprep.subr.mxu0 %v390
  %475 = vmatpush1.msra.mxu0 %v389
  %476 = vmatprep.subr.mxu0 %v386
  %477 = vmatpush1.msra.mxu0 %v385
  %478 = vmatprep.subr.mxu0 %v382
  %479 = vmatpush1.msra.mxu0 %v381
  %480 = vmatprep.subr.mxu0 %v378
  %481 = vmatpush1.msra.mxu0 %v377
  %482 = vmatprep.subr.mxu0 0.0
  %483 = vmatpush2.msra.mxu0 0.0
  %484 = vmatprep.subr.mxu0 0.0
  %485 = vmatpush2.msra.mxu0 0.0
  %486 = vmatprep.subr.mxu0 0.0
  %487 = vmatpush2.msra.mxu0 0.0
  %488 = vmatprep.subr.mxu0 0.0
  %489 = vmatpush2.msra.mxu0 0.0
  %490 = vmatprep.subr.mxu0 0.0
  %491 = vmatpush2.msra.mxu0 0.0
  %492 = vmatprep.subr.mxu0 0.0
  %493 = vmatpush2.msra.mxu0 0.0
  %494 = vmatprep.subr.mxu0 0.0
  %495 = vmatpush2.msra.mxu0 0.0
  %496 = vmatprep.subr.mxu0 0.0
  %497 = vmatpush2.msra.mxu0 0.0
  %498 = vmatprep.subr.mxu0 0.0
  %499 = vmatpush2.msra.mxu0 0.0
  %500 = vmatprep.subr.mxu0 0.0
  %501 = vmatpush2.msra.mxu0 0.0
  %502 = vmatprep.subr.mxu0 0.0
  %503 = vmatpush2.msra.mxu0 0.0
  %504 = vmatprep.subr.mxu0 0.0
  %505 = vmatpush2.msra.mxu0 0.0
  %506 = vmatprep.subr.mxu0 0.0
  %507 = vmatpush2.msra.mxu0 0.0
  %508 = vmatprep.subr.mxu0 0.0
  %509 = vmatpush2.msra.mxu0 0.0
  %510 = vmatprep.subr.mxu0 0.0
  %511 = vmatpush2.msra.mxu0 0.0
  %512 = vmatprep.subr.mxu0 0.0
  %513 = vmatpush2.msra.mxu0 0.0
  %514 = vmatprep.mubr.f32.mxu0 0.0
  %515 = vmatmul.mubr.f32.gmra.mxu0 %v441
  %v516 = vpop.f32.mrf.mxu0
  %v517 = vadd.f32 0.0, %v516
  %v518 = vpop.f32.mrf.mxu0
  %v519 = vadd.f32 0.0, %v518
  %520 = vdwg.mxu0
  %521 = vmatprep.subr.mxu0 %v440
  %522 = vmatpush1.msra.mxu0 %v439
  %523 = vmatprep.subr.mxu0 %v436
  %524 = vmatpush1.msra.mxu0 %v435
  %525 = vmatprep.subr.mxu0 %v432
  %526 = vmatpush1.msra.mxu0 %v431
  %527 = vmatprep.subr.mxu0 %v428
  %528 = vmatpush1.msra.mxu0 %v427
  %529 = vmatprep.subr.mxu0 %v424
  %530 = vmatpush1.msra.mxu0 %v423
  %531 = vmatprep.subr.mxu0 %v420
  %532 = vmatpush1.msra.mxu0 %v419
  %533 = vmatprep.subr.mxu0 %v416
  %534 = vmatpush1.msra.mxu0 %v415
  %535 = vmatprep.subr.mxu0 %v412
  %536 = vmatpush1.msra.mxu0 %v411
  %537 = vmatprep.subr.mxu0 %v408
  %538 = vmatpush1.msra.mxu0 %v407
  %539 = vmatprep.subr.mxu0 %v404
  %540 = vmatpush1.msra.mxu0 %v403
  %541 = vmatprep.subr.mxu0 %v400
  %542 = vmatpush1.msra.mxu0 %v399
  %543 = vmatprep.subr.mxu0 %v396
  %544 = vmatpush1.msra.mxu0 %v395
  %545 = vmatprep.subr.mxu0 %v392
  %546 = vmatpush1.msra.mxu0 %v391
  %547 = vmatprep.subr.mxu0 %v388
  %548 = vmatpush1.msra.mxu0 %v387
  %549 = vmatprep.subr.mxu0 %v384
  %550 = vmatpush1.msra.mxu0 %v383
  %551 = vmatprep.subr.mxu0 %v380
  %552 = vmatpush1.msra.mxu0 %v379
  %553 = vmatprep.subr.mxu0 0.0
  %554 = vmatpush2.msra.mxu0 0.0
  %555 = vmatprep.subr.mxu0 0.0
  %556 = vmatpush2.msra.mxu0 0.0
  %557 = vmatprep.subr.mxu0 0.0
  %558 = vmatpush2.msra.mxu0 0.0
  %559 = vmatprep.subr.mxu0 0.0
  %560 = vmatpush2.msra.mxu0 0.0
  %561 = vmatprep.subr.mxu0 0.0
  %562 = vmatpush2.msra.mxu0 0.0
  %563 = vmatprep.subr.mxu0 0.0
  %564 = vmatpush2.msra.mxu0 0.0
  %565 = vmatprep.subr.mxu0 0.0
  %566 = vmatpush2.msra.mxu0 0.0
  %567 = vmatprep.subr.mxu0 0.0
  %568 = vmatpush2.msra.mxu0 0.0
  %569 = vmatprep.subr.mxu0 0.0
  %570 = vmatpush2.msra.mxu0 0.0
  %571 = vmatprep.subr.mxu0 0.0
  %572 = vmatpush2.msra.mxu0 0.0
  %573 = vmatprep.subr.mxu0 0.0
  %574 = vmatpush2.msra.mxu0 0.0
  %575 = vmatprep.subr.mxu0 0.0
  %576 = vmatpush2.msra.mxu0 0.0
  %577 = vmatprep.subr.mxu0 0.0
  %578 = vmatpush2.msra.mxu0 0.0
  %579 = vmatprep.subr.mxu0 0.0
  %580 = vmatpush2.msra.mxu0 0.0
  %581 = vmatprep.subr.mxu0 0.0
  %582 = vmatpush2.msra.mxu0 0.0
  %583 = vmatprep.subr.mxu0 0.0
  %584 = vmatpush2.msra.mxu0 0.0
  %585 = vmatprep.mubr.f32.mxu0 0.0
  %586 = vmatmul.mubr.f32.gmra.mxu0 %v441
  %v587 = vpop.f32.mrf.mxu0
  %v588 = vadd.f32 0.0, %v587
  %v589 = vpop.f32.mrf.mxu0
  %v590 = vadd.f32 0.0, %v589
  %591 = vdwg.mxu0
  %v592 = vadd.f32 %v446, %v517
  %v593 = vadd.f32 %v447, %v519
  %v594 = vadd.f32 %v448, %v588
  %v595 = vadd.f32 %v449, %v590
  %v596 = vxor.u32 %v592, 2147483648
  %v597 = vxor.u32 %v593, 2147483648
  %v598 = vxor.u32 %v594, 2147483648
  %v599 = vmul.f32 %v596, 1.442695
  %v600 = vpow.pop %v599
  %v601 = vmul.f32 %v597, 1.442695
  %v602 = vpow.pop %v601
  %v603 = vmul.f32 %v598, 1.442695
  %v604 = vpow.pop %v603
  %v605 = vadd.f32 %v600, 1.0
  %v606 = vadd.f32 %v602, 1.0
  %v607 = vadd.f32 %v604, 1.0
  %v608 = vrcp.pop %v605
  %v609 = vmul.f32 1.0, %v608
  %v610 = vrcp.pop %v606
  %v611 = vmul.f32 1.0, %v610
  %v612 = vrcp.pop %v607
  %v613 = vmul.f32 1.0, %v612
  %v614 = vtanh.pop %v595
  %v615 = vmul.f32 %v611, %v442
  %v616 = vmul.f32 %v609, %v614
  %v617 = vadd.f32 %v615, %v616
  %v618 = vtanh.pop %v617
  %v619 = vmul.f32 %v613, %v618
  %620 = vst [vmem:[%s4] sm:$0xff] %v619
  %s621 = smul.u32 1, 4
  %s622 = smul.addr %s621, 8
  %s623 = scalar_lea.vmem [#allocation2], %s622
  %v624 = vld [vmem:[%s623] sm:$0xff]
  %v625 = vld [vmem:[%s623 + $0x8] sm:$0xff]
  %v626 = vld [vmem:[%s623 + $0x10] sm:$0xff]
  %v627 = vld [vmem:[%s623 + $0x18] sm:$0xff]
  %628 = vmatprep.subr.mxu0 %v438
  %629 = vmatpush1.msra.mxu0 %v437
  %630 = vmatprep.subr.mxu0 %v434
  %631 = vmatpush1.msra.mxu0 %v433
  %632 = vmatprep.subr.mxu0 %v430
  %633 = vmatpush1.msra.mxu0 %v429
  %634 = vmatprep.subr.mxu0 %v426
  %635 = vmatpush1.msra.mxu0 %v425
  %636 = vmatprep.subr.mxu0 %v422
  %637 = vmatpush1.msra.mxu0 %v421
  %638 = vmatprep.subr.mxu0 %v418
  %639 = vmatpush1.msra.mxu0 %v417
  %640 = vmatprep.subr.mxu0 %v414
  %641 = vmatpush1.msra.mxu0 %v413
  %642 = vmatprep.subr.mxu0 %v410
  %643 = vmatpush1.msra.mxu0 %v409
  %644 = vmatprep.subr.mxu0 %v406
  %645 = vmatpush1.msra.mxu0 %v405
  %646 = vmatprep.subr.mxu0 %v402
  %647 = vmatpush1.msra.mxu0 %v401
  %648 = vmatprep.subr.mxu0 %v398
  %649 = vmatpush1.msra.mxu0 %v397
  %650 = vmatprep.subr.mxu0 %v394
  %651 = vmatpush1.msra.mxu0 %v393
  %652 = vmatprep.subr.mxu0 %v390
  %653 = vmatpush1.msra.mxu0 %v389
  %654 = vmatprep.subr.mxu0 %v386
  %655 = vmatpush1.msra.mxu0 %v385
  %656 = vmatprep.subr.mxu0 %v382
  %657 = vmatpush1.msra.mxu0 %v381
  %658 = vmatprep.subr.mxu0 %v378
  %659 = vmatpush1.msra.mxu0 %v377
  %660 = vmatprep.subr.mxu0 0.0
  %661 = vmatpush2.msra.mxu0 0.0
  %662 = vmatprep.subr.mxu0 0.0
  %663 = vmatpush2.msra.mxu0 0.0
  %664 = vmatprep.subr.mxu0 0.0
  %665 = vmatpush2.msra.mxu0 0.0
  %666 = vmatprep.subr.mxu0 0.0
  %667 = vmatpush2.msra.mxu0 0.0
  %668 = vmatprep.subr.mxu0 0.0
  %669 = vmatpush2.msra.mxu0 0.0
  %670 = vmatprep.subr.mxu0 0.0
  %671 = vmatpush2.msra.mxu0 0.0
  %672 = vmatprep.subr.mxu0 0.0
  %673 = vmatpush2.msra.mxu0 0.0
  %674 = vmatprep.subr.mxu0 0.0
  %675 = vmatpush2.msra.mxu0 0.0
  %676 = vmatprep.subr.mxu0 0.0
  %677 = vmatpush2.msra.mxu0 0.0
  %678 = vmatprep.subr.mxu0 0.0
  %679 = vmatpush2.msra.mxu0 0.0
  %680 = vmatprep.subr.mxu0 0.0
  %681 = vmatpush2.msra.mxu0 0.0
  %682 = vmatprep.subr.mxu0 0.0
  %683 = vmatpush2.msra.mxu0 0.0
  %684 = vmatprep.subr.mxu0 0.0
  %685 = vmatpush2.msra.mxu0 0.0
  %686 = vmatprep.subr.mxu0 0.0
  %687 = vmatpush2.msra.mxu0 0.0
  %688 = vmatprep.subr.mxu0 0.0
  %689 = vmatpush2.msra.mxu0 0.0
  %690 = vmatprep.subr.mxu0 0.0
  %691 = vmatpush2.msra.mxu0 0.0
  %692 = vmatprep.mubr.f32.mxu0 0.0
  %693 = vmatmul.mubr.f32.gmra.mxu0 %v619
  %v694 = vpop.f32.mrf.mxu0
  %v695 = vadd.f32 0.0, %v694
  %v696 = vpop.f32.mrf.mxu0
  %v697 = vadd.f32 0.0, %v696
  %698 = vdwg.mxu0
  %699 = vmatprep.subr.mxu0 %v440
  %700 = vmatpush1.msra.mxu0 %v439
  %701 = vmatprep.subr.mxu0 %v436
  %702 = vmatpush1.msra.mxu0 %v435
  %703 = vmatprep.subr.mxu0 %v432
  %704 = vmatpush1.msra.mxu0 %v431
  %705 = vmatprep.subr.mxu0 %v428
  %706 = vmatpush1.msra.mxu0 %v427
  %707 = vmatprep.subr.mxu0 %v424
  %708 = vmatpush1.msra.mxu0 %v423
  %709 = vmatprep.subr.mxu0 %v420
  %710 = vmatpush1.msra.mxu0 %v419
  %711 = vmatprep.subr.mxu0 %v416
  %712 = vmatpush1.msra.mxu0 %v415
  %713 = vmatprep.subr.mxu0 %v412
  %714 = vmatpush1.msra.mxu0 %v411
  %715 = vmatprep.subr.mxu0 %v408
  %716 = vmatpush1.msra.mxu0 %v407
  %717 = vmatprep.subr.mxu0 %v404
  %718 = vmatpush1.msra.mxu0 %v403
  %719 = vmatprep.subr.mxu0 %v400
  %720 = vmatpush1.msra.mxu0 %v399
  %721 = vmatprep.subr.mxu0 %v396
  %722 = vmatpush1.msra.mxu0 %v395
  %723 = vmatprep.subr.mxu0 %v392
  %724 = vmatpush1.msra.mxu0 %v391
  %725 = vmatprep.subr.mxu0 %v388
  %726 = vmatpush1.msra.mxu0 %v387
  %727 = vmatprep.subr.mxu0 %v384
  %728 = vmatpush1.msra.mxu0 %v383
  %729 = vmatprep.subr.mxu0 %v380
  %730 = vmatpush1.msra.mxu0 %v379
  %731 = vmatprep.subr.mxu0 0.0
  %732 = vmatpush2.msra.mxu0 0.0
  %733 = vmatprep.subr.mxu0 0.0
  %734 = vmatpush2.msra.mxu0 0.0
  %735 = vmatprep.subr.mxu0 0.0
  %736 = vmatpush2.msra.mxu0 0.0
  %737 = vmatprep.subr.mxu0 0.0
  %738 = vmatpush2.msra.mxu0 0.0
  %739 = vmatprep.subr.mxu0 0.0
  %740 = vmatpush2.msra.mxu0 0.0
  %741 = vmatprep.subr.mxu0 0.0
  %742 = vmatpush2.msra.mxu0 0.0
  %743 = vmatprep.subr.mxu0 0.0
  %744 = vmatpush2.msra.mxu0 0.0
  %745 = vmatprep.subr.mxu0 0.0
  %746 = vmatpush2.msra.mxu0 0.0
  %747 = vmatprep.subr.mxu0 0.0
  %748 = vmatpush2.msra.mxu0 0.0
  %749 = vmatprep.subr.mxu0 0.0
  %750 = vmatpush2.msra.mxu0 0.0
  %751 = vmatprep.subr.mxu0 0.0
  %752 = vmatpush2.msra.mxu0 0.0
  %753 = vmatprep.subr.mxu0 0.0
  %754 = vmatpush2.msra.mxu0 0.0
  %755 = vmatprep.subr.mxu0 0.0
  %756 = vmatpush2.msra.mxu0 0.0
  %757 = vmatprep.subr.mxu0 0.0
  %758 = vmatpush2.msra.mxu0 0.0
  %759 = vmatprep.subr.mxu0 0.0
  %760 = vmatpush2.msra.mxu0 0.0
  %761 = vmatprep.subr.mxu0 0.0
  %762 = vmatpush2.msra.mxu0 0.0
  %763 = vmatprep.mubr.f32.mxu0 0.0
  %764 = vmatmul.mubr.f32.gmra.mxu0 %v619
  %v765 = vpop.f32.mrf.mxu0
  %v766 = vadd.f32 0.0, %v765
  %v767 = vpop.f32.mrf.mxu0
  %v768 = vadd.f32 0.0, %v767
  %769 = vdwg.mxu0
  %v770 = vadd.f32 %v624, %v695
  %v771 = vadd.f32 %v625, %v697
  %v772 = vadd.f32 %v626, %v766
  %v773 = vadd.f32 %v627, %v768
  %v774 = vxor.u32 %v770, 2147483648
  %v775 = vxor.u32 %v771, 2147483648
  %v776 = vxor.u32 %v772, 2147483648
  %v777 = vmul.f32 %v774, 1.442695
  %v778 = vpow.pop %v777
  %v779 = vmul.f32 %v775, 1.442695
  %v780 = vpow.pop %v779
  %v781 = vmul.f32 %v776, 1.442695
  %v782 = vpow.pop %v781
  %v783 = vadd.f32 %v778, 1.0
  %v784 = vadd.f32 %v780, 1.0
  %v785 = vadd.f32 %v782, 1.0
  %v786 = vrcp.pop %v783
  %v787 = vmul.f32 1.0, %v786
  %v788 = vrcp.pop %v784
  %v789 = vmul.f32 1.0, %v788
  %v790 = vrcp.pop %v785
  %v791 = vmul.f32 1.0, %v790
  %v792 = vtanh.pop %v773
  %v793 = vmul.f32 %v789, %v617
  %v794 = vmul.f32 %v787, %v792
  %v795 = vadd.f32 %v793, %v794
  %v796 = vtanh.pop %v795
  %v797 = vmul.f32 %v791, %v796
  %s798 = scalar_lea.vmem %s4, 8
  %799 = vst [vmem:[%s798] sm:$0xff] %v797
  %s800 = smul.u32 2, 4
  %s801 = smul.addr %s800, 8
  %s802 = scalar_lea.vmem [#allocation2], %s801
  %v803 = vld [vmem:[%s802] sm:$0xff]
  %v804 = vld [vmem:[%s802 + $0x8] sm:$0xff]
  %v805 = vld [vmem:[%s802 + $0x10] sm:$0xff]
  %v806 = vld [vmem:[%s802 + $0x18] sm:$0xff]
  %807 = vmatprep.subr.mxu0 %v438
  %808 = vmatpush1.msra.mxu0 %v437
  %809 = vmatprep.subr.mxu0 %v434
  %810 = vmatpush1.msra.mxu0 %v433
  %811 = vmatprep.subr.mxu0 %v430
  %812 = vmatpush1.msra.mxu0 %v429
  %813 = vmatprep.subr.mxu0 %v426
  %814 = vmatpush1.msra.mxu0 %v425
  %815 = vmatprep.subr.mxu0 %v422
  %816 = vmatpush1.msra.mxu0 %v421
  %817 = vmatprep.subr.mxu0 %v418
  %818 = vmatpush1.msra.mxu0 %v417
  %819 = vmatprep.subr.mxu0 %v414
  %820 = vmatpush1.msra.mxu0 %v413
  %821 = vmatprep.subr.mxu0 %v410
  %822 = vmatpush1.msra.mxu0 %v409
  %823 = vmatprep.subr.mxu0 %v406
  %824 = vmatpush1.msra.mxu0 %v405
  %825 = vmatprep.subr.mxu0 %v402
  %826 = vmatpush1.msra.mxu0 %v401
  %827 = vmatprep.subr.mxu0 %v398
  %828 = vmatpush1.msra.mxu0 %v397
  %829 = vmatprep.subr.mxu0 %v394
  %830 = vmatpush1.msra.mxu0 %v393
  %831 = vmatprep.subr.mxu0 %v390
  %832 = vmatpush1.msra.mxu0 %v389
  %833 = vmatprep.subr.mxu0 %v386
  %834 = vmatpush1.msra.mxu0 %v385
  %835 = vmatprep.subr.mxu0 %v382
  %836 = vmatpush1.msra.mxu0 %v381
  %837 = vmatprep.subr.mxu0 %v378
  %838 = vmatpush1.msra.mxu0 %v377
  %839 = vmatprep.subr.mxu0 0.0
  %840 = vmatpush2.msra.mxu0 0.0
  %841 = vmatprep.subr.mxu0 0.0
  %842 = vmatpush2.msra.mxu0 0.0
  %843 = vmatprep.subr.mxu0 0.0
  %844 = vmatpush2.msra.mxu0 0.0
  %845 = vmatprep.subr.mxu0 0.0
  %846 = vmatpush2.msra.mxu0 0.0
  %847 = vmatprep.subr.mxu0 0.0
  %848 = vmatpush2.msra.mxu0 0.0
  %849 = vmatprep.subr.mxu0 0.0
  %850 = vmatpush2.msra.mxu0 0.0
  %851 = vmatprep.subr.mxu0 0.0
  %852 = vmatpush2.msra.mxu0 0.0
  %853 = vmatprep.subr.mxu0 0.0
  %854 = vmatpush2.msra.mxu0 0.0
  %855 = vmatprep.subr.mxu0 0.0
  %856 = vmatpush2.msra.mxu0 0.0
  %857 = vmatprep.subr.mxu0 0.0
  %858 = vmatpush2.msra.mxu0 0.0
  %859 = vmatprep.subr.mxu0 0.0
  %860 = vmatpush2.msra.mxu0 0.0
  %861 = vmatprep.subr.mxu0 0.0
  %862 = vmatpush2.msra.mxu0 0.0
  %863 = vmatprep.subr.mxu0 0.0
  %864 = vmatpush2.msra.mxu0 0.0
  %865 = vmatprep.subr.mxu0 0.0
  %866 = vmatpush2.msra.mxu0 0.0
  %867 = vmatprep.subr.mxu0 0.0
  %868 = vmatpush2.msra.mxu0 0.0
  %869 = vmatprep.subr.mxu0 0.0
  %870 = vmatpush2.msra.mxu0 0.0
  %871 = vmatprep.mubr.f32.mxu0 0.0
  %872 = vmatmul.mubr.f32.gmra.mxu0 %v797
  %v873 = vpop.f32.mrf.mxu0
  %v874 = vadd.f32 0.0, %v873
  %v875 = vpop.f32.mrf.mxu0
  %v876 = vadd.f32 0.0, %v875
  %877 = vdwg.mxu0
  %878 = vmatprep.subr.mxu0 %v440
  %879 = vmatpush1.msra.mxu0 %v439
  %880 = vmatprep.subr.mxu0 %v436
  %881 = vmatpush1.msra.mxu0 %v435
  %882 = vmatprep.subr.mxu0 %v432
  %883 = vmatpush1.msra.mxu0 %v431
  %884 = vmatprep.subr.mxu0 %v428
  %885 = vmatpush1.msra.mxu0 %v427
  %886 = vmatprep.subr.mxu0 %v424
  %887 = vmatpush1.msra.mxu0 %v423
  %888 = vmatprep.subr.mxu0 %v420
  %889 = vmatpush1.msra.mxu0 %v419
  %890 = vmatprep.subr.mxu0 %v416
  %891 = vmatpush1.msra.mxu0 %v415
  %892 = vmatprep.subr.mxu0 %v412
  %893 = vmatpush1.msra.mxu0 %v411
  %894 = vmatprep.subr.mxu0 %v408
  %895 = vmatpush1.msra.mxu0 %v407
  %896 = vmatprep.subr.mxu0 %v404
  %897 = vmatpush1.msra.mxu0 %v403
  %898 = vmatprep.subr.mxu0 %v400
  %899 = vmatpush1.msra.mxu0 %v399
  %900 = vmatprep.subr.mxu0 %v396
  %901 = vmatpush1.msra.mxu0 %v395
  %902 = vmatprep.subr.mxu0 %v392
  %903 = vmatpush1.msra.mxu0 %v391
  %904 = vmatprep.subr.mxu0 %v388
  %905 = vmatpush1.msra.mxu0 %v387
  %906 = vmatprep.subr.mxu0 %v384
  %907 = vmatpush1.msra.mxu0 %v383
  %908 = vmatprep.subr.mxu0 %v380
  %909 = vmatpush1.msra.mxu0 %v379
  %910 = vmatprep.subr.mxu0 0.0
  %911 = vmatpush2.msra.mxu0 0.0
  %912 = vmatprep.subr.mxu0 0.0
  %913 = vmatpush2.msra.mxu0 0.0
  %914 = vmatprep.subr.mxu0 0.0
  %915 = vmatpush2.msra.mxu0 0.0
  %916 = vmatprep.subr.mxu0 0.0
  %917 = vmatpush2.msra.mxu0 0.0
  %918 = vmatprep.subr.mxu0 0.0
  %919 = vmatpush2.msra.mxu0 0.0
  %920 = vmatprep.subr.mxu0 0.0
  %921 = vmatpush2.msra.mxu0 0.0
  %922 = vmatprep.subr.mxu0 0.0
  %923 = vmatpush2.msra.mxu0 0.0
  %924 = vmatprep.subr.mxu0 0.0
  %925 = vmatpush2.msra.mxu0 0.0
  %926 = vmatprep.subr.mxu0 0.0
  %927 = vmatpush2.msra.mxu0 0.0
  %928 = vmatprep.subr.mxu0 0.0
  %929 = vmatpush2.msra.mxu0 0.0
  %930 = vmatprep.subr.mxu0 0.0
  %931 = vmatpush2.msra.mxu0 0.0
  %932 = vmatprep.subr.mxu0 0.0
  %933 = vmatpush2.msra.mxu0 0.0
  %934 = vmatprep.subr.mxu0 0.0
  %935 = vmatpush2.msra.mxu0 0.0
  %936 = vmatprep.subr.mxu0 0.0
  %937 = vmatpush2.msra.mxu0 0.0
  %938 = vmatprep.subr.mxu0 0.0
  %939 = vmatpush2.msra.mxu0 0.0
  %940 = vmatprep.subr.mxu0 0.0
  %941 = vmatpush2.msra.mxu0 0.0
  %942 = vmatprep.mubr.f32.mxu0 0.0
  %943 = vmatmul.mubr.f32.gmra.mxu0 %v797
  %v944 = vpop.f32.mrf.mxu0
  %v945 = vadd.f32 0.0, %v944
  %v946 = vpop.f32.mrf.mxu0
  %v947 = vadd.f32 0.0, %v946
  %948 = vdwg.mxu0
  %v949 = vadd.f32 %v803, %v874
  %v950 = vadd.f32 %v804, %v876
  %v951 = vadd.f32 %v805, %v945
  %v952 = vadd.f32 %v806, %v947
  %v953 = vxor.u32 %v949, 2147483648
  %v954 = vxor.u32 %v950, 2147483648
  %v955 = vxor.u32 %v951, 2147483648
  %v956 = vmul.f32 %v953, 1.442695
  %v957 = vpow.pop %v956
  %v958 = vmul.f32 %v954, 1.442695
  %v959 = vpow.pop %v958
  %v960 = vmul.f32 %v955, 1.442695
  %v961 = vpow.pop %v960
  %v962 = vadd.f32 %v957, 1.0
  %v963 = vadd.f32 %v959, 1.0
  %v964 = vadd.f32 %v961, 1.0
  %v965 = vrcp.pop %v962
  %v966 = vmul.f32 1.0, %v965
  %v967 = vrcp.pop %v963
  %v968 = vmul.f32 1.0, %v967
  %v969 = vrcp.pop %v964
  %v970 = vmul.f32 1.0, %v969
  %v971 = vtanh.pop %v952
  %v972 = vmul.f32 %v968, %v795
  %v973 = vmul.f32 %v966, %v971
  %v974 = vadd.f32 %v972, %v973
  %v975 = vtanh.pop %v974
  %v976 = vmul.f32 %v970, %v975
  %s977 = scalar_lea.vmem %s4, 16
  %978 = vst [vmem:[%s977] sm:$0xff] %v976
  %s979 = smul.u32 3, 4
  %s980 = smul.addr %s979, 8
  %s981 = scalar_lea.vmem [#allocation2], %s980
  %v982 = vld [vmem:[%s981] sm:$0xff]
  %v983 = vld [vmem:[%s981 + $0x8] sm:$0xff]
  %v984 = vld [vmem:[%s981 + $0x10] sm:$0xff]
  %v985 = vld [vmem:[%s981 + $0x18] sm:$0xff]
  %986 = vmatprep.subr.mxu0 %v438
  %987 = vmatpush1.msra.mxu0 %v437
  %988 = vmatprep.subr.mxu0 %v434
  %989 = vmatpush1.msra.mxu0 %v433
  %990 = vmatprep.subr.mxu0 %v430
  %991 = vmatpush1.msra.mxu0 %v429
  %992 = vmatprep.subr.mxu0 %v426
  %993 = vmatpush1.msra.mxu0 %v425
  %994 = vmatprep.subr.mxu0 %v422
  %995 = vmatpush1.msra.mxu0 %v421
  %996 = vmatprep.subr.mxu0 %v418
  %997 = vmatpush1.msra.mxu0 %v417
  %998 = vmatprep.subr.mxu0 %v414
  %999 = vmatpush1.msra.mxu0 %v413
  %1000 = vmatprep.subr.mxu0 %v410
  %1001 = vmatpush1.msra.mxu0 %v409
  %1002 = vmatprep.subr.mxu0 %v406
  %1003 = vmatpush1.msra.mxu0 %v405
  %1004 = vmatprep.subr.mxu0 %v402
  %1005 = vmatpush1.msra.mxu0 %v401
  %1006 = vmatprep.subr.mxu0 %v398
  %1007 = vmatpush1.msra.mxu0 %v397
  %1008 = vmatprep.subr.mxu0 %v394
  %1009 = vmatpush1.msra.mxu0 %v393
  %1010 = vmatprep.subr.mxu0 %v390
  %1011 = vmatpush1.msra.mxu0 %v389
  %1012 = vmatprep.subr.mxu0 %v386
  %1013 = vmatpush1.msra.mxu0 %v385
  %1014 = vmatprep.subr.mxu0 %v382
  %1015 = vmatpush1.msra.mxu0 %v381
  %1016 = vmatprep.subr.mxu0 %v378
  %1017 = vmatpush1.msra.mxu0 %v377
  %1018 = vmatprep.subr.mxu0 0.0
  %1019 = vmatpush2.msra.mxu0 0.0
  %1020 = vmatprep.subr.mxu0 0.0
  %1021 = vmatpush2.msra.mxu0 0.0
  %1022 = vmatprep.subr.mxu0 0.0
  %1023 = vmatpush2.msra.mxu0 0.0
  %1024 = vmatprep.subr.mxu0 0.0
  %1025 = vmatpush2.msra.mxu0 0.0
  %1026 = vmatprep.subr.mxu0 0.0
  %1027 = vmatpush2.msra.mxu0 0.0
  %1028 = vmatprep.subr.mxu0 0.0
  %1029 = vmatpush2.msra.mxu0 0.0
  %1030 = vmatprep.subr.mxu0 0.0
  %1031 = vmatpush2.msra.mxu0 0.0
  %1032 = vmatprep.subr.mxu0 0.0
  %1033 = vmatpush2.msra.mxu0 0.0
  %1034 = vmatprep.subr.mxu0 0.0
  %1035 = vmatpush2.msra.mxu0 0.0
  %1036 = vmatprep.subr.mxu0 0.0
  %1037 = vmatpush2.msra.mxu0 0.0
  %1038 = vmatprep.subr.mxu0 0.0
  %1039 = vmatpush2.msra.mxu0 0.0
  %1040 = vmatprep.subr.mxu0 0.0
  %1041 = vmatpush2.msra.mxu0 0.0
  %1042 = vmatprep.subr.mxu0 0.0
  %1043 = vmatpush2.msra.mxu0 0.0
  %1044 = vmatprep.subr.mxu0 0.0
  %1045 = vmatpush2.msra.mxu0 0.0
  %1046 = vmatprep.subr.mxu0 0.0
  %1047 = vmatpush2.msra.mxu0 0.0
  %1048 = vmatprep.subr.mxu0 0.0
  %1049 = vmatpush2.msra.mxu0 0.0
  %1050 = vmatprep.mubr.f32.mxu0 0.0
  %1051 = vmatmul.mubr.f32.gmra.mxu0 %v976
  %v1052 = vpop.f32.mrf.mxu0
  %v1053 = vadd.f32 0.0, %v1052
  %v1054 = vpop.f32.mrf.mxu0
  %v1055 = vadd.f32 0.0, %v1054
  %1056 = vdwg.mxu0
  %1057 = vmatprep.subr.mxu0 %v440
  %1058 = vmatpush1.msra.mxu0 %v439
  %1059 = vmatprep.subr.mxu0 %v436
  %1060 = vmatpush1.msra.mxu0 %v435
  %1061 = vmatprep.subr.mxu0 %v432
  %1062 = vmatpush1.msra.mxu0 %v431
  %1063 = vmatprep.subr.mxu0 %v428
  %1064 = vmatpush1.msra.mxu0 %v427
  %1065 = vmatprep.subr.mxu0 %v424
  %1066 = vmatpush1.msra.mxu0 %v423
  %1067 = vmatprep.subr.mxu0 %v420
  %1068 = vmatpush1.msra.mxu0 %v419
  %1069 = vmatprep.subr.mxu0 %v416
  %1070 = vmatpush1.msra.mxu0 %v415
  %1071 = vmatprep.subr.mxu0 %v412
  %1072 = vmatpush1.msra.mxu0 %v411
  %1073 = vmatprep.subr.mxu0 %v408
  %1074 = vmatpush1.msra.mxu0 %v407
  %1075 = vmatprep.subr.mxu0 %v404
  %1076 = vmatpush1.msra.mxu0 %v403
  %1077 = vmatprep.subr.mxu0 %v400
  %1078 = vmatpush1.msra.mxu0 %v399
  %1079 = vmatprep.subr.mxu0 %v396
  %1080 = vmatpush1.msra.mxu0 %v395
  %1081 = vmatprep.subr.mxu0 %v392
  %1082 = vmatpush1.msra.mxu0 %v391
  %1083 = vmatprep.subr.mxu0 %v388
  %1084 = vmatpush1.msra.mxu0 %v387
  %1085 = vmatprep.subr.mxu0 %v384
  %1086 = vmatpush1.msra.mxu0 %v383
  %1087 = vmatprep.subr.mxu0 %v380
  %1088 = vmatpush1.msra.mxu0 %v379
  %1089 = vmatprep.subr.mxu0 0.0
  %1090 = vmatpush2.msra.mxu0 0.0
  %1091 = vmatprep.subr.mxu0 0.0
  %1092 = vmatpush2.msra.mxu0 0.0
  %1093 = vmatprep.subr.mxu0 0.0
  %1094 = vmatpush2.msra.mxu0 0.0
  %1095 = vmatprep.subr.mxu0 0.0
  %1096 = vmatpush2.msra.mxu0 0.0
  %1097 = vmatprep.subr.mxu0 0.0
  %1098 = vmatpush2.msra.mxu0 0.0
  %1099 = vmatprep.subr.mxu0 0.0
  %1100 = vmatpush2.msra.mxu0 0.0
  %1101 = vmatprep.subr.mxu0 0.0
  %1102 = vmatpush2.msra.mxu0 0.0
  %1103 = vmatprep.subr.mxu0 0.0
  %1104 = vmatpush2.msra.mxu0 0.0
  %1105 = vmatprep.subr.mxu0 0.0
  %1106 = vmatpush2.msra.mxu0 0.0
  %1107 = vmatprep.subr.mxu0 0.0
  %1108 = vmatpush2.msra.mxu0 0.0
  %1109 = vmatprep.subr.mxu0 0.0
  %1110 = vmatpush2.msra.mxu0 0.0
  %1111 = vmatprep.subr.mxu0 0.0
  %1112 = vmatpush2.msra.mxu0 0.0
  %1113 = vmatprep.subr.mxu0 0.0
  %1114 = vmatpush2.msra.mxu0 0.0
  %1115 = vmatprep.subr.mxu0 0.0
  %1116 = vmatpush2.msra.mxu0 0.0
  %1117 = vmatprep.subr.mxu0 0.0
  %1118 = vmatpush2.msra.mxu0 0.0
  %1119 = vmatprep.subr.mxu0 0.0
  %1120 = vmatpush2.msra.mxu0 0.0
  %1121 = vmatprep.mubr.f32.mxu0 0.0
  %1122 = vmatmul.mubr.f32.gmra.mxu0 %v976
  %v1123 = vpop.f32.mrf.mxu0
  %v1124 = vadd.f32 0.0, %v1123
  %v1125 = vpop.f32.mrf.mxu0
  %v1126 = vadd.f32 0.0, %v1125
  %1127 = vdwg.mxu0
  %v1128 = vadd.f32 %v982, %v1053
  %v1129 = vadd.f32 %v983, %v1055
  %v1130 = vadd.f32 %v984, %v1124
  %v1131 = vadd.f32 %v985, %v1126
  %v1132 = vxor.u32 %v1128, 2147483648
  %v1133 = vxor.u32 %v1129, 2147483648
  %v1134 = vxor.u32 %v1130, 2147483648
  %v1135 = vmul.f32 %v1132, 1.442695
  %v1136 = vpow.pop %v1135
  %v1137 = vmul.f32 %v1133, 1.442695
  %v1138 = vpow.pop %v1137
  %v1139 = vmul.f32 %v1134, 1.442695
  %v1140 = vpow.pop %v1139
  %v1141 = vadd.f32 %v1136, 1.0
  %v1142 = vadd.f32 %v1138, 1.0
  %v1143 = vadd.f32 %v1140, 1.0
  %v1144 = vrcp.pop %v1141
  %v1145 = vmul.f32 1.0, %v1144
  %v1146 = vrcp.pop %v1142
  %v1147 = vmul.f32 1.0, %v1146
  %v1148 = vrcp.pop %v1143
  %v1149 = vmul.f32 1.0, %v1148
  %v1150 = vtanh.pop %v1131
  %v1151 = vmul.f32 %v1147, %v974
  %v1152 = vmul.f32 %v1145, %v1150
  %v1153 = vadd.f32 %v1151, %v1152
  %v1154 = vtanh.pop %v1153
  %v1155 = vmul.f32 %v1149, %v1154
  %s1156 = scalar_lea.vmem %s4, 24
  %1157 = vst [vmem:[%s1156] sm:$0xff] %v1155
  %s1158 = smul.u32 4, 4
  %s1159 = smul.addr %s1158, 8
  %s1160 = scalar_lea.vmem [#allocation2], %s1159
  %v1161 = vld [vmem:[%s1160] sm:$0xff]
  %v1162 = vld [vmem:[%s1160 + $0x8] sm:$0xff]
  %v1163 = vld [vmem:[%s1160 + $0x10] sm:$0xff]
  %v1164 = vld [vmem:[%s1160 + $0x18] sm:$0xff]
  %1165 = vmatprep.subr.mxu0 %v438
  %1166 = vmatpush1.msra.mxu0 %v437
  %1167 = vmatprep.subr.mxu0 %v434
  %1168 = vmatpush1.msra.mxu0 %v433
  %1169 = vmatprep.subr.mxu0 %v430
  %1170 = vmatpush1.msra.mxu0 %v429
  %1171 = vmatprep.subr.mxu0 %v426
  %1172 = vmatpush1.msra.mxu0 %v425
  %1173 = vmatprep.subr.mxu0 %v422
  %1174 = vmatpush1.msra.mxu0 %v421
  %1175 = vmatprep.subr.mxu0 %v418
  %1176 = vmatpush1.msra.mxu0 %v417
  %1177 = vmatprep.subr.mxu0 %v414
  %1178 = vmatpush1.msra.mxu0 %v413
  %1179 = vmatprep.subr.mxu0 %v410
  %1180 = vmatpush1.msra.mxu0 %v409
  %1181 = vmatprep.subr.mxu0 %v406
  %1182 = vmatpush1.msra.mxu0 %v405
  %1183 = vmatprep.subr.mxu0 %v402
  %1184 = vmatpush1.msra.mxu0 %v401
  %1185 = vmatprep.subr.mxu0 %v398
  %1186 = vmatpush1.msra.mxu0 %v397
  %1187 = vmatprep.subr.mxu0 %v394
  %1188 = vmatpush1.msra.mxu0 %v393
  %1189 = vmatprep.subr.mxu0 %v390
  %1190 = vmatpush1.msra.mxu0 %v389
  %1191 = vmatprep.subr.mxu0 %v386
  %1192 = vmatpush1.msra.mxu0 %v385
  %1193 = vmatprep.subr.mxu0 %v382
  %1194 = vmatpush1.msra.mxu0 %v381
  %1195 = vmatprep.subr.mxu0 %v378
  %1196 = vmatpush1.msra.mxu0 %v377
  %1197 = vmatprep.subr.mxu0 0.0
  %1198 = vmatpush2.msra.mxu0 0.0
  %1199 = vmatprep.subr.mxu0 0.0
  %1200 = vmatpush2.msra.mxu0 0.0
  %1201 = vmatprep.subr.mxu0 0.0
  %1202 = vmatpush2.msra.mxu0 0.0
  %1203 = vmatprep.subr.mxu0 0.0
  %1204 = vmatpush2.msra.mxu0 0.0
  %1205 = vmatprep.subr.mxu0 0.0
  %1206 = vmatpush2.msra.mxu0 0.0
  %1207 = vmatprep.subr.mxu0 0.0
  %1208 = vmatpush2.msra.mxu0 0.0
  %1209 = vmatprep.subr.mxu0 0.0
  %1210 = vmatpush2.msra.mxu0 0.0
  %1211 = vmatprep.subr.mxu0 0.0
  %1212 = vmatpush2.msra.mxu0 0.0
  %1213 = vmatprep.subr.mxu0 0.0
  %1214 = vmatpush2.msra.mxu0 0.0
  %1215 = vmatprep.subr.mxu0 0.0
  %1216 = vmatpush2.msra.mxu0 0.0
  %1217 = vmatprep.subr.mxu0 0.0
  %1218 = vmatpush2.msra.mxu0 0.0
  %1219 = vmatprep.subr.mxu0 0.0
  %1220 = vmatpush2.msra.mxu0 0.0
  %1221 = vmatprep.subr.mxu0 0.0
  %1222 = vmatpush2.msra.mxu0 0.0
  %1223 = vmatprep.subr.mxu0 0.0
  %1224 = vmatpush2.msra.mxu0 0.0
  %1225 = vmatprep.subr.mxu0 0.0
  %1226 = vmatpush2.msra.mxu0 0.0
  %1227 = vmatprep.subr.mxu0 0.0
  %1228 = vmatpush2.msra.mxu0 0.0
  %1229 = vmatprep.mubr.f32.mxu0 0.0
  %1230 = vmatmul.mubr.f32.gmra.mxu0 %v1155
  %v1231 = vpop.f32.mrf.mxu0
  %v1232 = vadd.f32 0.0, %v1231
  %v1233 = vpop.f32.mrf.mxu0
  %v1234 = vadd.f32 0.0, %v1233
  %1235 = vdwg.mxu0
  %1236 = vmatprep.subr.mxu0 %v440
  %1237 = vmatpush1.msra.mxu0 %v439
  %1238 = vmatprep.subr.mxu0 %v436
  %1239 = vmatpush1.msra.mxu0 %v435
  %1240 = vmatprep.subr.mxu0 %v432
  %1241 = vmatpush1.msra.mxu0 %v431
  %1242 = vmatprep.subr.mxu0 %v428
  %1243 = vmatpush1.msra.mxu0 %v427
  %1244 = vmatprep.subr.mxu0 %v424
  %1245 = vmatpush1.msra.mxu0 %v423
  %1246 = vmatprep.subr.mxu0 %v420
  %1247 = vmatpush1.msra.mxu0 %v419
  %1248 = vmatprep.subr.mxu0 %v416
  %1249 = vmatpush1.msra.mxu0 %v415
  %1250 = vmatprep.subr.mxu0 %v412
  %1251 = vmatpush1.msra.mxu0 %v411
  %1252 = vmatprep.subr.mxu0 %v408
  %1253 = vmatpush1.msra.mxu0 %v407
  %1254 = vmatprep.subr.mxu0 %v404
  %1255 = vmatpush1.msra.mxu0 %v403
  %1256 = vmatprep.subr.mxu0 %v400
  %1257 = vmatpush1.msra.mxu0 %v399
  %1258 = vmatprep.subr.mxu0 %v396
  %1259 = vmatpush1.msra.mxu0 %v395
  %1260 = vmatprep.subr.mxu0 %v392
  %1261 = vmatpush1.msra.mxu0 %v391
  %1262 = vmatprep.subr.mxu0 %v388
  %1263 = vmatpush1.msra.mxu0 %v387
  %1264 = vmatprep.subr.mxu0 %v384
  %1265 = vmatpush1.msra.mxu0 %v383
  %1266 = vmatprep.subr.mxu0 %v380
  %1267 = vmatpush1.msra.mxu0 %v379
  %1268 = vmatprep.subr.mxu0 0.0
  %1269 = vmatpush2.msra.mxu0 0.0
  %1270 = vmatprep.subr.mxu0 0.0
  %1271 = vmatpush2.msra.mxu0 0.0
  %1272 = vmatprep.subr.mxu0 0.0
  %1273 = vmatpush2.msra.mxu0 0.0
  %1274 = vmatprep.subr.mxu0 0.0
  %1275 = vmatpush2.msra.mxu0 0.0
  %1276 = vmatprep.subr.mxu0 0.0
  %1277 = vmatpush2.msra.mxu0 0.0
  %1278 = vmatprep.subr.mxu0 0.0
  %1279 = vmatpush2.msra.mxu0 0.0
  %1280 = vmatprep.subr.mxu0 0.0
  %1281 = vmatpush2.msra.mxu0 0.0
  %1282 = vmatprep.subr.mxu0 0.0
  %1283 = vmatpush2.msra.mxu0 0.0
  %1284 = vmatprep.subr.mxu0 0.0
  %1285 = vmatpush2.msra.mxu0 0.0
  %1286 = vmatprep.subr.mxu0 0.0
  %1287 = vmatpush2.msra.mxu0 0.0
  %1288 = vmatprep.subr.mxu0 0.0
  %1289 = vmatpush2.msra.mxu0 0.0
  %1290 = vmatprep.subr.mxu0 0.0
  %1291 = vmatpush2.msra.mxu0 0.0
  %1292 = vmatprep.subr.mxu0 0.0
  %1293 = vmatpush2.msra.mxu0 0.0
  %1294 = vmatprep.subr.mxu0 0.0
  %1295 = vmatpush2.msra.mxu0 0.0
  %1296 = vmatprep.subr.mxu0 0.0
  %1297 = vmatpush2.msra.mxu0 0.0
  %1298 = vmatprep.subr.mxu0 0.0
  %1299 = vmatpush2.msra.mxu0 0.0
  %1300 = vmatprep.mubr.f32.mxu0 0.0
  %1301 = vmatmul.mubr.f32.gmra.mxu0 %v1155
  %v1302 = vpop.f32.mrf.mxu0
  %v1303 = vadd.f32 0.0, %v1302
  %v1304 = vpop.f32.mrf.mxu0
  %v1305 = vadd.f32 0.0, %v1304
  %1306 = vdwg.mxu0
  %v1307 = vadd.f32 %v1161, %v1232
  %v1308 = vadd.f32 %v1162, %v1234
  %v1309 = vadd.f32 %v1163, %v1303
  %v1310 = vadd.f32 %v1164, %v1305
  %v1311 = vxor.u32 %v1307, 2147483648
  %v1312 = vxor.u32 %v1308, 2147483648
  %v1313 = vxor.u32 %v1309, 2147483648
  %v1314 = vmul.f32 %v1311, 1.442695
  %v1315 = vpow.pop %v1314
  %v1316 = vmul.f32 %v1312, 1.442695
  %v1317 = vpow.pop %v1316
  %v1318 = vmul.f32 %v1313, 1.442695
  %v1319 = vpow.pop %v1318
  %v1320 = vadd.f32 %v1315, 1.0
  %v1321 = vadd.f32 %v1317, 1.0
  %v1322 = vadd.f32 %v1319, 1.0
  %v1323 = vrcp.pop %v1320
  %v1324 = vmul.f32 1.0, %v1323
  %v1325 = vrcp.pop %v1321
  %v1326 = vmul.f32 1.0, %v1325
  %v1327 = vrcp.pop %v1322
  %v1328 = vmul.f32 1.0, %v1327
  %v1329 = vtanh.pop %v1310
  %v1330 = vmul.f32 %v1326, %v1153
  %v1331 = vmul.f32 %v1324, %v1329
  %v1332 = vadd.f32 %v1330, %v1331
  %v1333 = vtanh.pop %v1332
  %v1334 = vmul.f32 %v1328, %v1333
  %s1335 = scalar_lea.vmem %s4, 32
  %1336 = vst [vmem:[%s1335] sm:$0xff] %v1334
  %s1337 = smul.u32 5, 4
  %s1338 = smul.addr %s1337, 8
  %s1339 = scalar_lea.vmem [#allocation2], %s1338
  %v1340 = vld [vmem:[%s1339] sm:$0xff]
  %v1341 = vld [vmem:[%s1339 + $0x8] sm:$0xff]
  %v1342 = vld [vmem:[%s1339 + $0x10] sm:$0xff]
  %v1343 = vld [vmem:[%s1339 + $0x18] sm:$0xff]
  %1344 = vmatprep.subr.mxu0 %v438
  %1345 = vmatpush1.msra.mxu0 %v437
  %1346 = vmatprep.subr.mxu0 %v434
  %1347 = vmatpush1.msra.mxu0 %v433
  %1348 = vmatprep.subr.mxu0 %v430
  %1349 = vmatpush1.msra.mxu0 %v429
  %1350 = vmatprep.subr.mxu0 %v426
  %1351 = vmatpush1.msra.mxu0 %v425
  %1352 = vmatprep.subr.mxu0 %v422
  %1353 = vmatpush1.msra.mxu0 %v421
  %1354 = vmatprep.subr.mxu0 %v418
  %1355 = vmatpush1.msra.mxu0 %v417
  %1356 = vmatprep.subr.mxu0 %v414
  %1357 = vmatpush1.msra.mxu0 %v413
  %1358 = vmatprep.subr.mxu0 %v410
  %1359 = vmatpush1.msra.mxu0 %v409
  %1360 = vmatprep.subr.mxu0 %v406
  %1361 = vmatpush1.msra.mxu0 %v405
  %1362 = vmatprep.subr.mxu0 %v402
  %1363 = vmatpush1.msra.mxu0 %v401
  %1364 = vmatprep.subr.mxu0 %v398
  %1365 = vmatpush1.msra.mxu0 %v397
  %1366 = vmatprep.subr.mxu0 %v394
  %1367 = vmatpush1.msra.mxu0 %v393
  %1368 = vmatprep.subr.mxu0 %v390
  %1369 = vmatpush1.msra.mxu0 %v389
  %1370 = vmatprep.subr.mxu0 %v386
  %1371 = vmatpush1.msra.mxu0 %v385
  %1372 = vmatprep.subr.mxu0 %v382
  %1373 = vmatpush1.msra.mxu0 %v381
  %1374 = vmatprep.subr.mxu0 %v378
  %1375 = vmatpush1.msra.mxu0 %v377
  %1376 = vmatprep.subr.mxu0 0.0
  %1377 = vmatpush2.msra.mxu0 0.0
  %1378 = vmatprep.subr.mxu0 0.0
  %1379 = vmatpush2.msra.mxu0 0.0
  %1380 = vmatprep.subr.mxu0 0.0
  %1381 = vmatpush2.msra.mxu0 0.0
  %1382 = vmatprep.subr.mxu0 0.0
  %1383 = vmatpush2.msra.mxu0 0.0
  %1384 = vmatprep.subr.mxu0 0.0
  %1385 = vmatpush2.msra.mxu0 0.0
  %1386 = vmatprep.subr.mxu0 0.0
  %1387 = vmatpush2.msra.mxu0 0.0
  %1388 = vmatprep.subr.mxu0 0.0
  %1389 = vmatpush2.msra.mxu0 0.0
  %1390 = vmatprep.subr.mxu0 0.0
  %1391 = vmatpush2.msra.mxu0 0.0
  %1392 = vmatprep.subr.mxu0 0.0
  %1393 = vmatpush2.msra.mxu0 0.0
  %1394 = vmatprep.subr.mxu0 0.0
  %1395 = vmatpush2.msra.mxu0 0.0
  %1396 = vmatprep.subr.mxu0 0.0
  %1397 = vmatpush2.msra.mxu0 0.0
  %1398 = vmatprep.subr.mxu0 0.0
  %1399 = vmatpush2.msra.mxu0 0.0
  %1400 = vmatprep.subr.mxu0 0.0
  %1401 = vmatpush2.msra.mxu0 0.0
  %1402 = vmatprep.subr.mxu0 0.0
  %1403 = vmatpush2.msra.mxu0 0.0
  %1404 = vmatprep.subr.mxu0 0.0
  %1405 = vmatpush2.msra.mxu0 0.0
  %1406 = vmatprep.subr.mxu0 0.0
  %1407 = vmatpush2.msra.mxu0 0.0
  %1408 = vmatprep.mubr.f32.mxu0 0.0
  %1409 = vmatmul.mubr.f32.gmra.mxu0 %v1334
  %v1410 = vpop.f32.mrf.mxu0
  %v1411 = vadd.f32 0.0, %v1410
  %v1412 = vpop.f32.mrf.mxu0
  %v1413 = vadd.f32 0.0, %v1412
  %1414 = vdwg.mxu0
  %1415 = vmatprep.subr.mxu0 %v440
  %1416 = vmatpush1.msra.mxu0 %v439
  %1417 = vmatprep.subr.mxu0 %v436
  %1418 = vmatpush1.msra.mxu0 %v435
  %1419 = vmatprep.subr.mxu0 %v432
  %1420 = vmatpush1.msra.mxu0 %v431
  %1421 = vmatprep.subr.mxu0 %v428
  %1422 = vmatpush1.msra.mxu0 %v427
  %1423 = vmatprep.subr.mxu0 %v424
  %1424 = vmatpush1.msra.mxu0 %v423
  %1425 = vmatprep.subr.mxu0 %v420
  %1426 = vmatpush1.msra.mxu0 %v419
  %1427 = vmatprep.subr.mxu0 %v416
  %1428 = vmatpush1.msra.mxu0 %v415
  %1429 = vmatprep.subr.mxu0 %v412
  %1430 = vmatpush1.msra.mxu0 %v411
  %1431 = vmatprep.subr.mxu0 %v408
  %1432 = vmatpush1.msra.mxu0 %v407
  %1433 = vmatprep.subr.mxu0 %v404
  %1434 = vmatpush1.msra.mxu0 %v403
  %1435 = vmatprep.subr.mxu0 %v400
  %1436 = vmatpush1.msra.mxu0 %v399
  %1437 = vmatprep.subr.mxu0 %v396
  %1438 = vmatpush1.msra.mxu0 %v395
  %1439 = vmatprep.subr.mxu0 %v392
  %1440 = vmatpush1.msra.mxu0 %v391
  %1441 = vmatprep.subr.mxu0 %v388
  %1442 = vmatpush1.msra.mxu0 %v387
  %1443 = vmatprep.subr.mxu0 %v384
  %1444 = vmatpush1.msra.mxu0 %v383
  %1445 = vmatprep.subr.mxu0 %v380
  %1446 = vmatpush1.msra.mxu0 %v379
  %1447 = vmatprep.subr.mxu0 0.0
  %1448 = vmatpush2.msra.mxu0 0.0
  %1449 = vmatprep.subr.mxu0 0.0
  %1450 = vmatpush2.msra.mxu0 0.0
  %1451 = vmatprep.subr.mxu0 0.0
  %1452 = vmatpush2.msra.mxu0 0.0
  %1453 = vmatprep.subr.mxu0 0.0
  %1454 = vmatpush2.msra.mxu0 0.0
  %1455 = vmatprep.subr.mxu0 0.0
  %1456 = vmatpush2.msra.mxu0 0.0
  %1457 = vmatprep.subr.mxu0 0.0
  %1458 = vmatpush2.msra.mxu0 0.0
  %1459 = vmatprep.subr.mxu0 0.0
  %1460 = vmatpush2.msra.mxu0 0.0
  %1461 = vmatprep.subr.mxu0 0.0
  %1462 = vmatpush2.msra.mxu0 0.0
  %1463 = vmatprep.subr.mxu0 0.0
  %1464 = vmatpush2.msra.mxu0 0.0
  %1465 = vmatprep.subr.mxu0 0.0
  %1466 = vmatpush2.msra.mxu0 0.0
  %1467 = vmatprep.subr.mxu0 0.0
  %1468 = vmatpush2.msra.mxu0 0.0
  %1469 = vmatprep.subr.mxu0 0.0
  %1470 = vmatpush2.msra.mxu0 0.0
  %1471 = vmatprep.subr.mxu0 0.0
  %1472 = vmatpush2.msra.mxu0 0.0
  %1473 = vmatprep.subr.mxu0 0.0
  %1474 = vmatpush2.msra.mxu0 0.0
  %1475 = vmatprep.subr.mxu0 0.0
  %1476 = vmatpush2.msra.mxu0 0.0
  %1477 = vmatprep.subr.mxu0 0.0
  %1478 = vmatpush2.msra.mxu0 0.0
  %1479 = vmatprep.mubr.f32.mxu0 0.0
  %1480 = vmatmul.mubr.f32.gmra.mxu0 %v1334
  %v1481 = vpop.f32.mrf.mxu0
  %v1482 = vadd.f32 0.0, %v1481
  %v1483 = vpop.f32.mrf.mxu0
  %v1484 = vadd.f32 0.0, %v1483
  %1485 = vdwg.mxu0
  %v1486 = vadd.f32 %v1340, %v1411
  %v1487 = vadd.f32 %v1341, %v1413
  %v1488 = vadd.f32 %v1342, %v1482
  %v1489 = vadd.f32 %v1343, %v1484
  %v1490 = vxor.u32 %v1486, 2147483648
  %v1491 = vxor.u32 %v1487, 2147483648
  %v1492 = vxor.u32 %v1488, 2147483648
  %v1493 = vmul.f32 %v1490, 1.442695
  %v1494 = vpow.pop %v1493
  %v1495 = vmul.f32 %v1491, 1.442695
  %v1496 = vpow.pop %v1495
  %v1497 = vmul.f32 %v1492, 1.442695
  %v1498 = vpow.pop %v1497
  %v1499 = vadd.f32 %v1494, 1.0
  %v1500 = vadd.f32 %v1496, 1.0
  %v1501 = vadd.f32 %v1498, 1.0
  %v1502 = vrcp.pop %v1499
  %v1503 = vmul.f32 1.0, %v1502
  %v1504 = vrcp.pop %v1500
  %v1505 = vmul.f32 1.0, %v1504
  %v1506 = vrcp.pop %v1501
  %v1507 = vmul.f32 1.0, %v1506
  %v1508 = vtanh.pop %v1489
  %v1509 = vmul.f32 %v1505, %v1332
  %v1510 = vmul.f32 %v1503, %v1508
  %v1511 = vadd.f32 %v1509, %v1510
  %v1512 = vtanh.pop %v1511
  %v1513 = vmul.f32 %v1507, %v1512
  %s1514 = scalar_lea.vmem %s4, 40
  %1515 = vst [vmem:[%s1514] sm:$0xff] %v1513
  %s1516 = smul.u32 6, 4
  %s1517 = smul.addr %s1516, 8
  %s1518 = scalar_lea.vmem [#allocation2], %s1517
  %v1519 = vld [vmem:[%s1518] sm:$0xff]
  %v1520 = vld [vmem:[%s1518 + $0x8] sm:$0xff]
  %v1521 = vld [vmem:[%s1518 + $0x10] sm:$0xff]
  %v1522 = vld [vmem:[%s1518 + $0x18] sm:$0xff]
  %1523 = vmatprep.subr.mxu0 %v438
  %1524 = vmatpush1.msra.mxu0 %v437
  %1525 = vmatprep.subr.mxu0 %v434
  %1526 = vmatpush1.msra.mxu0 %v433
  %1527 = vmatprep.subr.mxu0 %v430
  %1528 = vmatpush1.msra.mxu0 %v429
  %1529 = vmatprep.subr.mxu0 %v426
  %1530 = vmatpush1.msra.mxu0 %v425
  %1531 = vmatprep.subr.mxu0 %v422
  %1532 = vmatpush1.msra.mxu0 %v421
  %1533 = vmatprep.subr.mxu0 %v418
  %1534 = vmatpush1.msra.mxu0 %v417
  %1535 = vmatprep.subr.mxu0 %v414
  %1536 = vmatpush1.msra.mxu0 %v413
  %1537 = vmatprep.subr.mxu0 %v410
  %1538 = vmatpush1.msra.mxu0 %v409
  %1539 = vmatprep.subr.mxu0 %v406
  %1540 = vmatpush1.msra.mxu0 %v405
  %1541 = vmatprep.subr.mxu0 %v402
  %1542 = vmatpush1.msra.mxu0 %v401
  %1543 = vmatprep.subr.mxu0 %v398
  %1544 = vmatpush1.msra.mxu0 %v397
  %1545 = vmatprep.subr.mxu0 %v394
  %1546 = vmatpush1.msra.mxu0 %v393
  %1547 = vmatprep.subr.mxu0 %v390
  %1548 = vmatpush1.msra.mxu0 %v389
  %1549 = vmatprep.subr.mxu0 %v386
  %1550 = vmatpush1.msra.mxu0 %v385
  %1551 = vmatprep.subr.mxu0 %v382
  %1552 = vmatpush1.msra.mxu0 %v381
  %1553 = vmatprep.subr.mxu0 %v378
  %1554 = vmatpush1.msra.mxu0 %v377
  %1555 = vmatprep.subr.mxu0 0.0
  %1556 = vmatpush2.msra.mxu0 0.0
  %1557 = vmatprep.subr.mxu0 0.0
  %1558 = vmatpush2.msra.mxu0 0.0
  %1559 = vmatprep.subr.mxu0 0.0
  %1560 = vmatpush2.msra.mxu0 0.0
  %1561 = vmatprep.subr.mxu0 0.0
  %1562 = vmatpush2.msra.mxu0 0.0
  %1563 = vmatprep.subr.mxu0 0.0
  %1564 = vmatpush2.msra.mxu0 0.0
  %1565 = vmatprep.subr.mxu0 0.0
  %1566 = vmatpush2.msra.mxu0 0.0
  %1567 = vmatprep.subr.mxu0 0.0
  %1568 = vmatpush2.msra.mxu0 0.0
  %1569 = vmatprep.subr.mxu0 0.0
  %1570 = vmatpush2.msra.mxu0 0.0
  %1571 = vmatprep.subr.mxu0 0.0
  %1572 = vmatpush2.msra.mxu0 0.0
  %1573 = vmatprep.subr.mxu0 0.0
  %1574 = vmatpush2.msra.mxu0 0.0
  %1575 = vmatprep.subr.mxu0 0.0
  %1576 = vmatpush2.msra.mxu0 0.0
  %1577 = vmatprep.subr.mxu0 0.0
  %1578 = vmatpush2.msra.mxu0 0.0
  %1579 = vmatprep.subr.mxu0 0.0
  %1580 = vmatpush2.msra.mxu0 0.0
  %1581 = vmatprep.subr.mxu0 0.0
  %1582 = vmatpush2.msra.mxu0 0.0
  %1583 = vmatprep.subr.mxu0 0.0
  %1584 = vmatpush2.msra.mxu0 0.0
  %1585 = vmatprep.subr.mxu0 0.0
  %1586 = vmatpush2.msra.mxu0 0.0
  %1587 = vmatprep.mubr.f32.mxu0 0.0
  %1588 = vmatmul.mubr.f32.gmra.mxu0 %v1513
  %v1589 = vpop.f32.mrf.mxu0
  %v1590 = vadd.f32 0.0, %v1589
  %v1591 = vpop.f32.mrf.mxu0
  %v1592 = vadd.f32 0.0, %v1591
  %1593 = vdwg.mxu0
  %1594 = vmatprep.subr.mxu0 %v440
  %1595 = vmatpush1.msra.mxu0 %v439
  %1596 = vmatprep.subr.mxu0 %v436
  %1597 = vmatpush1.msra.mxu0 %v435
  %1598 = vmatprep.subr.mxu0 %v432
  %1599 = vmatpush1.msra.mxu0 %v431
  %1600 = vmatprep.subr.mxu0 %v428
  %1601 = vmatpush1.msra.mxu0 %v427
  %1602 = vmatprep.subr.mxu0 %v424
  %1603 = vmatpush1.msra.mxu0 %v423
  %1604 = vmatprep.subr.mxu0 %v420
  %1605 = vmatpush1.msra.mxu0 %v419
  %1606 = vmatprep.subr.mxu0 %v416
  %1607 = vmatpush1.msra.mxu0 %v415
  %1608 = vmatprep.subr.mxu0 %v412
  %1609 = vmatpush1.msra.mxu0 %v411
  %1610 = vmatprep.subr.mxu0 %v408
  %1611 = vmatpush1.msra.mxu0 %v407
  %1612 = vmatprep.subr.mxu0 %v404
  %1613 = vmatpush1.msra.mxu0 %v403
  %1614 = vmatprep.subr.mxu0 %v400
  %1615 = vmatpush1.msra.mxu0 %v399
  %1616 = vmatprep.subr.mxu0 %v396
  %1617 = vmatpush1.msra.mxu0 %v395
  %1618 = vmatprep.subr.mxu0 %v392
  %1619 = vmatpush1.msra.mxu0 %v391
  %1620 = vmatprep.subr.mxu0 %v388
  %1621 = vmatpush1.msra.mxu0 %v387
  %1622 = vmatprep.subr.mxu0 %v384
  %1623 = vmatpush1.msra.mxu0 %v383
  %1624 = vmatprep.subr.mxu0 %v380
  %1625 = vmatpush1.msra.mxu0 %v379
  %1626 = vmatprep.subr.mxu0 0.0
  %1627 = vmatpush2.msra.mxu0 0.0
  %1628 = vmatprep.subr.mxu0 0.0
  %1629 = vmatpush2.msra.mxu0 0.0
  %1630 = vmatprep.subr.mxu0 0.0
  %1631 = vmatpush2.msra.mxu0 0.0
  %1632 = vmatprep.subr.mxu0 0.0
  %1633 = vmatpush2.msra.mxu0 0.0
  %1634 = vmatprep.subr.mxu0 0.0
  %1635 = vmatpush2.msra.mxu0 0.0
  %1636 = vmatprep.subr.mxu0 0.0
  %1637 = vmatpush2.msra.mxu0 0.0
  %1638 = vmatprep.subr.mxu0 0.0
  %1639 = vmatpush2.msra.mxu0 0.0
  %1640 = vmatprep.subr.mxu0 0.0
  %1641 = vmatpush2.msra.mxu0 0.0
  %1642 = vmatprep.subr.mxu0 0.0
  %1643 = vmatpush2.msra.mxu0 0.0
  %1644 = vmatprep.subr.mxu0 0.0
  %1645 = vmatpush2.msra.mxu0 0.0
  %1646 = vmatprep.subr.mxu0 0.0
  %1647 = vmatpush2.msra.mxu0 0.0
  %1648 = vmatprep.subr.mxu0 0.0
  %1649 = vmatpush2.msra.mxu0 0.0
  %1650 = vmatprep.subr.mxu0 0.0
  %1651 = vmatpush2.msra.mxu0 0.0
  %1652 = vmatprep.subr.mxu0 0.0
  %1653 = vmatpush2.msra.mxu0 0.0
  %1654 = vmatprep.subr.mxu0 0.0
  %1655 = vmatpush2.msra.mxu0 0.0
  %1656 = vmatprep.subr.mxu0 0.0
  %1657 = vmatpush2.msra.mxu0 0.0
  %1658 = vmatprep.mubr.f32.mxu0 0.0
  %1659 = vmatmul.mubr.f32.gmra.mxu0 %v1513
  %v1660 = vpop.f32.mrf.mxu0
  %v1661 = vadd.f32 0.0, %v1660
  %v1662 = vpop.f32.mrf.mxu0
  %v1663 = vadd.f32 0.0, %v1662
  %1664 = vdwg.mxu0
  %v1665 = vadd.f32 %v1519, %v1590
  %v1666 = vadd.f32 %v1520, %v1592
  %v1667 = vadd.f32 %v1521, %v1661
  %v1668 = vadd.f32 %v1522, %v1663
  %v1669 = vxor.u32 %v1665, 2147483648
  %v1670 = vxor.u32 %v1666, 2147483648
  %v1671 = vxor.u32 %v1667, 2147483648
  %v1672 = vmul.f32 %v1669, 1.442695
  %v1673 = vpow.pop %v1672
  %v1674 = vmul.f32 %v1670, 1.442695
  %v1675 = vpow.pop %v1674
  %v1676 = vmul.f32 %v1671, 1.442695
  %v1677 = vpow.pop %v1676
  %v1678 = vadd.f32 %v1673, 1.0
  %v1679 = vadd.f32 %v1675, 1.0
  %v1680 = vadd.f32 %v1677, 1.0
  %v1681 = vrcp.pop %v1678
  %v1682 = vmul.f32 1.0, %v1681
  %v1683 = vrcp.pop %v1679
  %v1684 = vmul.f32 1.0, %v1683
  %v1685 = vrcp.pop %v1680
  %v1686 = vmul.f32 1.0, %v1685
  %v1687 = vtanh.pop %v1668
  %v1688 = vmul.f32 %v1684, %v1511
  %v1689 = vmul.f32 %v1682, %v1687
  %v1690 = vadd.f32 %v1688, %v1689
  %v1691 = vtanh.pop %v1690
  %v1692 = vmul.f32 %v1686, %v1691
  %s1693 = scalar_lea.vmem %s4, 48
  %1694 = vst [vmem:[%s1693] sm:$0xff] %v1692
  %s1695 = smul.u32 7, 4
  %s1696 = smul.addr %s1695, 8
  %s1697 = scalar_lea.vmem [#allocation2], %s1696
  %v1698 = vld [vmem:[%s1697] sm:$0xff]
  %v1699 = vld [vmem:[%s1697 + $0x8] sm:$0xff]
  %v1700 = vld [vmem:[%s1697 + $0x10] sm:$0xff]
  %v1701 = vld [vmem:[%s1697 + $0x18] sm:$0xff]
  %1702 = vmatprep.subr.mxu0 %v438
  %1703 = vmatpush1.msra.mxu0 %v437
  %1704 = vmatprep.subr.mxu0 %v434
  %1705 = vmatpush1.msra.mxu0 %v433
  %1706 = vmatprep.subr.mxu0 %v430
  %1707 = vmatpush1.msra.mxu0 %v429
  %1708 = vmatprep.subr.mxu0 %v426
  %1709 = vmatpush1.msra.mxu0 %v425
  %1710 = vmatprep.subr.mxu0 %v422
  %1711 = vmatpush1.msra.mxu0 %v421
  %1712 = vmatprep.subr.mxu0 %v418
  %1713 = vmatpush1.msra.mxu0 %v417
  %1714 = vmatprep.subr.mxu0 %v414
  %1715 = vmatpush1.msra.mxu0 %v413
  %1716 = vmatprep.subr.mxu0 %v410
  %1717 = vmatpush1.msra.mxu0 %v409
  %1718 = vmatprep.subr.mxu0 %v406
  %1719 = vmatpush1.msra.mxu0 %v405
  %1720 = vmatprep.subr.mxu0 %v402
  %1721 = vmatpush1.msra.mxu0 %v401
  %1722 = vmatprep.subr.mxu0 %v398
  %1723 = vmatpush1.msra.mxu0 %v397
  %1724 = vmatprep.subr.mxu0 %v394
  %1725 = vmatpush1.msra.mxu0 %v393
  %1726 = vmatprep.subr.mxu0 %v390
  %1727 = vmatpush1.msra.mxu0 %v389
  %1728 = vmatprep.subr.mxu0 %v386
  %1729 = vmatpush1.msra.mxu0 %v385
  %1730 = vmatprep.subr.mxu0 %v382
  %1731 = vmatpush1.msra.mxu0 %v381
  %1732 = vmatprep.subr.mxu0 %v378
  %1733 = vmatpush1.msra.mxu0 %v377
  %1734 = vmatprep.subr.mxu0 0.0
  %1735 = vmatpush2.msra.mxu0 0.0
  %1736 = vmatprep.subr.mxu0 0.0
  %1737 = vmatpush2.msra.mxu0 0.0
  %1738 = vmatprep.subr.mxu0 0.0
  %1739 = vmatpush2.msra.mxu0 0.0
  %1740 = vmatprep.subr.mxu0 0.0
  %1741 = vmatpush2.msra.mxu0 0.0
  %1742 = vmatprep.subr.mxu0 0.0
  %1743 = vmatpush2.msra.mxu0 0.0
  %1744 = vmatprep.subr.mxu0 0.0
  %1745 = vmatpush2.msra.mxu0 0.0
  %1746 = vmatprep.subr.mxu0 0.0
  %1747 = vmatpush2.msra.mxu0 0.0
  %1748 = vmatprep.subr.mxu0 0.0
  %1749 = vmatpush2.msra.mxu0 0.0
  %1750 = vmatprep.subr.mxu0 0.0
  %1751 = vmatpush2.msra.mxu0 0.0
  %1752 = vmatprep.subr.mxu0 0.0
  %1753 = vmatpush2.msra.mxu0 0.0
  %1754 = vmatprep.subr.mxu0 0.0
  %1755 = vmatpush2.msra.mxu0 0.0
  %1756 = vmatprep.subr.mxu0 0.0
  %1757 = vmatpush2.msra.mxu0 0.0
  %1758 = vmatprep.subr.mxu0 0.0
  %1759 = vmatpush2.msra.mxu0 0.0
  %1760 = vmatprep.subr.mxu0 0.0
  %1761 = vmatpush2.msra.mxu0 0.0
  %1762 = vmatprep.subr.mxu0 0.0
  %1763 = vmatpush2.msra.mxu0 0.0
  %1764 = vmatprep.subr.mxu0 0.0
  %1765 = vmatpush2.msra.mxu0 0.0
  %1766 = vmatprep.mubr.f32.mxu0 0.0
  %1767 = vmatmul.mubr.f32.gmra.mxu0 %v1692
  %v1768 = vpop.f32.mrf.mxu0
  %v1769 = vadd.f32 0.0, %v1768
  %v1770 = vpop.f32.mrf.mxu0
  %v1771 = vadd.f32 0.0, %v1770
  %1772 = vdwg.mxu0
  %1773 = vmatprep.subr.mxu0 %v440
  %1774 = vmatpush1.msra.mxu0 %v439
  %1775 = vmatprep.subr.mxu0 %v436
  %1776 = vmatpush1.msra.mxu0 %v435
  %1777 = vmatprep.subr.mxu0 %v432
  %1778 = vmatpush1.msra.mxu0 %v431
  %1779 = vmatprep.subr.mxu0 %v428
  %1780 = vmatpush1.msra.mxu0 %v427
  %1781 = vmatprep.subr.mxu0 %v424
  %1782 = vmatpush1.msra.mxu0 %v423
  %1783 = vmatprep.subr.mxu0 %v420
  %1784 = vmatpush1.msra.mxu0 %v419
  %1785 = vmatprep.subr.mxu0 %v416
  %1786 = vmatpush1.msra.mxu0 %v415
  %1787 = vmatprep.subr.mxu0 %v412
  %1788 = vmatpush1.msra.mxu0 %v411
  %1789 = vmatprep.subr.mxu0 %v408
  %1790 = vmatpush1.msra.mxu0 %v407
  %1791 = vmatprep.subr.mxu0 %v404
  %1792 = vmatpush1.msra.mxu0 %v403
  %1793 = vmatprep.subr.mxu0 %v400
  %1794 = vmatpush1.msra.mxu0 %v399
  %1795 = vmatprep.subr.mxu0 %v396
  %1796 = vmatpush1.msra.mxu0 %v395
  %1797 = vmatprep.subr.mxu0 %v392
  %1798 = vmatpush1.msra.mxu0 %v391
  %1799 = vmatprep.subr.mxu0 %v388
  %1800 = vmatpush1.msra.mxu0 %v387
  %1801 = vmatprep.subr.mxu0 %v384
  %1802 = vmatpush1.msra.mxu0 %v383
  %1803 = vmatprep.subr.mxu0 %v380
  %1804 = vmatpush1.msra.mxu0 %v379
  %1805 = vmatprep.subr.mxu0 0.0
  %1806 = vmatpush2.msra.mxu0 0.0
  %1807 = vmatprep.subr.mxu0 0.0
  %1808 = vmatpush2.msra.mxu0 0.0
  %1809 = vmatprep.subr.mxu0 0.0
  %1810 = vmatpush2.msra.mxu0 0.0
  %1811 = vmatprep.subr.mxu0 0.0
  %1812 = vmatpush2.msra.mxu0 0.0
  %1813 = vmatprep.subr.mxu0 0.0
  %1814 = vmatpush2.msra.mxu0 0.0
  %1815 = vmatprep.subr.mxu0 0.0
  %1816 = vmatpush2.msra.mxu0 0.0
  %1817 = vmatprep.subr.mxu0 0.0
  %1818 = vmatpush2.msra.mxu0 0.0
  %1819 = vmatprep.subr.mxu0 0.0
  %1820 = vmatpush2.msra.mxu0 0.0
  %1821 = vmatprep.subr.mxu0 0.0
  %1822 = vmatpush2.msra.mxu0 0.0
  %1823 = vmatprep.subr.mxu0 0.0
  %1824 = vmatpush2.msra.mxu0 0.0
  %1825 = vmatprep.subr.mxu0 0.0
  %1826 = vmatpush2.msra.mxu0 0.0
  %1827 = vmatprep.subr.mxu0 0.0
  %1828 = vmatpush2.msra.mxu0 0.0
  %1829 = vmatprep.subr.mxu0 0.0
  %1830 = vmatpush2.msra.mxu0 0.0
  %1831 = vmatprep.subr.mxu0 0.0
  %1832 = vmatpush2.msra.mxu0 0.0
  %1833 = vmatprep.subr.mxu0 0.0
  %1834 = vmatpush2.msra.mxu0 0.0
  %1835 = vmatprep.subr.mxu0 0.0
  %1836 = vmatpush2.msra.mxu0 0.0
  %1837 = vmatprep.mubr.f32.mxu0 0.0
  %1838 = vmatmul.mubr.f32.gmra.mxu0 %v1692
  %v1839 = vpop.f32.mrf.mxu0
  %v1840 = vadd.f32 0.0, %v1839
  %v1841 = vpop.f32.mrf.mxu0
  %v1842 = vadd.f32 0.0, %v1841
  %1843 = vdwg.mxu0
  %v1844 = vadd.f32 %v1698, %v1769
  %v1845 = vadd.f32 %v1699, %v1771
  %v1846 = vadd.f32 %v1700, %v1840
  %v1847 = vadd.f32 %v1701, %v1842
  %v1848 = vxor.u32 %v1844, 2147483648
  %v1849 = vxor.u32 %v1845, 2147483648
  %v1850 = vxor.u32 %v1846, 2147483648
  %v1851 = vmul.f32 %v1848, 1.442695
  %v1852 = vpow.pop %v1851
  %v1853 = vmul.f32 %v1849, 1.442695
  %v1854 = vpow.pop %v1853
  %v1855 = vmul.f32 %v1850, 1.442695
  %v1856 = vpow.pop %v1855
  %v1857 = vadd.f32 %v1852, 1.0
  %v1858 = vadd.f32 %v1854, 1.0
  %v1859 = vadd.f32 %v1856, 1.0
  %v1860 = vrcp.pop %v1857
  %v1861 = vmul.f32 1.0, %v1860
  %v1862 = vrcp.pop %v1858
  %v1863 = vmul.f32 1.0, %v1862
  %v1864 = vrcp.pop %v1859
  %v1865 = vmul.f32 1.0, %v1864
  %v1866 = vtanh.pop %v1847
  %v1867 = vmul.f32 %v1863, %v1690
  %v1868 = vmul.f32 %v1861, %v1866
  %v1869 = vadd.f32 %v1867, %v1868
  %v1870 = vtanh.pop %v1869
  %v1871 = vmul.f32 %v1865, %v1870
  %s1872 = scalar_lea.vmem %s4, 56
  %1873 = vst [vmem:[%s1872] sm:$0xff] %v1871
  %1874 = vst [vmem:[#allocation3] sm:$0xff] %v1871
  %1875 = vst [vmem:[#allocation4] sm:$0xff] %v1869
  // Predicated region
  $region22: #{olstm_forward.3} parent=0 // pred_check
    %p1876 = pneg %p19
  $region23: #{olstm_forward.3} parent=0 // pred_check_branch
    %1878 = sbr.rel (%p1876) target = $region25
  $region24: #{olstm_forward.3} parent=0 // pred_region
    %1879 = vst [vmem:[%s5] sm:$0xff] %v1871
  $region25: #{olstm_forward.3} parent=0 // pred_fallthru
    _
  // Predicated region
  $region26: #{olstm_forward.3} parent=0 // pred_check
    _
  $region27: #{olstm_forward.3} parent=0 // pred_check_branch
    %1881 = sbr.rel (0) target = $region29
  $region28: #{olstm_forward.3} parent=0 // pred_region
    _
  $region29: #{olstm_forward.3} parent=0 // pred_fallthru
    _
  // Predicated region
  $region30: #{olstm_forward.3} parent=0 // pred_check
    _
  $region31: #{olstm_forward.3} parent=0 // pred_check_branch
    %1883 = sbr.rel (0) target = $region33
  $region32: #{olstm_forward.3} parent=0 // pred_region
    _
  $region33: #{olstm_forward.3} parent=0 // pred_fallthru
    _
  // Predicated region
  $region34: #{olstm_forward.3} parent=0 // pred_check
    _
  $region35: #{olstm_forward.3} parent=0 // pred_check_branch
    %1885 = sbr.rel (0) target = $region37
  $region36: #{olstm_forward.3} parent=0 // pred_region
    _
  $region37: #{olstm_forward.3} parent=0 // pred_fallthru
    _
  // Predicated region
  $region38: #{olstm_forward.3} parent=0 // pred_check
    _
  $region39: #{olstm_forward.3} parent=0 // pred_check_branch
    %1887 = sbr.rel (0) target = $region41
  $region40: #{olstm_forward.3} parent=0 // pred_region
    _
  $region41: #{olstm_forward.3} parent=0 // pred_fallthru
    _

</llo_original>
